<compile_context>
chip_gen: v7x
topology: tpu7x:2x2x1
jax: 0.10.0
libtpu: 0.0.40
codegen_flags: <defaults>
</compile_context>

<pallas_src>
import jax
import jax.numpy as jnp
from jax import lax
from jax.experimental import pallas as pl
from jax.experimental.pallas import tpu as pltpu

LANE = 128  # TPU lane width


def _round_up(x, m):
    return ((x + m - 1) // m) * m


def _pick_chunk_steps(B, Tc, Ta):
    """Timesteps per staging chunk: smallest spc such that spc*B rows are
    sublane-aligned (multiple of 8) and spc divides both sequence lengths.
    Falls back to 1 (per-step stores / loads) for awkward shapes."""
    for spc in (1, 2, 4, 8):
        if (spc * B) % 8 == 0 and Tc % spc == 0 and Ta % spc == 0:
            return spc
    return 1


# ----------------------------------------------------------------------------
# Fused IAN kernel: 2 LSTMs (interleaved) + masked mean-pools + folded head.
# ----------------------------------------------------------------------------
def _build_ian_kernel(*, B, H, Tc, Ta, spc, unroll):
    T_joint = min(Tc, Ta)
    CR = spc * B  # rows per staging chunk

    def kernel(ctx_x_ref, asp_x_ref, ctx_len_ref, asp_len_ref,
               wih_c_ref, whh_c_ref, b_c_ref,
               wih_a_ref, whh_a_ref, b_a_ref,
               wA_ref, wC_ref, bh_ref,
               out_ref, gx_c_scr, gx_a_scr):
        # ---- Hoisted input projections: ONE matmul per LSTM over all
        # timesteps (x arrives time-major, flattened to (T*B, E)).  Separate
        # scratch buffers keep the aspect projection independent of the
        # context recurrence so the scheduler can overlap them.
        proj_c = (jnp.dot(ctx_x_ref[...], wih_c_ref[...],
                          preferred_element_type=jnp.float32) + b_c_ref[...])
        for c in range(Tc // spc):            # few chunked, tile-aligned stores
            gx_c_scr[c] = proj_c[c * CR:(c + 1) * CR, :]
        proj_a = (jnp.dot(asp_x_ref[...], wih_a_ref[...],
                          preferred_element_type=jnp.float32) + b_a_ref[...])
        for c in range(Ta // spc):
            gx_a_scr[c] = proj_a[c * CR:(c + 1) * CR, :]

        # Hoisted length loads (not re-loaded / re-broadcast per step).
        len_c = ctx_len_ref[...]              # (B, 1) f32
        len_a = asp_len_ref[...]

        def lstm_step(gx, h, c, whh_ref):
            # PyTorch gate order i, f, g, o packed contiguously in 4H lanes.
            gates = gx + jnp.dot(h, whh_ref[...],
                                 preferred_element_type=jnp.float32)
            i_g = jax.nn.sigmoid(gates[:, 0 * H:1 * H])
            f_g = jax.nn.sigmoid(gates[:, 1 * H:2 * H])
            g_g = jnp.tanh(gates[:, 2 * H:3 * H])
            o_g = jax.nn.sigmoid(gates[:, 3 * H:4 * H])
            c = f_g * c + i_g * g_g
            h = o_g * jnp.tanh(c)
            return h, c

        def masked(h, length, t_f):
            # pack_padded_sequence semantics: h_t contributes only while t < len
            return h * (length > t_f).astype(jnp.float32)

        zeros = jnp.zeros((B, H), jnp.float32)

        # ---- Phase 1: interleave both recurrences for t < min(Tc, Ta).
        def both_chunk(ci, carry):
            h_c, c_c, a_c, h_a, c_a, a_a = carry
            chunk_c = gx_c_scr[ci]            # (spc*B, 4H) leading-dim index
            chunk_a = gx_a_scr[ci]
            t0 = (ci * spc).astype(jnp.float32)
            for s in range(spc):              # static partial unroll in chunk
                h_c, c_c = lstm_step(chunk_c[s * B:(s + 1) * B, :],
                                     h_c, c_c, whh_c_ref)
                h_a, c_a = lstm_step(chunk_a[s * B:(s + 1) * B, :],
                                     h_a, c_a, whh_a_ref)
                t_f = t0 + float(s)
                a_c = a_c + masked(h_c, len_c, t_f)
                a_a = a_a + masked(h_a, len_a, t_f)
            return h_c, c_c, a_c, h_a, c_a, a_a

        carry = lax.fori_loop(0, T_joint // spc, both_chunk,
                              (zeros, zeros, zeros, zeros, zeros, zeros),
                              unroll=unroll)
        h_c, c_c, acc_c, h_a, c_a, acc_a = carry

        # ---- Phase 2: tail of the longer sequence alone.
        def tail_body(scr, whh_ref, length):
            def body(ci, carry):
                h, c, a = carry
                chunk = scr[ci]
                t0 = (ci * spc).astype(jnp.float32)
                for s in range(spc):
                    h, c = lstm_step(chunk[s * B:(s + 1) * B, :], h, c, whh_ref)
                    a = a + masked(h, length, t0 + float(s))
                return h, c, a
            return body

        if Tc > Ta:
            h_c, c_c, acc_c = lax.fori_loop(
                T_joint // spc, Tc // spc,
                tail_body(gx_c_scr, whh_c_ref, len_c),
                (h_c, c_c, acc_c), unroll=unroll)
        elif Ta > Tc:
            h_a, c_a, acc_a = lax.fori_loop(
                T_joint // spc, Ta // spc,
                tail_body(gx_a_scr, whh_a_ref, len_a),
                (h_a, c_a, acc_a), unroll=unroll)

        # ---- Masked mean pool (exact division, matches sum/len in the ref).
        ctx_pool = acc_c / jnp.maximum(len_c, 1.0)
        asp_pool = acc_a / jnp.maximum(len_a, 1.0)

        # ---- Folded head: bi_linear Attention on pooled vectors has
        # k_len = q_len = 1, so softmax over the single key == 1 and the whole
        # attention is affine; together with the dense layer splitting the
        # concat, the head collapses to two matmuls + one fused bias.
        logits = (jnp.dot(asp_pool, wA_ref[...], preferred_element_type=jnp.float32)
                  + jnp.dot(ctx_pool, wC_ref[...], preferred_element_type=jnp.float32)
                  + bh_ref[...])                                  # (B, P)

        # args.softmax = True -> nn.Softmax() over the class dim (exact)
        m = jnp.max(logits, axis=-1, keepdims=True)
        e = jnp.exp(logits - m)
        out_ref[...] = e / jnp.sum(e, axis=-1, keepdims=True)

    return kernel


def run_ian(ctx_x2d, asp_x2d, ctx_len, asp_len, p, *, Tc, Ta, unroll=True):
    B = ctx_len.shape[0]
    H = p["wA"].shape[0]
    P = p["b_head"].shape[-1]
    G4 = p["wih_c"].shape[-1]                 # 4H padded (as a whole) to LANE
    spc = _pick_chunk_steps(B, Tc, Ta)

    kernel = _build_ian_kernel(B=B, H=H, Tc=Tc, Ta=Ta, spc=spc, unroll=unroll)

    inputs = (ctx_x2d, asp_x2d, ctx_len, asp_len,
              p["wih_c"], p["whh_c"], p["b_c"],
              p["wih_a"], p["whh_a"], p["b_a"],
              p["wA"], p["wC"], p["b_head"])
    vmem = pl.BlockSpec(memory_space=pltpu.MemorySpace.VMEM)
    return pl.pallas_call(
        kernel,
        out_shape=jax.ShapeDtypeStruct((B, P), jnp.float32),
        in_specs=[vmem] * len(inputs),
        out_specs=vmem,
        scratch_shapes=[
            # separate staging buffers (no false ctx->asp dependency)
            pltpu.VMEM((Tc // spc, spc * B, G4), jnp.float32),
            pltpu.VMEM((Ta // spc, spc * B, G4), jnp.float32),
        ],
        # At production T/B/H: stream x/gx over T chunks (grid or emit_pipeline)
        # and set pltpu.CompilerParams(vmem_limit_bytes=...) with headroom; at
        # toy size everything is KB-scale so defaults are fine.
    )(*inputs)


# ----------------------------------------------------------------------------
# Full IAN forward: embedding gather (plain-JAX glue) + the fused kernel.
# ----------------------------------------------------------------------------
@jax.jit
def ian_forward(text_idx, aspect_idx, params):
    emb = params["embedding"]
    B, Tc = text_idx.shape
    Ta = aspect_idx.shape[1]
    E = emb.shape[1]

    # lengths from nonzero token counts (padding index == 0), as (B, 1) f32
    text_len = jnp.sum(text_idx != 0, axis=-1).astype(jnp.float32)[:, None]
    asp_len = jnp.sum(aspect_idx != 0, axis=-1).astype(jnp.float32)[:, None]

    # embedding lookup + dropout (eval -> identity); time-major and flattened
    # to (T*B, E) so the kernel's hoisted projection is ONE matmul per LSTM.
    ctx_x = jnp.transpose(jnp.take(emb, text_idx, axis=0), (1, 0, 2)).reshape(Tc * B, E)
    asp_x = jnp.transpose(jnp.take(emb, aspect_idx, axis=0), (1, 0, 2)).reshape(Ta * B, E)

    return run_ian(ctx_x, asp_x, text_len, asp_len, params, Tc=Tc, Ta=Ta)


# ----------------------------------------------------------------------------
# Deterministic synthetic parameters (torch layouts -> kernel math layout:
# transposed, gates packed contiguously, 4H padded to a lane multiple as a
# whole; head folded into two matmuls + one bias).
# ----------------------------------------------------------------------------
def make_params(key, vocab, E, H, P):
    G4 = _round_up(4 * H, LANE)               # 4H == 128 for H=32 -> no padding
    keys = jax.random.split(key, 24)
    kit = iter(keys)

    def rnd(shape, scale=0.1):
        return jax.random.normal(next(kit), shape, dtype=jnp.float32) * scale

    def pad_cols(w):
        # (K, 4H) -> (K, G4): pad the TOTAL gate width, never per gate (keeps
        # the recurrent matmul and EUP work at true size).  Padded columns are
        # zero and their gate lanes are never read by the kernel.
        out = jnp.zeros((w.shape[0], G4), w.dtype)
        return out.at[:, :w.shape[1]].set(w)

    def lstm_params():
        # torch: W_ih (4H, E), W_hh (4H, H), bias = b_ih + b_hh; gate order i,f,g,o
        wih = rnd((4 * H, E)).T                       # (E, 4H)
        whh = rnd((4 * H, H)).T                       # (H, 4H)
        b = rnd((1, 4 * H))
        return pad_cols(wih), pad_cols(whh), pad_cols(b)

    wih_c, whh_c, b_c = lstm_params()
    wih_a, whh_a, b_a = lstm_params()

    # dense Linear(2H, P), torch (out, in) layout
    wd = rnd((P, 2 * H))
    bd = rnd((1, P))

    def folded_head(wd_half):
        # Attention(H, 'bi_linear') with pooled (k_len = q_len = 1) inputs:
        # output == proj(w_k(k)); fold through the dense half -> (H, P) + bias.
        wk = rnd((H, H)).T                            # Linear(H,H) -> math (H,H)
        bk = rnd((1, H))
        wpj = rnd((H, H)).T
        bpj = rnd((1, H))
        w = wk @ wpj @ wd_half                        # (H, P)
        b = (bk @ wpj + bpj) @ wd_half                # (1, P)
        return w, b

    wA, bA = folded_head(wd[:, :H].T)   # aspect_final -> first half of concat
    wC, bC = folded_head(wd[:, H:].T)   # context_final -> second half
    b_head = bA + bC + bd

    embedding = rnd((vocab, E), scale=0.5)

    return {
        "embedding": embedding,
        "wih_c": wih_c, "whh_c": whh_c, "b_c": b_c,
        "wih_a": wih_a, "whh_a": whh_a, "b_a": b_a,
        "wA": wA, "wC": wC, "b_head": b_head,
    }


if __name__ == "__main__":
    B, Tc, Ta = 2, 16, 8
    vocab, E, H, P = 50, 32, 32, 3

    key = jax.random.PRNGKey(0)
    k_param, k_txt, k_asp = jax.random.split(key, 3)
    params = make_params(k_param, vocab, E, H, P)

    # token indices: nonzero prefix, zero padding at the end (index 0 == pad)
    text_idx = jax.random.randint(k_txt, (B, Tc), 1, vocab, dtype=jnp.int32)
    aspect_idx = jax.random.randint(k_asp, (B, Ta), 1, vocab, dtype=jnp.int32)
    text_lens = jnp.array([16, 10], dtype=jnp.int32)
    asp_lens = jnp.array([8, 3], dtype=jnp.int32)
    text_idx = jnp.where(jnp.arange(Tc)[None, :] < text_lens[:, None], text_idx, 0)
    aspect_idx = jnp.where(jnp.arange(Ta)[None, :] < asp_lens[:, None], aspect_idx, 0)

    out = ian_forward(text_idx, aspect_idx, params)
    out = jax.block_until_ready(out)

    assert out.shape == (B, P), out.shape
    assert bool(jnp.all(jnp.isfinite(out)))
    # exact softmax division -> rows sum to 1 to f32 accuracy
    assert bool(jnp.allclose(jnp.sum(out, axis=-1), 1.0, atol=1e-4))
    print("KERNEL_OK")
</pallas_src>

<mosaic_0001>
module attributes {stable_mosaic.version = 11 : i64} {
  func.func @kernel(%arg0: memref<32x32xf32, #tpu.memory_space<vmem>>, %arg1: memref<16x32xf32, #tpu.memory_space<vmem>>, %arg2: memref<2x1xf32, #tpu.memory_space<vmem>>, %arg3: memref<2x1xf32, #tpu.memory_space<vmem>>, %arg4: memref<32x128xf32, #tpu.memory_space<vmem>>, %arg5: memref<32x128xf32, #tpu.memory_space<vmem>>, %arg6: memref<1x128xf32, #tpu.memory_space<vmem>>, %arg7: memref<32x128xf32, #tpu.memory_space<vmem>>, %arg8: memref<32x128xf32, #tpu.memory_space<vmem>>, %arg9: memref<1x128xf32, #tpu.memory_space<vmem>>, %arg10: memref<32x3xf32, #tpu.memory_space<vmem>>, %arg11: memref<32x3xf32, #tpu.memory_space<vmem>>, %arg12: memref<1x3xf32, #tpu.memory_space<vmem>>, %arg13: memref<2x3xf32, #tpu.memory_space<vmem>>, %arg14: memref<4x8x128xf32, #tpu.memory_space<vmem>>, %arg15: memref<2x8x128xf32, #tpu.memory_space<vmem>>) attributes {dimension_semantics = [], scalar_prefetch = 0 : i64, scratch_operands = 2 : i64, tpu.core_type = #tpu.core_type<tc>} {
    %c0 = arith.constant 0 : index
    %c0_0 = arith.constant 0 : index
    %0 = vector.load %arg0[%c0, %c0_0] : memref<32x32xf32, #tpu.memory_space<vmem>>, vector<32x32xf32>
    %c0_1 = arith.constant 0 : index
    %c0_2 = arith.constant 0 : index
    %1 = vector.load %arg4[%c0_1, %c0_2] : memref<32x128xf32, #tpu.memory_space<vmem>>, vector<32x128xf32>
    %cst = arith.constant dense<0.000000e+00> : vector<32x128xf32>
    %2 = tpu.matmul %0, %1, %cst {dimension_numbers = #tpu.dot_dimension_numbers<[1], [0], [0], [1], [0, 0, 1, 1], [], []>} : vector<32x32xf32>, vector<32x128xf32>, vector<32x128xf32> -> vector<32x128xf32>
    %c0_3 = arith.constant 0 : index
    %c0_4 = arith.constant 0 : index
    %3 = vector.load %arg6[%c0_3, %c0_4] : memref<1x128xf32, #tpu.memory_space<vmem>>, vector<1x128xf32>
    %4 = vector.broadcast %3 : vector<1x128xf32> to vector<32x128xf32>
    %5 = arith.addf %2, %4 : vector<32x128xf32>
    %6 = vector.extract_strided_slice %5 {offsets = [0, 0], sizes = [8, 128], strides = [1, 1]} : vector<32x128xf32> to vector<8x128xf32>
    %c0_5 = arith.constant 0 : index
    %c0_6 = arith.constant 0 : index
    %c0_7 = arith.constant 0 : index
    %7 = vector.load %arg14[%c0_5, %c0_6, %c0_7] : memref<4x8x128xf32, #tpu.memory_space<vmem>>, vector<1x8x128xf32>
    %8 = vector.shape_cast %7 : vector<1x8x128xf32> to vector<8x128xf32>
    %9 = vector.shape_cast %6 : vector<8x128xf32> to vector<1x8x128xf32>
    tpu.vector_store %arg14[%c0_5, %c0_6, %c0_7], %9 {strides = array<i32>} : memref<4x8x128xf32, #tpu.memory_space<vmem>>, vector<1x8x128xf32>,
    %10 = vector.extract_strided_slice %5 {offsets = [8, 0], sizes = [8, 128], strides = [1, 1]} : vector<32x128xf32> to vector<8x128xf32>
    %c1 = arith.constant 1 : index
    %c0_8 = arith.constant 0 : index
    %c0_9 = arith.constant 0 : index
    %11 = vector.load %arg14[%c1, %c0_8, %c0_9] : memref<4x8x128xf32, #tpu.memory_space<vmem>>, vector<1x8x128xf32>
    %12 = vector.shape_cast %11 : vector<1x8x128xf32> to vector<8x128xf32>
    %13 = vector.shape_cast %10 : vector<8x128xf32> to vector<1x8x128xf32>
    tpu.vector_store %arg14[%c1, %c0_8, %c0_9], %13 {strides = array<i32>} : memref<4x8x128xf32, #tpu.memory_space<vmem>>, vector<1x8x128xf32>,
    %14 = vector.extract_strided_slice %5 {offsets = [16, 0], sizes = [8, 128], strides = [1, 1]} : vector<32x128xf32> to vector<8x128xf32>
    %c2 = arith.constant 2 : index
    %c0_10 = arith.constant 0 : index
    %c0_11 = arith.constant 0 : index
    %15 = vector.load %arg14[%c2, %c0_10, %c0_11] : memref<4x8x128xf32, #tpu.memory_space<vmem>>, vector<1x8x128xf32>
    %16 = vector.shape_cast %15 : vector<1x8x128xf32> to vector<8x128xf32>
    %17 = vector.shape_cast %14 : vector<8x128xf32> to vector<1x8x128xf32>
    tpu.vector_store %arg14[%c2, %c0_10, %c0_11], %17 {strides = array<i32>} : memref<4x8x128xf32, #tpu.memory_space<vmem>>, vector<1x8x128xf32>,
    %18 = vector.extract_strided_slice %5 {offsets = [24, 0], sizes = [8, 128], strides = [1, 1]} : vector<32x128xf32> to vector<8x128xf32>
    %c3 = arith.constant 3 : index
    %c0_12 = arith.constant 0 : index
    %c0_13 = arith.constant 0 : index
    %19 = vector.load %arg14[%c3, %c0_12, %c0_13] : memref<4x8x128xf32, #tpu.memory_space<vmem>>, vector<1x8x128xf32>
    %20 = vector.shape_cast %19 : vector<1x8x128xf32> to vector<8x128xf32>
    %21 = vector.shape_cast %18 : vector<8x128xf32> to vector<1x8x128xf32>
    tpu.vector_store %arg14[%c3, %c0_12, %c0_13], %21 {strides = array<i32>} : memref<4x8x128xf32, #tpu.memory_space<vmem>>, vector<1x8x128xf32>,
    %c0_14 = arith.constant 0 : index
    %c0_15 = arith.constant 0 : index
    %22 = vector.load %arg1[%c0_14, %c0_15] : memref<16x32xf32, #tpu.memory_space<vmem>>, vector<16x32xf32>
    %c0_16 = arith.constant 0 : index
    %c0_17 = arith.constant 0 : index
    %23 = vector.load %arg7[%c0_16, %c0_17] : memref<32x128xf32, #tpu.memory_space<vmem>>, vector<32x128xf32>
    %cst_18 = arith.constant dense<0.000000e+00> : vector<16x128xf32>
    %24 = tpu.matmul %22, %23, %cst_18 {dimension_numbers = #tpu.dot_dimension_numbers<[1], [0], [0], [1], [0, 0, 1, 1], [], []>} : vector<16x32xf32>, vector<32x128xf32>, vector<16x128xf32> -> vector<16x128xf32>
    %c0_19 = arith.constant 0 : index
    %c0_20 = arith.constant 0 : index
    %25 = vector.load %arg9[%c0_19, %c0_20] : memref<1x128xf32, #tpu.memory_space<vmem>>, vector<1x128xf32>
    %26 = vector.broadcast %25 : vector<1x128xf32> to vector<16x128xf32>
    %27 = arith.addf %24, %26 : vector<16x128xf32>
    %28 = vector.extract_strided_slice %27 {offsets = [0, 0], sizes = [8, 128], strides = [1, 1]} : vector<16x128xf32> to vector<8x128xf32>
    %c0_21 = arith.constant 0 : index
    %c0_22 = arith.constant 0 : index
    %c0_23 = arith.constant 0 : index
    %29 = vector.load %arg15[%c0_21, %c0_22, %c0_23] : memref<2x8x128xf32, #tpu.memory_space<vmem>>, vector<1x8x128xf32>
    %30 = vector.shape_cast %29 : vector<1x8x128xf32> to vector<8x128xf32>
    %31 = vector.shape_cast %28 : vector<8x128xf32> to vector<1x8x128xf32>
    tpu.vector_store %arg15[%c0_21, %c0_22, %c0_23], %31 {strides = array<i32>} : memref<2x8x128xf32, #tpu.memory_space<vmem>>, vector<1x8x128xf32>,
    %32 = vector.extract_strided_slice %27 {offsets = [8, 0], sizes = [8, 128], strides = [1, 1]} : vector<16x128xf32> to vector<8x128xf32>
    %c1_24 = arith.constant 1 : index
    %c0_25 = arith.constant 0 : index
    %c0_26 = arith.constant 0 : index
    %33 = vector.load %arg15[%c1_24, %c0_25, %c0_26] : memref<2x8x128xf32, #tpu.memory_space<vmem>>, vector<1x8x128xf32>
    %34 = vector.shape_cast %33 : vector<1x8x128xf32> to vector<8x128xf32>
    %35 = vector.shape_cast %32 : vector<8x128xf32> to vector<1x8x128xf32>
    tpu.vector_store %arg15[%c1_24, %c0_25, %c0_26], %35 {strides = array<i32>} : memref<2x8x128xf32, #tpu.memory_space<vmem>>, vector<1x8x128xf32>,
    %c0_27 = arith.constant 0 : index
    %c0_28 = arith.constant 0 : index
    %36 = vector.load %arg2[%c0_27, %c0_28] : memref<2x1xf32, #tpu.memory_space<vmem>>, vector<2x1xf32>
    %c0_29 = arith.constant 0 : index
    %c0_30 = arith.constant 0 : index
    %37 = vector.load %arg3[%c0_29, %c0_30] : memref<2x1xf32, #tpu.memory_space<vmem>>, vector<2x1xf32>
    %cst_31 = arith.constant 0.000000e+00 : f32
    %38 = vector.broadcast %cst_31 : f32 to vector<2x32xf32>
    %c0_i32 = arith.constant 0 : i32
    %39 = arith.index_cast %c0_i32 : i32 to index
    %c0_32 = arith.constant 0 : index
    %c0_33 = arith.constant 0 : index
    %40 = vector.load %arg14[%39, %c0_32, %c0_33] : memref<4x8x128xf32, #tpu.memory_space<vmem>>, vector<1x8x128xf32>
    %41 = vector.shape_cast %40 : vector<1x8x128xf32> to vector<8x128xf32>
    %42 = arith.index_cast %c0_i32 : i32 to index
    %c0_34 = arith.constant 0 : index
    %c0_35 = arith.constant 0 : index
    %43 = vector.load %arg15[%42, %c0_34, %c0_35] : memref<2x8x128xf32, #tpu.memory_space<vmem>>, vector<1x8x128xf32>
    %44 = vector.shape_cast %43 : vector<1x8x128xf32> to vector<8x128xf32>
    %c4_i32 = arith.constant 4 : i32
    %45 = arith.muli %c0_i32, %c4_i32 : i32
    %46 = arith.sitofp %45 : i32 to f32
    %47 = vector.extract_strided_slice %41 {offsets = [0, 0], sizes = [2, 128], strides = [1, 1]} : vector<8x128xf32> to vector<2x128xf32>
    %c0_36 = arith.constant 0 : index
    %c0_37 = arith.constant 0 : index
    %48 = vector.load %arg5[%c0_36, %c0_37] : memref<32x128xf32, #tpu.memory_space<vmem>>, vector<32x128xf32>
    %cst_38 = arith.constant dense<0.000000e+00> : vector<2x128xf32>
    %49 = tpu.matmul %38, %48, %cst_38 {dimension_numbers = #tpu.dot_dimension_numbers<[1], [0], [0], [1], [0, 0, 1, 1], [], []>} : vector<2x32xf32>, vector<32x128xf32>, vector<2x128xf32> -> vector<2x128xf32>
    %50 = arith.addf %47, %49 : vector<2x128xf32>
    %51 = vector.extract_strided_slice %50 {offsets = [0, 0], sizes = [2, 32], strides = [1, 1]} : vector<2x128xf32> to vector<2x32xf32>
    %52 = arith.negf %51 : vector<2x32xf32>
    %53 = math.exp %52 : vector<2x32xf32>
    %cst_39 = arith.constant 1.000000e+00 : f32
    %54 = vector.broadcast %cst_39 : f32 to vector<2x32xf32>
    %55 = arith.addf %54, %53 : vector<2x32xf32>
    %56 = arith.divf %54, %55 : vector<2x32xf32>
    %57 = vector.extract_strided_slice %50 {offsets = [0, 32], sizes = [2, 32], strides = [1, 1]} : vector<2x128xf32> to vector<2x32xf32>
    %58 = arith.negf %57 : vector<2x32xf32>
    %59 = math.exp %58 : vector<2x32xf32>
    %cst_40 = arith.constant 1.000000e+00 : f32
    %60 = vector.broadcast %cst_40 : f32 to vector<2x32xf32>
    %61 = arith.addf %60, %59 : vector<2x32xf32>
    %62 = arith.divf %60, %61 : vector<2x32xf32>
    %63 = vector.extract_strided_slice %50 {offsets = [0, 64], sizes = [2, 32], strides = [1, 1]} : vector<2x128xf32> to vector<2x32xf32>
    %64 = math.tanh %63 : vector<2x32xf32>
    %65 = vector.extract_strided_slice %50 {offsets = [0, 96], sizes = [2, 32], strides = [1, 1]} : vector<2x128xf32> to vector<2x32xf32>
    %66 = arith.negf %65 : vector<2x32xf32>
    %67 = math.exp %66 : vector<2x32xf32>
    %cst_41 = arith.constant 1.000000e+00 : f32
    %68 = vector.broadcast %cst_41 : f32 to vector<2x32xf32>
    %69 = arith.addf %68, %67 : vector<2x32xf32>
    %70 = arith.divf %68, %69 : vector<2x32xf32>
    %71 = arith.mulf %62, %38 : vector<2x32xf32>
    %72 = arith.mulf %56, %64 : vector<2x32xf32>
    %73 = arith.addf %71, %72 : vector<2x32xf32>
    %74 = math.tanh %73 : vector<2x32xf32>
    %75 = arith.mulf %70, %74 : vector<2x32xf32>
    %76 = vector.extract_strided_slice %44 {offsets = [0, 0], sizes = [2, 128], strides = [1, 1]} : vector<8x128xf32> to vector<2x128xf32>
    %c0_42 = arith.constant 0 : index
    %c0_43 = arith.constant 0 : index
    %77 = vector.load %arg8[%c0_42, %c0_43] : memref<32x128xf32, #tpu.memory_space<vmem>>, vector<32x128xf32>
    %cst_44 = arith.constant dense<0.000000e+00> : vector<2x128xf32>
    %78 = tpu.matmul %38, %77, %cst_44 {dimension_numbers = #tpu.dot_dimension_numbers<[1], [0], [0], [1], [0, 0, 1, 1], [], []>} : vector<2x32xf32>, vector<32x128xf32>, vector<2x128xf32> -> vector<2x128xf32>
    %79 = arith.addf %76, %78 : vector<2x128xf32>
    %80 = vector.extract_strided_slice %79 {offsets = [0, 0], sizes = [2, 32], strides = [1, 1]} : vector<2x128xf32> to vector<2x32xf32>
    %81 = arith.negf %80 : vector<2x32xf32>
    %82 = math.exp %81 : vector<2x32xf32>
    %cst_45 = arith.constant 1.000000e+00 : f32
    %83 = vector.broadcast %cst_45 : f32 to vector<2x32xf32>
    %84 = arith.addf %83, %82 : vector<2x32xf32>
    %85 = arith.divf %83, %84 : vector<2x32xf32>
    %86 = vector.extract_strided_slice %79 {offsets = [0, 32], sizes = [2, 32], strides = [1, 1]} : vector<2x128xf32> to vector<2x32xf32>
    %87 = arith.negf %86 : vector<2x32xf32>
    %88 = math.exp %87 : vector<2x32xf32>
    %cst_46 = arith.constant 1.000000e+00 : f32
    %89 = vector.broadcast %cst_46 : f32 to vector<2x32xf32>
    %90 = arith.addf %89, %88 : vector<2x32xf32>
    %91 = arith.divf %89, %90 : vector<2x32xf32>
    %92 = vector.extract_strided_slice %79 {offsets = [0, 64], sizes = [2, 32], strides = [1, 1]} : vector<2x128xf32> to vector<2x32xf32>
    %93 = math.tanh %92 : vector<2x32xf32>
    %94 = vector.extract_strided_slice %79 {offsets = [0, 96], sizes = [2, 32], strides = [1, 1]} : vector<2x128xf32> to vector<2x32xf32>
    %95 = arith.negf %94 : vector<2x32xf32>
    %96 = math.exp %95 : vector<2x32xf32>
    %cst_47 = arith.constant 1.000000e+00 : f32
    %97 = vector.broadcast %cst_47 : f32 to vector<2x32xf32>
    %98 = arith.addf %97, %96 : vector<2x32xf32>
    %99 = arith.divf %97, %98 : vector<2x32xf32>
    %100 = arith.mulf %91, %38 : vector<2x32xf32>
    %101 = arith.mulf %85, %93 : vector<2x32xf32>
    %102 = arith.addf %100, %101 : vector<2x32xf32>
    %103 = math.tanh %102 : vector<2x32xf32>
    %104 = arith.mulf %99, %103 : vector<2x32xf32>
    %cst_48 = arith.constant 0.000000e+00 : f32
    %105 = arith.addf %46, %cst_48 : f32
    %106 = vector.broadcast %105 : f32 to vector<2x1xf32>
    %107 = arith.cmpf ogt, %36, %106 : vector<2x1xf32>
    %108 = arith.extui %107 : vector<2x1xi1> to vector<2x1xi32>
    %109 = arith.sitofp %108 : vector<2x1xi32> to vector<2x1xf32>
    %110 = vector.broadcast %109 : vector<2x1xf32> to vector<2x32xf32>
    %111 = arith.mulf %75, %110 : vector<2x32xf32>
    %112 = arith.addf %38, %111 : vector<2x32xf32>
    %113 = vector.broadcast %105 : f32 to vector<2x1xf32>
    %114 = arith.cmpf ogt, %37, %113 : vector<2x1xf32>
    %115 = arith.extui %114 : vector<2x1xi1> to vector<2x1xi32>
    %116 = arith.sitofp %115 : vector<2x1xi32> to vector<2x1xf32>
    %117 = vector.broadcast %116 : vector<2x1xf32> to vector<2x32xf32>
    %118 = arith.mulf %104, %117 : vector<2x32xf32>
    %119 = arith.addf %38, %118 : vector<2x32xf32>
    %120 = vector.extract_strided_slice %41 {offsets = [2, 0], sizes = [2, 128], strides = [1, 1]} : vector<8x128xf32> to vector<2x128xf32>
    %c0_49 = arith.constant 0 : index
    %c0_50 = arith.constant 0 : index
    %121 = vector.load %arg5[%c0_49, %c0_50] : memref<32x128xf32, #tpu.memory_space<vmem>>, vector<32x128xf32>
    %cst_51 = arith.constant dense<0.000000e+00> : vector<2x128xf32>
    %122 = tpu.matmul %75, %121, %cst_51 {dimension_numbers = #tpu.dot_dimension_numbers<[1], [0], [0], [1], [0, 0, 1, 1], [], []>} : vector<2x32xf32>, vector<32x128xf32>, vector<2x128xf32> -> vector<2x128xf32>
    %123 = arith.addf %120, %122 : vector<2x128xf32>
    %124 = vector.extract_strided_slice %123 {offsets = [0, 0], sizes = [2, 32], strides = [1, 1]} : vector<2x128xf32> to vector<2x32xf32>
    %125 = arith.negf %124 : vector<2x32xf32>
    %126 = math.exp %125 : vector<2x32xf32>
    %cst_52 = arith.constant 1.000000e+00 : f32
    %127 = vector.broadcast %cst_52 : f32 to vector<2x32xf32>
    %128 = arith.addf %127, %126 : vector<2x32xf32>
    %129 = arith.divf %127, %128 : vector<2x32xf32>
    %130 = vector.extract_strided_slice %123 {offsets = [0, 32], sizes = [2, 32], strides = [1, 1]} : vector<2x128xf32> to vector<2x32xf32>
    %131 = arith.negf %130 : vector<2x32xf32>
    %132 = math.exp %131 : vector<2x32xf32>
    %cst_53 = arith.constant 1.000000e+00 : f32
    %133 = vector.broadcast %cst_53 : f32 to vector<2x32xf32>
    %134 = arith.addf %133, %132 : vector<2x32xf32>
    %135 = arith.divf %133, %134 : vector<2x32xf32>
    %136 = vector.extract_strided_slice %123 {offsets = [0, 64], sizes = [2, 32], strides = [1, 1]} : vector<2x128xf32> to vector<2x32xf32>
    %137 = math.tanh %136 : vector<2x32xf32>
    %138 = vector.extract_strided_slice %123 {offsets = [0, 96], sizes = [2, 32], strides = [1, 1]} : vector<2x128xf32> to vector<2x32xf32>
    %139 = arith.negf %138 : vector<2x32xf32>
    %140 = math.exp %139 : vector<2x32xf32>
    %cst_54 = arith.constant 1.000000e+00 : f32
    %141 = vector.broadcast %cst_54 : f32 to vector<2x32xf32>
    %142 = arith.addf %141, %140 : vector<2x32xf32>
    %143 = arith.divf %141, %142 : vector<2x32xf32>
    %144 = arith.mulf %135, %73 : vector<2x32xf32>
    %145 = arith.mulf %129, %137 : vector<2x32xf32>
    %146 = arith.addf %144, %145 : vector<2x32xf32>
    %147 = math.tanh %146 : vector<2x32xf32>
    %148 = arith.mulf %143, %147 : vector<2x32xf32>
    %149 = vector.extract_strided_slice %44 {offsets = [2, 0], sizes = [2, 128], strides = [1, 1]} : vector<8x128xf32> to vector<2x128xf32>
    %c0_55 = arith.constant 0 : index
    %c0_56 = arith.constant 0 : index
    %150 = vector.load %arg8[%c0_55, %c0_56] : memref<32x128xf32, #tpu.memory_space<vmem>>, vector<32x128xf32>
    %cst_57 = arith.constant dense<0.000000e+00> : vector<2x128xf32>
    %151 = tpu.matmul %104, %150, %cst_57 {dimension_numbers = #tpu.dot_dimension_numbers<[1], [0], [0], [1], [0, 0, 1, 1], [], []>} : vector<2x32xf32>, vector<32x128xf32>, vector<2x128xf32> -> vector<2x128xf32>
    %152 = arith.addf %149, %151 : vector<2x128xf32>
    %153 = vector.extract_strided_slice %152 {offsets = [0, 0], sizes = [2, 32], strides = [1, 1]} : vector<2x128xf32> to vector<2x32xf32>
    %154 = arith.negf %153 : vector<2x32xf32>
    %155 = math.exp %154 : vector<2x32xf32>
    %cst_58 = arith.constant 1.000000e+00 : f32
    %156 = vector.broadcast %cst_58 : f32 to vector<2x32xf32>
    %157 = arith.addf %156, %155 : vector<2x32xf32>
    %158 = arith.divf %156, %157 : vector<2x32xf32>
    %159 = vector.extract_strided_slice %152 {offsets = [0, 32], sizes = [2, 32], strides = [1, 1]} : vector<2x128xf32> to vector<2x32xf32>
    %160 = arith.negf %159 : vector<2x32xf32>
    %161 = math.exp %160 : vector<2x32xf32>
    %cst_59 = arith.constant 1.000000e+00 : f32
    %162 = vector.broadcast %cst_59 : f32 to vector<2x32xf32>
    %163 = arith.addf %162, %161 : vector<2x32xf32>
    %164 = arith.divf %162, %163 : vector<2x32xf32>
    %165 = vector.extract_strided_slice %152 {offsets = [0, 64], sizes = [2, 32], strides = [1, 1]} : vector<2x128xf32> to vector<2x32xf32>
    %166 = math.tanh %165 : vector<2x32xf32>
    %167 = vector.extract_strided_slice %152 {offsets = [0, 96], sizes = [2, 32], strides = [1, 1]} : vector<2x128xf32> to vector<2x32xf32>
    %168 = arith.negf %167 : vector<2x32xf32>
    %169 = math.exp %168 : vector<2x32xf32>
    %cst_60 = arith.constant 1.000000e+00 : f32
    %170 = vector.broadcast %cst_60 : f32 to vector<2x32xf32>
    %171 = arith.addf %170, %169 : vector<2x32xf32>
    %172 = arith.divf %170, %171 : vector<2x32xf32>
    %173 = arith.mulf %164, %102 : vector<2x32xf32>
    %174 = arith.mulf %158, %166 : vector<2x32xf32>
    %175 = arith.addf %173, %174 : vector<2x32xf32>
    %176 = math.tanh %175 : vector<2x32xf32>
    %177 = arith.mulf %172, %176 : vector<2x32xf32>
    %cst_61 = arith.constant 1.000000e+00 : f32
    %178 = arith.addf %46, %cst_61 : f32
    %179 = vector.broadcast %178 : f32 to vector<2x1xf32>
    %180 = arith.cmpf ogt, %36, %179 : vector<2x1xf32>
    %181 = arith.extui %180 : vector<2x1xi1> to vector<2x1xi32>
    %182 = arith.sitofp %181 : vector<2x1xi32> to vector<2x1xf32>
    %183 = vector.broadcast %182 : vector<2x1xf32> to vector<2x32xf32>
    %184 = arith.mulf %148, %183 : vector<2x32xf32>
    %185 = arith.addf %112, %184 : vector<2x32xf32>
    %186 = vector.broadcast %178 : f32 to vector<2x1xf32>
    %187 = arith.cmpf ogt, %37, %186 : vector<2x1xf32>
    %188 = arith.extui %187 : vector<2x1xi1> to vector<2x1xi32>
    %189 = arith.sitofp %188 : vector<2x1xi32> to vector<2x1xf32>
    %190 = vector.broadcast %189 : vector<2x1xf32> to vector<2x32xf32>
    %191 = arith.mulf %177, %190 : vector<2x32xf32>
    %192 = arith.addf %119, %191 : vector<2x32xf32>
    %193 = vector.extract_strided_slice %41 {offsets = [4, 0], sizes = [2, 128], strides = [1, 1]} : vector<8x128xf32> to vector<2x128xf32>
    %c0_62 = arith.constant 0 : index
    %c0_63 = arith.constant 0 : index
    %194 = vector.load %arg5[%c0_62, %c0_63] : memref<32x128xf32, #tpu.memory_space<vmem>>, vector<32x128xf32>
    %cst_64 = arith.constant dense<0.000000e+00> : vector<2x128xf32>
    %195 = tpu.matmul %148, %194, %cst_64 {dimension_numbers = #tpu.dot_dimension_numbers<[1], [0], [0], [1], [0, 0, 1, 1], [], []>} : vector<2x32xf32>, vector<32x128xf32>, vector<2x128xf32> -> vector<2x128xf32>
    %196 = arith.addf %193, %195 : vector<2x128xf32>
    %197 = vector.extract_strided_slice %196 {offsets = [0, 0], sizes = [2, 32], strides = [1, 1]} : vector<2x128xf32> to vector<2x32xf32>
    %198 = arith.negf %197 : vector<2x32xf32>
    %199 = math.exp %198 : vector<2x32xf32>
    %cst_65 = arith.constant 1.000000e+00 : f32
    %200 = vector.broadcast %cst_65 : f32 to vector<2x32xf32>
    %201 = arith.addf %200, %199 : vector<2x32xf32>
    %202 = arith.divf %200, %201 : vector<2x32xf32>
    %203 = vector.extract_strided_slice %196 {offsets = [0, 32], sizes = [2, 32], strides = [1, 1]} : vector<2x128xf32> to vector<2x32xf32>
    %204 = arith.negf %203 : vector<2x32xf32>
    %205 = math.exp %204 : vector<2x32xf32>
    %cst_66 = arith.constant 1.000000e+00 : f32
    %206 = vector.broadcast %cst_66 : f32 to vector<2x32xf32>
    %207 = arith.addf %206, %205 : vector<2x32xf32>
    %208 = arith.divf %206, %207 : vector<2x32xf32>
    %209 = vector.extract_strided_slice %196 {offsets = [0, 64], sizes = [2, 32], strides = [1, 1]} : vector<2x128xf32> to vector<2x32xf32>
    %210 = math.tanh %209 : vector<2x32xf32>
    %211 = vector.extract_strided_slice %196 {offsets = [0, 96], sizes = [2, 32], strides = [1, 1]} : vector<2x128xf32> to vector<2x32xf32>
    %212 = arith.negf %211 : vector<2x32xf32>
    %213 = math.exp %212 : vector<2x32xf32>
    %cst_67 = arith.constant 1.000000e+00 : f32
    %214 = vector.broadcast %cst_67 : f32 to vector<2x32xf32>
    %215 = arith.addf %214, %213 : vector<2x32xf32>
    %216 = arith.divf %214, %215 : vector<2x32xf32>
    %217 = arith.mulf %208, %146 : vector<2x32xf32>
    %218 = arith.mulf %202, %210 : vector<2x32xf32>
    %219 = arith.addf %217, %218 : vector<2x32xf32>
    %220 = math.tanh %219 : vector<2x32xf32>
    %221 = arith.mulf %216, %220 : vector<2x32xf32>
    %222 = vector.extract_strided_slice %44 {offsets = [4, 0], sizes = [2, 128], strides = [1, 1]} : vector<8x128xf32> to vector<2x128xf32>
    %c0_68 = arith.constant 0 : index
    %c0_69 = arith.constant 0 : index
    %223 = vector.load %arg8[%c0_68, %c0_69] : memref<32x128xf32, #tpu.memory_space<vmem>>, vector<32x128xf32>
    %cst_70 = arith.constant dense<0.000000e+00> : vector<2x128xf32>
    %224 = tpu.matmul %177, %223, %cst_70 {dimension_numbers = #tpu.dot_dimension_numbers<[1], [0], [0], [1], [0, 0, 1, 1], [], []>} : vector<2x32xf32>, vector<32x128xf32>, vector<2x128xf32> -> vector<2x128xf32>
    %225 = arith.addf %222, %224 : vector<2x128xf32>
    %226 = vector.extract_strided_slice %225 {offsets = [0, 0], sizes = [2, 32], strides = [1, 1]} : vector<2x128xf32> to vector<2x32xf32>
    %227 = arith.negf %226 : vector<2x32xf32>
    %228 = math.exp %227 : vector<2x32xf32>
    %cst_71 = arith.constant 1.000000e+00 : f32
    %229 = vector.broadcast %cst_71 : f32 to vector<2x32xf32>
    %230 = arith.addf %229, %228 : vector<2x32xf32>
    %231 = arith.divf %229, %230 : vector<2x32xf32>
    %232 = vector.extract_strided_slice %225 {offsets = [0, 32], sizes = [2, 32], strides = [1, 1]} : vector<2x128xf32> to vector<2x32xf32>
    %233 = arith.negf %232 : vector<2x32xf32>
    %234 = math.exp %233 : vector<2x32xf32>
    %cst_72 = arith.constant 1.000000e+00 : f32
    %235 = vector.broadcast %cst_72 : f32 to vector<2x32xf32>
    %236 = arith.addf %235, %234 : vector<2x32xf32>
    %237 = arith.divf %235, %236 : vector<2x32xf32>
    %238 = vector.extract_strided_slice %225 {offsets = [0, 64], sizes = [2, 32], strides = [1, 1]} : vector<2x128xf32> to vector<2x32xf32>
    %239 = math.tanh %238 : vector<2x32xf32>
    %240 = vector.extract_strided_slice %225 {offsets = [0, 96], sizes = [2, 32], strides = [1, 1]} : vector<2x128xf32> to vector<2x32xf32>
    %241 = arith.negf %240 : vector<2x32xf32>
    %242 = math.exp %241 : vector<2x32xf32>
    %cst_73 = arith.constant 1.000000e+00 : f32
    %243 = vector.broadcast %cst_73 : f32 to vector<2x32xf32>
    %244 = arith.addf %243, %242 : vector<2x32xf32>
    %245 = arith.divf %243, %244 : vector<2x32xf32>
    %246 = arith.mulf %237, %175 : vector<2x32xf32>
    %247 = arith.mulf %231, %239 : vector<2x32xf32>
    %248 = arith.addf %246, %247 : vector<2x32xf32>
    %249 = math.tanh %248 : vector<2x32xf32>
    %250 = arith.mulf %245, %249 : vector<2x32xf32>
    %cst_74 = arith.constant 2.000000e+00 : f32
    %251 = arith.addf %46, %cst_74 : f32
    %252 = vector.broadcast %251 : f32 to vector<2x1xf32>
    %253 = arith.cmpf ogt, %36, %252 : vector<2x1xf32>
    %254 = arith.extui %253 : vector<2x1xi1> to vector<2x1xi32>
    %255 = arith.sitofp %254 : vector<2x1xi32> to vector<2x1xf32>
    %256 = vector.broadcast %255 : vector<2x1xf32> to vector<2x32xf32>
    %257 = arith.mulf %221, %256 : vector<2x32xf32>
    %258 = arith.addf %185, %257 : vector<2x32xf32>
    %259 = vector.broadcast %251 : f32 to vector<2x1xf32>
    %260 = arith.cmpf ogt, %37, %259 : vector<2x1xf32>
    %261 = arith.extui %260 : vector<2x1xi1> to vector<2x1xi32>
    %262 = arith.sitofp %261 : vector<2x1xi32> to vector<2x1xf32>
    %263 = vector.broadcast %262 : vector<2x1xf32> to vector<2x32xf32>
    %264 = arith.mulf %250, %263 : vector<2x32xf32>
    %265 = arith.addf %192, %264 : vector<2x32xf32>
    %266 = vector.extract_strided_slice %41 {offsets = [6, 0], sizes = [2, 128], strides = [1, 1]} : vector<8x128xf32> to vector<2x128xf32>
    %c0_75 = arith.constant 0 : index
    %c0_76 = arith.constant 0 : index
    %267 = vector.load %arg5[%c0_75, %c0_76] : memref<32x128xf32, #tpu.memory_space<vmem>>, vector<32x128xf32>
    %cst_77 = arith.constant dense<0.000000e+00> : vector<2x128xf32>
    %268 = tpu.matmul %221, %267, %cst_77 {dimension_numbers = #tpu.dot_dimension_numbers<[1], [0], [0], [1], [0, 0, 1, 1], [], []>} : vector<2x32xf32>, vector<32x128xf32>, vector<2x128xf32> -> vector<2x128xf32>
    %269 = arith.addf %266, %268 : vector<2x128xf32>
    %270 = vector.extract_strided_slice %269 {offsets = [0, 0], sizes = [2, 32], strides = [1, 1]} : vector<2x128xf32> to vector<2x32xf32>
    %271 = arith.negf %270 : vector<2x32xf32>
    %272 = math.exp %271 : vector<2x32xf32>
    %cst_78 = arith.constant 1.000000e+00 : f32
    %273 = vector.broadcast %cst_78 : f32 to vector<2x32xf32>
    %274 = arith.addf %273, %272 : vector<2x32xf32>
    %275 = arith.divf %273, %274 : vector<2x32xf32>
    %276 = vector.extract_strided_slice %269 {offsets = [0, 32], sizes = [2, 32], strides = [1, 1]} : vector<2x128xf32> to vector<2x32xf32>
    %277 = arith.negf %276 : vector<2x32xf32>
    %278 = math.exp %277 : vector<2x32xf32>
    %cst_79 = arith.constant 1.000000e+00 : f32
    %279 = vector.broadcast %cst_79 : f32 to vector<2x32xf32>
    %280 = arith.addf %279, %278 : vector<2x32xf32>
    %281 = arith.divf %279, %280 : vector<2x32xf32>
    %282 = vector.extract_strided_slice %269 {offsets = [0, 64], sizes = [2, 32], strides = [1, 1]} : vector<2x128xf32> to vector<2x32xf32>
    %283 = math.tanh %282 : vector<2x32xf32>
    %284 = vector.extract_strided_slice %269 {offsets = [0, 96], sizes = [2, 32], strides = [1, 1]} : vector<2x128xf32> to vector<2x32xf32>
    %285 = arith.negf %284 : vector<2x32xf32>
    %286 = math.exp %285 : vector<2x32xf32>
    %cst_80 = arith.constant 1.000000e+00 : f32
    %287 = vector.broadcast %cst_80 : f32 to vector<2x32xf32>
    %288 = arith.addf %287, %286 : vector<2x32xf32>
    %289 = arith.divf %287, %288 : vector<2x32xf32>
    %290 = arith.mulf %281, %219 : vector<2x32xf32>
    %291 = arith.mulf %275, %283 : vector<2x32xf32>
    %292 = arith.addf %290, %291 : vector<2x32xf32>
    %293 = math.tanh %292 : vector<2x32xf32>
    %294 = arith.mulf %289, %293 : vector<2x32xf32>
    %295 = vector.extract_strided_slice %44 {offsets = [6, 0], sizes = [2, 128], strides = [1, 1]} : vector<8x128xf32> to vector<2x128xf32>
    %c0_81 = arith.constant 0 : index
    %c0_82 = arith.constant 0 : index
    %296 = vector.load %arg8[%c0_81, %c0_82] : memref<32x128xf32, #tpu.memory_space<vmem>>, vector<32x128xf32>
    %cst_83 = arith.constant dense<0.000000e+00> : vector<2x128xf32>
    %297 = tpu.matmul %250, %296, %cst_83 {dimension_numbers = #tpu.dot_dimension_numbers<[1], [0], [0], [1], [0, 0, 1, 1], [], []>} : vector<2x32xf32>, vector<32x128xf32>, vector<2x128xf32> -> vector<2x128xf32>
    %298 = arith.addf %295, %297 : vector<2x128xf32>
    %299 = vector.extract_strided_slice %298 {offsets = [0, 0], sizes = [2, 32], strides = [1, 1]} : vector<2x128xf32> to vector<2x32xf32>
    %300 = arith.negf %299 : vector<2x32xf32>
    %301 = math.exp %300 : vector<2x32xf32>
    %cst_84 = arith.constant 1.000000e+00 : f32
    %302 = vector.broadcast %cst_84 : f32 to vector<2x32xf32>
    %303 = arith.addf %302, %301 : vector<2x32xf32>
    %304 = arith.divf %302, %303 : vector<2x32xf32>
    %305 = vector.extract_strided_slice %298 {offsets = [0, 32], sizes = [2, 32], strides = [1, 1]} : vector<2x128xf32> to vector<2x32xf32>
    %306 = arith.negf %305 : vector<2x32xf32>
    %307 = math.exp %306 : vector<2x32xf32>
    %cst_85 = arith.constant 1.000000e+00 : f32
    %308 = vector.broadcast %cst_85 : f32 to vector<2x32xf32>
    %309 = arith.addf %308, %307 : vector<2x32xf32>
    %310 = arith.divf %308, %309 : vector<2x32xf32>
    %311 = vector.extract_strided_slice %298 {offsets = [0, 64], sizes = [2, 32], strides = [1, 1]} : vector<2x128xf32> to vector<2x32xf32>
    %312 = math.tanh %311 : vector<2x32xf32>
    %313 = vector.extract_strided_slice %298 {offsets = [0, 96], sizes = [2, 32], strides = [1, 1]} : vector<2x128xf32> to vector<2x32xf32>
    %314 = arith.negf %313 : vector<2x32xf32>
    %315 = math.exp %314 : vector<2x32xf32>
    %cst_86 = arith.constant 1.000000e+00 : f32
    %316 = vector.broadcast %cst_86 : f32 to vector<2x32xf32>
    %317 = arith.addf %316, %315 : vector<2x32xf32>
    %318 = arith.divf %316, %317 : vector<2x32xf32>
    %319 = arith.mulf %310, %248 : vector<2x32xf32>
    %320 = arith.mulf %304, %312 : vector<2x32xf32>
    %321 = arith.addf %319, %320 : vector<2x32xf32>
    %322 = math.tanh %321 : vector<2x32xf32>
    %323 = arith.mulf %318, %322 : vector<2x32xf32>
    %cst_87 = arith.constant 3.000000e+00 : f32
    %324 = arith.addf %46, %cst_87 : f32
    %325 = vector.broadcast %324 : f32 to vector<2x1xf32>
    %326 = arith.cmpf ogt, %36, %325 : vector<2x1xf32>
    %327 = arith.extui %326 : vector<2x1xi1> to vector<2x1xi32>
    %328 = arith.sitofp %327 : vector<2x1xi32> to vector<2x1xf32>
    %329 = vector.broadcast %328 : vector<2x1xf32> to vector<2x32xf32>
    %330 = arith.mulf %294, %329 : vector<2x32xf32>
    %331 = arith.addf %258, %330 : vector<2x32xf32>
    %332 = vector.broadcast %324 : f32 to vector<2x1xf32>
    %333 = arith.cmpf ogt, %37, %332 : vector<2x1xf32>
    %334 = arith.extui %333 : vector<2x1xi1> to vector<2x1xi32>
    %335 = arith.sitofp %334 : vector<2x1xi32> to vector<2x1xf32>
    %336 = vector.broadcast %335 : vector<2x1xf32> to vector<2x32xf32>
    %337 = arith.mulf %323, %336 : vector<2x32xf32>
    %338 = arith.addf %265, %337 : vector<2x32xf32>
    %c1_i32 = arith.constant 1 : i32
    %339 = arith.index_cast %c1_i32 : i32 to index
    %c0_88 = arith.constant 0 : index
    %c0_89 = arith.constant 0 : index
    %340 = vector.load %arg14[%339, %c0_88, %c0_89] : memref<4x8x128xf32, #tpu.memory_space<vmem>>, vector<1x8x128xf32>
    %341 = vector.shape_cast %340 : vector<1x8x128xf32> to vector<8x128xf32>
    %342 = arith.index_cast %c1_i32 : i32 to index
    %c0_90 = arith.constant 0 : index
    %c0_91 = arith.constant 0 : index
    %343 = vector.load %arg15[%342, %c0_90, %c0_91] : memref<2x8x128xf32, #tpu.memory_space<vmem>>, vector<1x8x128xf32>
    %344 = vector.shape_cast %343 : vector<1x8x128xf32> to vector<8x128xf32>
    %c4_i32_92 = arith.constant 4 : i32
    %345 = arith.muli %c1_i32, %c4_i32_92 : i32
    %346 = arith.sitofp %345 : i32 to f32
    %347 = vector.extract_strided_slice %341 {offsets = [0, 0], sizes = [2, 128], strides = [1, 1]} : vector<8x128xf32> to vector<2x128xf32>
    %c0_93 = arith.constant 0 : index
    %c0_94 = arith.constant 0 : index
    %348 = vector.load %arg5[%c0_93, %c0_94] : memref<32x128xf32, #tpu.memory_space<vmem>>, vector<32x128xf32>
    %cst_95 = arith.constant dense<0.000000e+00> : vector<2x128xf32>
    %349 = tpu.matmul %294, %348, %cst_95 {dimension_numbers = #tpu.dot_dimension_numbers<[1], [0], [0], [1], [0, 0, 1, 1], [], []>} : vector<2x32xf32>, vector<32x128xf32>, vector<2x128xf32> -> vector<2x128xf32>
    %350 = arith.addf %347, %349 : vector<2x128xf32>
    %351 = vector.extract_strided_slice %350 {offsets = [0, 0], sizes = [2, 32], strides = [1, 1]} : vector<2x128xf32> to vector<2x32xf32>
    %352 = arith.negf %351 : vector<2x32xf32>
    %353 = math.exp %352 : vector<2x32xf32>
    %cst_96 = arith.constant 1.000000e+00 : f32
    %354 = vector.broadcast %cst_96 : f32 to vector<2x32xf32>
    %355 = arith.addf %354, %353 : vector<2x32xf32>
    %356 = arith.divf %354, %355 : vector<2x32xf32>
    %357 = vector.extract_strided_slice %350 {offsets = [0, 32], sizes = [2, 32], strides = [1, 1]} : vector<2x128xf32> to vector<2x32xf32>
    %358 = arith.negf %357 : vector<2x32xf32>
    %359 = math.exp %358 : vector<2x32xf32>
    %cst_97 = arith.constant 1.000000e+00 : f32
    %360 = vector.broadcast %cst_97 : f32 to vector<2x32xf32>
    %361 = arith.addf %360, %359 : vector<2x32xf32>
    %362 = arith.divf %360, %361 : vector<2x32xf32>
    %363 = vector.extract_strided_slice %350 {offsets = [0, 64], sizes = [2, 32], strides = [1, 1]} : vector<2x128xf32> to vector<2x32xf32>
    %364 = math.tanh %363 : vector<2x32xf32>
    %365 = vector.extract_strided_slice %350 {offsets = [0, 96], sizes = [2, 32], strides = [1, 1]} : vector<2x128xf32> to vector<2x32xf32>
    %366 = arith.negf %365 : vector<2x32xf32>
    %367 = math.exp %366 : vector<2x32xf32>
    %cst_98 = arith.constant 1.000000e+00 : f32
    %368 = vector.broadcast %cst_98 : f32 to vector<2x32xf32>
    %369 = arith.addf %368, %367 : vector<2x32xf32>
    %370 = arith.divf %368, %369 : vector<2x32xf32>
    %371 = arith.mulf %362, %292 : vector<2x32xf32>
    %372 = arith.mulf %356, %364 : vector<2x32xf32>
    %373 = arith.addf %371, %372 : vector<2x32xf32>
    %374 = math.tanh %373 : vector<2x32xf32>
    %375 = arith.mulf %370, %374 : vector<2x32xf32>
    %376 = vector.extract_strided_slice %344 {offsets = [0, 0], sizes = [2, 128], strides = [1, 1]} : vector<8x128xf32> to vector<2x128xf32>
    %c0_99 = arith.constant 0 : index
    %c0_100 = arith.constant 0 : index
    %377 = vector.load %arg8[%c0_99, %c0_100] : memref<32x128xf32, #tpu.memory_space<vmem>>, vector<32x128xf32>
    %cst_101 = arith.constant dense<0.000000e+00> : vector<2x128xf32>
    %378 = tpu.matmul %323, %377, %cst_101 {dimension_numbers = #tpu.dot_dimension_numbers<[1], [0], [0], [1], [0, 0, 1, 1], [], []>} : vector<2x32xf32>, vector<32x128xf32>, vector<2x128xf32> -> vector<2x128xf32>
    %379 = arith.addf %376, %378 : vector<2x128xf32>
    %380 = vector.extract_strided_slice %379 {offsets = [0, 0], sizes = [2, 32], strides = [1, 1]} : vector<2x128xf32> to vector<2x32xf32>
    %381 = arith.negf %380 : vector<2x32xf32>
    %382 = math.exp %381 : vector<2x32xf32>
    %cst_102 = arith.constant 1.000000e+00 : f32
    %383 = vector.broadcast %cst_102 : f32 to vector<2x32xf32>
    %384 = arith.addf %383, %382 : vector<2x32xf32>
    %385 = arith.divf %383, %384 : vector<2x32xf32>
    %386 = vector.extract_strided_slice %379 {offsets = [0, 32], sizes = [2, 32], strides = [1, 1]} : vector<2x128xf32> to vector<2x32xf32>
    %387 = arith.negf %386 : vector<2x32xf32>
    %388 = math.exp %387 : vector<2x32xf32>
    %cst_103 = arith.constant 1.000000e+00 : f32
    %389 = vector.broadcast %cst_103 : f32 to vector<2x32xf32>
    %390 = arith.addf %389, %388 : vector<2x32xf32>
    %391 = arith.divf %389, %390 : vector<2x32xf32>
    %392 = vector.extract_strided_slice %379 {offsets = [0, 64], sizes = [2, 32], strides = [1, 1]} : vector<2x128xf32> to vector<2x32xf32>
    %393 = math.tanh %392 : vector<2x32xf32>
    %394 = vector.extract_strided_slice %379 {offsets = [0, 96], sizes = [2, 32], strides = [1, 1]} : vector<2x128xf32> to vector<2x32xf32>
    %395 = arith.negf %394 : vector<2x32xf32>
    %396 = math.exp %395 : vector<2x32xf32>
    %cst_104 = arith.constant 1.000000e+00 : f32
    %397 = vector.broadcast %cst_104 : f32 to vector<2x32xf32>
    %398 = arith.addf %397, %396 : vector<2x32xf32>
    %399 = arith.divf %397, %398 : vector<2x32xf32>
    %400 = arith.mulf %391, %321 : vector<2x32xf32>
    %401 = arith.mulf %385, %393 : vector<2x32xf32>
    %402 = arith.addf %400, %401 : vector<2x32xf32>
    %403 = math.tanh %402 : vector<2x32xf32>
    %404 = arith.mulf %399, %403 : vector<2x32xf32>
    %cst_105 = arith.constant 0.000000e+00 : f32
    %405 = arith.addf %346, %cst_105 : f32
    %406 = vector.broadcast %405 : f32 to vector<2x1xf32>
    %407 = arith.cmpf ogt, %36, %406 : vector<2x1xf32>
    %408 = arith.extui %407 : vector<2x1xi1> to vector<2x1xi32>
    %409 = arith.sitofp %408 : vector<2x1xi32> to vector<2x1xf32>
    %410 = vector.broadcast %409 : vector<2x1xf32> to vector<2x32xf32>
    %411 = arith.mulf %375, %410 : vector<2x32xf32>
    %412 = arith.addf %331, %411 : vector<2x32xf32>
    %413 = vector.broadcast %405 : f32 to vector<2x1xf32>
    %414 = arith.cmpf ogt, %37, %413 : vector<2x1xf32>
    %415 = arith.extui %414 : vector<2x1xi1> to vector<2x1xi32>
    %416 = arith.sitofp %415 : vector<2x1xi32> to vector<2x1xf32>
    %417 = vector.broadcast %416 : vector<2x1xf32> to vector<2x32xf32>
    %418 = arith.mulf %404, %417 : vector<2x32xf32>
    %419 = arith.addf %338, %418 : vector<2x32xf32>
    %420 = vector.extract_strided_slice %341 {offsets = [2, 0], sizes = [2, 128], strides = [1, 1]} : vector<8x128xf32> to vector<2x128xf32>
    %c0_106 = arith.constant 0 : index
    %c0_107 = arith.constant 0 : index
    %421 = vector.load %arg5[%c0_106, %c0_107] : memref<32x128xf32, #tpu.memory_space<vmem>>, vector<32x128xf32>
    %cst_108 = arith.constant dense<0.000000e+00> : vector<2x128xf32>
    %422 = tpu.matmul %375, %421, %cst_108 {dimension_numbers = #tpu.dot_dimension_numbers<[1], [0], [0], [1], [0, 0, 1, 1], [], []>} : vector<2x32xf32>, vector<32x128xf32>, vector<2x128xf32> -> vector<2x128xf32>
    %423 = arith.addf %420, %422 : vector<2x128xf32>
    %424 = vector.extract_strided_slice %423 {offsets = [0, 0], sizes = [2, 32], strides = [1, 1]} : vector<2x128xf32> to vector<2x32xf32>
    %425 = arith.negf %424 : vector<2x32xf32>
    %426 = math.exp %425 : vector<2x32xf32>
    %cst_109 = arith.constant 1.000000e+00 : f32
    %427 = vector.broadcast %cst_109 : f32 to vector<2x32xf32>
    %428 = arith.addf %427, %426 : vector<2x32xf32>
    %429 = arith.divf %427, %428 : vector<2x32xf32>
    %430 = vector.extract_strided_slice %423 {offsets = [0, 32], sizes = [2, 32], strides = [1, 1]} : vector<2x128xf32> to vector<2x32xf32>
    %431 = arith.negf %430 : vector<2x32xf32>
    %432 = math.exp %431 : vector<2x32xf32>
    %cst_110 = arith.constant 1.000000e+00 : f32
    %433 = vector.broadcast %cst_110 : f32 to vector<2x32xf32>
    %434 = arith.addf %433, %432 : vector<2x32xf32>
    %435 = arith.divf %433, %434 : vector<2x32xf32>
    %436 = vector.extract_strided_slice %423 {offsets = [0, 64], sizes = [2, 32], strides = [1, 1]} : vector<2x128xf32> to vector<2x32xf32>
    %437 = math.tanh %436 : vector<2x32xf32>
    %438 = vector.extract_strided_slice %423 {offsets = [0, 96], sizes = [2, 32], strides = [1, 1]} : vector<2x128xf32> to vector<2x32xf32>
    %439 = arith.negf %438 : vector<2x32xf32>
    %440 = math.exp %439 : vector<2x32xf32>
    %cst_111 = arith.constant 1.000000e+00 : f32
    %441 = vector.broadcast %cst_111 : f32 to vector<2x32xf32>
    %442 = arith.addf %441, %440 : vector<2x32xf32>
    %443 = arith.divf %441, %442 : vector<2x32xf32>
    %444 = arith.mulf %435, %373 : vector<2x32xf32>
    %445 = arith.mulf %429, %437 : vector<2x32xf32>
    %446 = arith.addf %444, %445 : vector<2x32xf32>
    %447 = math.tanh %446 : vector<2x32xf32>
    %448 = arith.mulf %443, %447 : vector<2x32xf32>
    %449 = vector.extract_strided_slice %344 {offsets = [2, 0], sizes = [2, 128], strides = [1, 1]} : vector<8x128xf32> to vector<2x128xf32>
    %c0_112 = arith.constant 0 : index
    %c0_113 = arith.constant 0 : index
    %450 = vector.load %arg8[%c0_112, %c0_113] : memref<32x128xf32, #tpu.memory_space<vmem>>, vector<32x128xf32>
    %cst_114 = arith.constant dense<0.000000e+00> : vector<2x128xf32>
    %451 = tpu.matmul %404, %450, %cst_114 {dimension_numbers = #tpu.dot_dimension_numbers<[1], [0], [0], [1], [0, 0, 1, 1], [], []>} : vector<2x32xf32>, vector<32x128xf32>, vector<2x128xf32> -> vector<2x128xf32>
    %452 = arith.addf %449, %451 : vector<2x128xf32>
    %453 = vector.extract_strided_slice %452 {offsets = [0, 0], sizes = [2, 32], strides = [1, 1]} : vector<2x128xf32> to vector<2x32xf32>
    %454 = arith.negf %453 : vector<2x32xf32>
    %455 = math.exp %454 : vector<2x32xf32>
    %cst_115 = arith.constant 1.000000e+00 : f32
    %456 = vector.broadcast %cst_115 : f32 to vector<2x32xf32>
    %457 = arith.addf %456, %455 : vector<2x32xf32>
    %458 = arith.divf %456, %457 : vector<2x32xf32>
    %459 = vector.extract_strided_slice %452 {offsets = [0, 32], sizes = [2, 32], strides = [1, 1]} : vector<2x128xf32> to vector<2x32xf32>
    %460 = arith.negf %459 : vector<2x32xf32>
    %461 = math.exp %460 : vector<2x32xf32>
    %cst_116 = arith.constant 1.000000e+00 : f32
    %462 = vector.broadcast %cst_116 : f32 to vector<2x32xf32>
    %463 = arith.addf %462, %461 : vector<2x32xf32>
    %464 = arith.divf %462, %463 : vector<2x32xf32>
    %465 = vector.extract_strided_slice %452 {offsets = [0, 64], sizes = [2, 32], strides = [1, 1]} : vector<2x128xf32> to vector<2x32xf32>
    %466 = math.tanh %465 : vector<2x32xf32>
    %467 = vector.extract_strided_slice %452 {offsets = [0, 96], sizes = [2, 32], strides = [1, 1]} : vector<2x128xf32> to vector<2x32xf32>
    %468 = arith.negf %467 : vector<2x32xf32>
    %469 = math.exp %468 : vector<2x32xf32>
    %cst_117 = arith.constant 1.000000e+00 : f32
    %470 = vector.broadcast %cst_117 : f32 to vector<2x32xf32>
    %471 = arith.addf %470, %469 : vector<2x32xf32>
    %472 = arith.divf %470, %471 : vector<2x32xf32>
    %473 = arith.mulf %464, %402 : vector<2x32xf32>
    %474 = arith.mulf %458, %466 : vector<2x32xf32>
    %475 = arith.addf %473, %474 : vector<2x32xf32>
    %476 = math.tanh %475 : vector<2x32xf32>
    %477 = arith.mulf %472, %476 : vector<2x32xf32>
    %cst_118 = arith.constant 1.000000e+00 : f32
    %478 = arith.addf %346, %cst_118 : f32
    %479 = vector.broadcast %478 : f32 to vector<2x1xf32>
    %480 = arith.cmpf ogt, %36, %479 : vector<2x1xf32>
    %481 = arith.extui %480 : vector<2x1xi1> to vector<2x1xi32>
    %482 = arith.sitofp %481 : vector<2x1xi32> to vector<2x1xf32>
    %483 = vector.broadcast %482 : vector<2x1xf32> to vector<2x32xf32>
    %484 = arith.mulf %448, %483 : vector<2x32xf32>
    %485 = arith.addf %412, %484 : vector<2x32xf32>
    %486 = vector.broadcast %478 : f32 to vector<2x1xf32>
    %487 = arith.cmpf ogt, %37, %486 : vector<2x1xf32>
    %488 = arith.extui %487 : vector<2x1xi1> to vector<2x1xi32>
    %489 = arith.sitofp %488 : vector<2x1xi32> to vector<2x1xf32>
    %490 = vector.broadcast %489 : vector<2x1xf32> to vector<2x32xf32>
    %491 = arith.mulf %477, %490 : vector<2x32xf32>
    %492 = arith.addf %419, %491 : vector<2x32xf32>
    %493 = vector.extract_strided_slice %341 {offsets = [4, 0], sizes = [2, 128], strides = [1, 1]} : vector<8x128xf32> to vector<2x128xf32>
    %c0_119 = arith.constant 0 : index
    %c0_120 = arith.constant 0 : index
    %494 = vector.load %arg5[%c0_119, %c0_120] : memref<32x128xf32, #tpu.memory_space<vmem>>, vector<32x128xf32>
    %cst_121 = arith.constant dense<0.000000e+00> : vector<2x128xf32>
    %495 = tpu.matmul %448, %494, %cst_121 {dimension_numbers = #tpu.dot_dimension_numbers<[1], [0], [0], [1], [0, 0, 1, 1], [], []>} : vector<2x32xf32>, vector<32x128xf32>, vector<2x128xf32> -> vector<2x128xf32>
    %496 = arith.addf %493, %495 : vector<2x128xf32>
    %497 = vector.extract_strided_slice %496 {offsets = [0, 0], sizes = [2, 32], strides = [1, 1]} : vector<2x128xf32> to vector<2x32xf32>
    %498 = arith.negf %497 : vector<2x32xf32>
    %499 = math.exp %498 : vector<2x32xf32>
    %cst_122 = arith.constant 1.000000e+00 : f32
    %500 = vector.broadcast %cst_122 : f32 to vector<2x32xf32>
    %501 = arith.addf %500, %499 : vector<2x32xf32>
    %502 = arith.divf %500, %501 : vector<2x32xf32>
    %503 = vector.extract_strided_slice %496 {offsets = [0, 32], sizes = [2, 32], strides = [1, 1]} : vector<2x128xf32> to vector<2x32xf32>
    %504 = arith.negf %503 : vector<2x32xf32>
    %505 = math.exp %504 : vector<2x32xf32>
    %cst_123 = arith.constant 1.000000e+00 : f32
    %506 = vector.broadcast %cst_123 : f32 to vector<2x32xf32>
    %507 = arith.addf %506, %505 : vector<2x32xf32>
    %508 = arith.divf %506, %507 : vector<2x32xf32>
    %509 = vector.extract_strided_slice %496 {offsets = [0, 64], sizes = [2, 32], strides = [1, 1]} : vector<2x128xf32> to vector<2x32xf32>
    %510 = math.tanh %509 : vector<2x32xf32>
    %511 = vector.extract_strided_slice %496 {offsets = [0, 96], sizes = [2, 32], strides = [1, 1]} : vector<2x128xf32> to vector<2x32xf32>
    %512 = arith.negf %511 : vector<2x32xf32>
    %513 = math.exp %512 : vector<2x32xf32>
    %cst_124 = arith.constant 1.000000e+00 : f32
    %514 = vector.broadcast %cst_124 : f32 to vector<2x32xf32>
    %515 = arith.addf %514, %513 : vector<2x32xf32>
    %516 = arith.divf %514, %515 : vector<2x32xf32>
    %517 = arith.mulf %508, %446 : vector<2x32xf32>
    %518 = arith.mulf %502, %510 : vector<2x32xf32>
    %519 = arith.addf %517, %518 : vector<2x32xf32>
    %520 = math.tanh %519 : vector<2x32xf32>
    %521 = arith.mulf %516, %520 : vector<2x32xf32>
    %522 = vector.extract_strided_slice %344 {offsets = [4, 0], sizes = [2, 128], strides = [1, 1]} : vector<8x128xf32> to vector<2x128xf32>
    %c0_125 = arith.constant 0 : index
    %c0_126 = arith.constant 0 : index
    %523 = vector.load %arg8[%c0_125, %c0_126] : memref<32x128xf32, #tpu.memory_space<vmem>>, vector<32x128xf32>
    %cst_127 = arith.constant dense<0.000000e+00> : vector<2x128xf32>
    %524 = tpu.matmul %477, %523, %cst_127 {dimension_numbers = #tpu.dot_dimension_numbers<[1], [0], [0], [1], [0, 0, 1, 1], [], []>} : vector<2x32xf32>, vector<32x128xf32>, vector<2x128xf32> -> vector<2x128xf32>
    %525 = arith.addf %522, %524 : vector<2x128xf32>
    %526 = vector.extract_strided_slice %525 {offsets = [0, 0], sizes = [2, 32], strides = [1, 1]} : vector<2x128xf32> to vector<2x32xf32>
    %527 = arith.negf %526 : vector<2x32xf32>
    %528 = math.exp %527 : vector<2x32xf32>
    %cst_128 = arith.constant 1.000000e+00 : f32
    %529 = vector.broadcast %cst_128 : f32 to vector<2x32xf32>
    %530 = arith.addf %529, %528 : vector<2x32xf32>
    %531 = arith.divf %529, %530 : vector<2x32xf32>
    %532 = vector.extract_strided_slice %525 {offsets = [0, 32], sizes = [2, 32], strides = [1, 1]} : vector<2x128xf32> to vector<2x32xf32>
    %533 = arith.negf %532 : vector<2x32xf32>
    %534 = math.exp %533 : vector<2x32xf32>
    %cst_129 = arith.constant 1.000000e+00 : f32
    %535 = vector.broadcast %cst_129 : f32 to vector<2x32xf32>
    %536 = arith.addf %535, %534 : vector<2x32xf32>
    %537 = arith.divf %535, %536 : vector<2x32xf32>
    %538 = vector.extract_strided_slice %525 {offsets = [0, 64], sizes = [2, 32], strides = [1, 1]} : vector<2x128xf32> to vector<2x32xf32>
    %539 = math.tanh %538 : vector<2x32xf32>
    %540 = vector.extract_strided_slice %525 {offsets = [0, 96], sizes = [2, 32], strides = [1, 1]} : vector<2x128xf32> to vector<2x32xf32>
    %541 = arith.negf %540 : vector<2x32xf32>
    %542 = math.exp %541 : vector<2x32xf32>
    %cst_130 = arith.constant 1.000000e+00 : f32
    %543 = vector.broadcast %cst_130 : f32 to vector<2x32xf32>
    %544 = arith.addf %543, %542 : vector<2x32xf32>
    %545 = arith.divf %543, %544 : vector<2x32xf32>
    %546 = arith.mulf %537, %475 : vector<2x32xf32>
    %547 = arith.mulf %531, %539 : vector<2x32xf32>
    %548 = arith.addf %546, %547 : vector<2x32xf32>
    %549 = math.tanh %548 : vector<2x32xf32>
    %550 = arith.mulf %545, %549 : vector<2x32xf32>
    %cst_131 = arith.constant 2.000000e+00 : f32
    %551 = arith.addf %346, %cst_131 : f32
    %552 = vector.broadcast %551 : f32 to vector<2x1xf32>
    %553 = arith.cmpf ogt, %36, %552 : vector<2x1xf32>
    %554 = arith.extui %553 : vector<2x1xi1> to vector<2x1xi32>
    %555 = arith.sitofp %554 : vector<2x1xi32> to vector<2x1xf32>
    %556 = vector.broadcast %555 : vector<2x1xf32> to vector<2x32xf32>
    %557 = arith.mulf %521, %556 : vector<2x32xf32>
    %558 = arith.addf %485, %557 : vector<2x32xf32>
    %559 = vector.broadcast %551 : f32 to vector<2x1xf32>
    %560 = arith.cmpf ogt, %37, %559 : vector<2x1xf32>
    %561 = arith.extui %560 : vector<2x1xi1> to vector<2x1xi32>
    %562 = arith.sitofp %561 : vector<2x1xi32> to vector<2x1xf32>
    %563 = vector.broadcast %562 : vector<2x1xf32> to vector<2x32xf32>
    %564 = arith.mulf %550, %563 : vector<2x32xf32>
    %565 = arith.addf %492, %564 : vector<2x32xf32>
    %566 = vector.extract_strided_slice %341 {offsets = [6, 0], sizes = [2, 128], strides = [1, 1]} : vector<8x128xf32> to vector<2x128xf32>
    %c0_132 = arith.constant 0 : index
    %c0_133 = arith.constant 0 : index
    %567 = vector.load %arg5[%c0_132, %c0_133] : memref<32x128xf32, #tpu.memory_space<vmem>>, vector<32x128xf32>
    %cst_134 = arith.constant dense<0.000000e+00> : vector<2x128xf32>
    %568 = tpu.matmul %521, %567, %cst_134 {dimension_numbers = #tpu.dot_dimension_numbers<[1], [0], [0], [1], [0, 0, 1, 1], [], []>} : vector<2x32xf32>, vector<32x128xf32>, vector<2x128xf32> -> vector<2x128xf32>
    %569 = arith.addf %566, %568 : vector<2x128xf32>
    %570 = vector.extract_strided_slice %569 {offsets = [0, 0], sizes = [2, 32], strides = [1, 1]} : vector<2x128xf32> to vector<2x32xf32>
    %571 = arith.negf %570 : vector<2x32xf32>
    %572 = math.exp %571 : vector<2x32xf32>
    %cst_135 = arith.constant 1.000000e+00 : f32
    %573 = vector.broadcast %cst_135 : f32 to vector<2x32xf32>
    %574 = arith.addf %573, %572 : vector<2x32xf32>
    %575 = arith.divf %573, %574 : vector<2x32xf32>
    %576 = vector.extract_strided_slice %569 {offsets = [0, 32], sizes = [2, 32], strides = [1, 1]} : vector<2x128xf32> to vector<2x32xf32>
    %577 = arith.negf %576 : vector<2x32xf32>
    %578 = math.exp %577 : vector<2x32xf32>
    %cst_136 = arith.constant 1.000000e+00 : f32
    %579 = vector.broadcast %cst_136 : f32 to vector<2x32xf32>
    %580 = arith.addf %579, %578 : vector<2x32xf32>
    %581 = arith.divf %579, %580 : vector<2x32xf32>
    %582 = vector.extract_strided_slice %569 {offsets = [0, 64], sizes = [2, 32], strides = [1, 1]} : vector<2x128xf32> to vector<2x32xf32>
    %583 = math.tanh %582 : vector<2x32xf32>
    %584 = vector.extract_strided_slice %569 {offsets = [0, 96], sizes = [2, 32], strides = [1, 1]} : vector<2x128xf32> to vector<2x32xf32>
    %585 = arith.negf %584 : vector<2x32xf32>
    %586 = math.exp %585 : vector<2x32xf32>
    %cst_137 = arith.constant 1.000000e+00 : f32
    %587 = vector.broadcast %cst_137 : f32 to vector<2x32xf32>
    %588 = arith.addf %587, %586 : vector<2x32xf32>
    %589 = arith.divf %587, %588 : vector<2x32xf32>
    %590 = arith.mulf %581, %519 : vector<2x32xf32>
    %591 = arith.mulf %575, %583 : vector<2x32xf32>
    %592 = arith.addf %590, %591 : vector<2x32xf32>
    %593 = math.tanh %592 : vector<2x32xf32>
    %594 = arith.mulf %589, %593 : vector<2x32xf32>
    %595 = vector.extract_strided_slice %344 {offsets = [6, 0], sizes = [2, 128], strides = [1, 1]} : vector<8x128xf32> to vector<2x128xf32>
    %c0_138 = arith.constant 0 : index
    %c0_139 = arith.constant 0 : index
    %596 = vector.load %arg8[%c0_138, %c0_139] : memref<32x128xf32, #tpu.memory_space<vmem>>, vector<32x128xf32>
    %cst_140 = arith.constant dense<0.000000e+00> : vector<2x128xf32>
    %597 = tpu.matmul %550, %596, %cst_140 {dimension_numbers = #tpu.dot_dimension_numbers<[1], [0], [0], [1], [0, 0, 1, 1], [], []>} : vector<2x32xf32>, vector<32x128xf32>, vector<2x128xf32> -> vector<2x128xf32>
    %598 = arith.addf %595, %597 : vector<2x128xf32>
    %599 = vector.extract_strided_slice %598 {offsets = [0, 0], sizes = [2, 32], strides = [1, 1]} : vector<2x128xf32> to vector<2x32xf32>
    %600 = arith.negf %599 : vector<2x32xf32>
    %601 = math.exp %600 : vector<2x32xf32>
    %cst_141 = arith.constant 1.000000e+00 : f32
    %602 = vector.broadcast %cst_141 : f32 to vector<2x32xf32>
    %603 = arith.addf %602, %601 : vector<2x32xf32>
    %604 = arith.divf %602, %603 : vector<2x32xf32>
    %605 = vector.extract_strided_slice %598 {offsets = [0, 32], sizes = [2, 32], strides = [1, 1]} : vector<2x128xf32> to vector<2x32xf32>
    %606 = arith.negf %605 : vector<2x32xf32>
    %607 = math.exp %606 : vector<2x32xf32>
    %cst_142 = arith.constant 1.000000e+00 : f32
    %608 = vector.broadcast %cst_142 : f32 to vector<2x32xf32>
    %609 = arith.addf %608, %607 : vector<2x32xf32>
    %610 = arith.divf %608, %609 : vector<2x32xf32>
    %611 = vector.extract_strided_slice %598 {offsets = [0, 64], sizes = [2, 32], strides = [1, 1]} : vector<2x128xf32> to vector<2x32xf32>
    %612 = math.tanh %611 : vector<2x32xf32>
    %613 = vector.extract_strided_slice %598 {offsets = [0, 96], sizes = [2, 32], strides = [1, 1]} : vector<2x128xf32> to vector<2x32xf32>
    %614 = arith.negf %613 : vector<2x32xf32>
    %615 = math.exp %614 : vector<2x32xf32>
    %cst_143 = arith.constant 1.000000e+00 : f32
    %616 = vector.broadcast %cst_143 : f32 to vector<2x32xf32>
    %617 = arith.addf %616, %615 : vector<2x32xf32>
    %618 = arith.divf %616, %617 : vector<2x32xf32>
    %619 = arith.mulf %610, %548 : vector<2x32xf32>
    %620 = arith.mulf %604, %612 : vector<2x32xf32>
    %621 = arith.addf %619, %620 : vector<2x32xf32>
    %622 = math.tanh %621 : vector<2x32xf32>
    %623 = arith.mulf %618, %622 : vector<2x32xf32>
    %cst_144 = arith.constant 3.000000e+00 : f32
    %624 = arith.addf %346, %cst_144 : f32
    %625 = vector.broadcast %624 : f32 to vector<2x1xf32>
    %626 = arith.cmpf ogt, %36, %625 : vector<2x1xf32>
    %627 = arith.extui %626 : vector<2x1xi1> to vector<2x1xi32>
    %628 = arith.sitofp %627 : vector<2x1xi32> to vector<2x1xf32>
    %629 = vector.broadcast %628 : vector<2x1xf32> to vector<2x32xf32>
    %630 = arith.mulf %594, %629 : vector<2x32xf32>
    %631 = arith.addf %558, %630 : vector<2x32xf32>
    %632 = vector.broadcast %624 : f32 to vector<2x1xf32>
    %633 = arith.cmpf ogt, %37, %632 : vector<2x1xf32>
    %634 = arith.extui %633 : vector<2x1xi1> to vector<2x1xi32>
    %635 = arith.sitofp %634 : vector<2x1xi32> to vector<2x1xf32>
    %636 = vector.broadcast %635 : vector<2x1xf32> to vector<2x32xf32>
    %637 = arith.mulf %623, %636 : vector<2x32xf32>
    %638 = arith.addf %565, %637 : vector<2x32xf32>
    %c2_i32 = arith.constant 2 : i32
    %c2_i32_145 = arith.constant 2 : i32
    %639 = arith.index_cast %c2_i32_145 : i32 to index
    %c0_146 = arith.constant 0 : index
    %c0_147 = arith.constant 0 : index
    %640 = vector.load %arg14[%639, %c0_146, %c0_147] : memref<4x8x128xf32, #tpu.memory_space<vmem>>, vector<1x8x128xf32>
    %641 = vector.shape_cast %640 : vector<1x8x128xf32> to vector<8x128xf32>
    %c4_i32_148 = arith.constant 4 : i32
    %642 = arith.muli %c2_i32_145, %c4_i32_148 : i32
    %643 = arith.sitofp %642 : i32 to f32
    %644 = vector.extract_strided_slice %641 {offsets = [0, 0], sizes = [2, 128], strides = [1, 1]} : vector<8x128xf32> to vector<2x128xf32>
    %c0_149 = arith.constant 0 : index
    %c0_150 = arith.constant 0 : index
    %645 = vector.load %arg5[%c0_149, %c0_150] : memref<32x128xf32, #tpu.memory_space<vmem>>, vector<32x128xf32>
    %cst_151 = arith.constant dense<0.000000e+00> : vector<2x128xf32>
    %646 = tpu.matmul %594, %645, %cst_151 {dimension_numbers = #tpu.dot_dimension_numbers<[1], [0], [0], [1], [0, 0, 1, 1], [], []>} : vector<2x32xf32>, vector<32x128xf32>, vector<2x128xf32> -> vector<2x128xf32>
    %647 = arith.addf %644, %646 : vector<2x128xf32>
    %648 = vector.extract_strided_slice %647 {offsets = [0, 0], sizes = [2, 32], strides = [1, 1]} : vector<2x128xf32> to vector<2x32xf32>
    %649 = arith.negf %648 : vector<2x32xf32>
    %650 = math.exp %649 : vector<2x32xf32>
    %cst_152 = arith.constant 1.000000e+00 : f32
    %651 = vector.broadcast %cst_152 : f32 to vector<2x32xf32>
    %652 = arith.addf %651, %650 : vector<2x32xf32>
    %653 = arith.divf %651, %652 : vector<2x32xf32>
    %654 = vector.extract_strided_slice %647 {offsets = [0, 32], sizes = [2, 32], strides = [1, 1]} : vector<2x128xf32> to vector<2x32xf32>
    %655 = arith.negf %654 : vector<2x32xf32>
    %656 = math.exp %655 : vector<2x32xf32>
    %cst_153 = arith.constant 1.000000e+00 : f32
    %657 = vector.broadcast %cst_153 : f32 to vector<2x32xf32>
    %658 = arith.addf %657, %656 : vector<2x32xf32>
    %659 = arith.divf %657, %658 : vector<2x32xf32>
    %660 = vector.extract_strided_slice %647 {offsets = [0, 64], sizes = [2, 32], strides = [1, 1]} : vector<2x128xf32> to vector<2x32xf32>
    %661 = math.tanh %660 : vector<2x32xf32>
    %662 = vector.extract_strided_slice %647 {offsets = [0, 96], sizes = [2, 32], strides = [1, 1]} : vector<2x128xf32> to vector<2x32xf32>
    %663 = arith.negf %662 : vector<2x32xf32>
    %664 = math.exp %663 : vector<2x32xf32>
    %cst_154 = arith.constant 1.000000e+00 : f32
    %665 = vector.broadcast %cst_154 : f32 to vector<2x32xf32>
    %666 = arith.addf %665, %664 : vector<2x32xf32>
    %667 = arith.divf %665, %666 : vector<2x32xf32>
    %668 = arith.mulf %659, %592 : vector<2x32xf32>
    %669 = arith.mulf %653, %661 : vector<2x32xf32>
    %670 = arith.addf %668, %669 : vector<2x32xf32>
    %671 = math.tanh %670 : vector<2x32xf32>
    %672 = arith.mulf %667, %671 : vector<2x32xf32>
    %cst_155 = arith.constant 0.000000e+00 : f32
    %673 = arith.addf %643, %cst_155 : f32
    %674 = vector.broadcast %673 : f32 to vector<2x1xf32>
    %675 = arith.cmpf ogt, %36, %674 : vector<2x1xf32>
    %676 = arith.extui %675 : vector<2x1xi1> to vector<2x1xi32>
    %677 = arith.sitofp %676 : vector<2x1xi32> to vector<2x1xf32>
    %678 = vector.broadcast %677 : vector<2x1xf32> to vector<2x32xf32>
    %679 = arith.mulf %672, %678 : vector<2x32xf32>
    %680 = arith.addf %631, %679 : vector<2x32xf32>
    %681 = vector.extract_strided_slice %641 {offsets = [2, 0], sizes = [2, 128], strides = [1, 1]} : vector<8x128xf32> to vector<2x128xf32>
    %c0_156 = arith.constant 0 : index
    %c0_157 = arith.constant 0 : index
    %682 = vector.load %arg5[%c0_156, %c0_157] : memref<32x128xf32, #tpu.memory_space<vmem>>, vector<32x128xf32>
    %cst_158 = arith.constant dense<0.000000e+00> : vector<2x128xf32>
    %683 = tpu.matmul %672, %682, %cst_158 {dimension_numbers = #tpu.dot_dimension_numbers<[1], [0], [0], [1], [0, 0, 1, 1], [], []>} : vector<2x32xf32>, vector<32x128xf32>, vector<2x128xf32> -> vector<2x128xf32>
    %684 = arith.addf %681, %683 : vector<2x128xf32>
    %685 = vector.extract_strided_slice %684 {offsets = [0, 0], sizes = [2, 32], strides = [1, 1]} : vector<2x128xf32> to vector<2x32xf32>
    %686 = arith.negf %685 : vector<2x32xf32>
    %687 = math.exp %686 : vector<2x32xf32>
    %cst_159 = arith.constant 1.000000e+00 : f32
    %688 = vector.broadcast %cst_159 : f32 to vector<2x32xf32>
    %689 = arith.addf %688, %687 : vector<2x32xf32>
    %690 = arith.divf %688, %689 : vector<2x32xf32>
    %691 = vector.extract_strided_slice %684 {offsets = [0, 32], sizes = [2, 32], strides = [1, 1]} : vector<2x128xf32> to vector<2x32xf32>
    %692 = arith.negf %691 : vector<2x32xf32>
    %693 = math.exp %692 : vector<2x32xf32>
    %cst_160 = arith.constant 1.000000e+00 : f32
    %694 = vector.broadcast %cst_160 : f32 to vector<2x32xf32>
    %695 = arith.addf %694, %693 : vector<2x32xf32>
    %696 = arith.divf %694, %695 : vector<2x32xf32>
    %697 = vector.extract_strided_slice %684 {offsets = [0, 64], sizes = [2, 32], strides = [1, 1]} : vector<2x128xf32> to vector<2x32xf32>
    %698 = math.tanh %697 : vector<2x32xf32>
    %699 = vector.extract_strided_slice %684 {offsets = [0, 96], sizes = [2, 32], strides = [1, 1]} : vector<2x128xf32> to vector<2x32xf32>
    %700 = arith.negf %699 : vector<2x32xf32>
    %701 = math.exp %700 : vector<2x32xf32>
    %cst_161 = arith.constant 1.000000e+00 : f32
    %702 = vector.broadcast %cst_161 : f32 to vector<2x32xf32>
    %703 = arith.addf %702, %701 : vector<2x32xf32>
    %704 = arith.divf %702, %703 : vector<2x32xf32>
    %705 = arith.mulf %696, %670 : vector<2x32xf32>
    %706 = arith.mulf %690, %698 : vector<2x32xf32>
    %707 = arith.addf %705, %706 : vector<2x32xf32>
    %708 = math.tanh %707 : vector<2x32xf32>
    %709 = arith.mulf %704, %708 : vector<2x32xf32>
    %cst_162 = arith.constant 1.000000e+00 : f32
    %710 = arith.addf %643, %cst_162 : f32
    %711 = vector.broadcast %710 : f32 to vector<2x1xf32>
    %712 = arith.cmpf ogt, %36, %711 : vector<2x1xf32>
    %713 = arith.extui %712 : vector<2x1xi1> to vector<2x1xi32>
    %714 = arith.sitofp %713 : vector<2x1xi32> to vector<2x1xf32>
    %715 = vector.broadcast %714 : vector<2x1xf32> to vector<2x32xf32>
    %716 = arith.mulf %709, %715 : vector<2x32xf32>
    %717 = arith.addf %680, %716 : vector<2x32xf32>
    %718 = vector.extract_strided_slice %641 {offsets = [4, 0], sizes = [2, 128], strides = [1, 1]} : vector<8x128xf32> to vector<2x128xf32>
    %c0_163 = arith.constant 0 : index
    %c0_164 = arith.constant 0 : index
    %719 = vector.load %arg5[%c0_163, %c0_164] : memref<32x128xf32, #tpu.memory_space<vmem>>, vector<32x128xf32>
    %cst_165 = arith.constant dense<0.000000e+00> : vector<2x128xf32>
    %720 = tpu.matmul %709, %719, %cst_165 {dimension_numbers = #tpu.dot_dimension_numbers<[1], [0], [0], [1], [0, 0, 1, 1], [], []>} : vector<2x32xf32>, vector<32x128xf32>, vector<2x128xf32> -> vector<2x128xf32>
    %721 = arith.addf %718, %720 : vector<2x128xf32>
    %722 = vector.extract_strided_slice %721 {offsets = [0, 0], sizes = [2, 32], strides = [1, 1]} : vector<2x128xf32> to vector<2x32xf32>
    %723 = arith.negf %722 : vector<2x32xf32>
    %724 = math.exp %723 : vector<2x32xf32>
    %cst_166 = arith.constant 1.000000e+00 : f32
    %725 = vector.broadcast %cst_166 : f32 to vector<2x32xf32>
    %726 = arith.addf %725, %724 : vector<2x32xf32>
    %727 = arith.divf %725, %726 : vector<2x32xf32>
    %728 = vector.extract_strided_slice %721 {offsets = [0, 32], sizes = [2, 32], strides = [1, 1]} : vector<2x128xf32> to vector<2x32xf32>
    %729 = arith.negf %728 : vector<2x32xf32>
    %730 = math.exp %729 : vector<2x32xf32>
    %cst_167 = arith.constant 1.000000e+00 : f32
    %731 = vector.broadcast %cst_167 : f32 to vector<2x32xf32>
    %732 = arith.addf %731, %730 : vector<2x32xf32>
    %733 = arith.divf %731, %732 : vector<2x32xf32>
    %734 = vector.extract_strided_slice %721 {offsets = [0, 64], sizes = [2, 32], strides = [1, 1]} : vector<2x128xf32> to vector<2x32xf32>
    %735 = math.tanh %734 : vector<2x32xf32>
    %736 = vector.extract_strided_slice %721 {offsets = [0, 96], sizes = [2, 32], strides = [1, 1]} : vector<2x128xf32> to vector<2x32xf32>
    %737 = arith.negf %736 : vector<2x32xf32>
    %738 = math.exp %737 : vector<2x32xf32>
    %cst_168 = arith.constant 1.000000e+00 : f32
    %739 = vector.broadcast %cst_168 : f32 to vector<2x32xf32>
    %740 = arith.addf %739, %738 : vector<2x32xf32>
    %741 = arith.divf %739, %740 : vector<2x32xf32>
    %742 = arith.mulf %733, %707 : vector<2x32xf32>
    %743 = arith.mulf %727, %735 : vector<2x32xf32>
    %744 = arith.addf %742, %743 : vector<2x32xf32>
    %745 = math.tanh %744 : vector<2x32xf32>
    %746 = arith.mulf %741, %745 : vector<2x32xf32>
    %cst_169 = arith.constant 2.000000e+00 : f32
    %747 = arith.addf %643, %cst_169 : f32
    %748 = vector.broadcast %747 : f32 to vector<2x1xf32>
    %749 = arith.cmpf ogt, %36, %748 : vector<2x1xf32>
    %750 = arith.extui %749 : vector<2x1xi1> to vector<2x1xi32>
    %751 = arith.sitofp %750 : vector<2x1xi32> to vector<2x1xf32>
    %752 = vector.broadcast %751 : vector<2x1xf32> to vector<2x32xf32>
    %753 = arith.mulf %746, %752 : vector<2x32xf32>
    %754 = arith.addf %717, %753 : vector<2x32xf32>
    %755 = vector.extract_strided_slice %641 {offsets = [6, 0], sizes = [2, 128], strides = [1, 1]} : vector<8x128xf32> to vector<2x128xf32>
    %c0_170 = arith.constant 0 : index
    %c0_171 = arith.constant 0 : index
    %756 = vector.load %arg5[%c0_170, %c0_171] : memref<32x128xf32, #tpu.memory_space<vmem>>, vector<32x128xf32>
    %cst_172 = arith.constant dense<0.000000e+00> : vector<2x128xf32>
    %757 = tpu.matmul %746, %756, %cst_172 {dimension_numbers = #tpu.dot_dimension_numbers<[1], [0], [0], [1], [0, 0, 1, 1], [], []>} : vector<2x32xf32>, vector<32x128xf32>, vector<2x128xf32> -> vector<2x128xf32>
    %758 = arith.addf %755, %757 : vector<2x128xf32>
    %759 = vector.extract_strided_slice %758 {offsets = [0, 0], sizes = [2, 32], strides = [1, 1]} : vector<2x128xf32> to vector<2x32xf32>
    %760 = arith.negf %759 : vector<2x32xf32>
    %761 = math.exp %760 : vector<2x32xf32>
    %cst_173 = arith.constant 1.000000e+00 : f32
    %762 = vector.broadcast %cst_173 : f32 to vector<2x32xf32>
    %763 = arith.addf %762, %761 : vector<2x32xf32>
    %764 = arith.divf %762, %763 : vector<2x32xf32>
    %765 = vector.extract_strided_slice %758 {offsets = [0, 32], sizes = [2, 32], strides = [1, 1]} : vector<2x128xf32> to vector<2x32xf32>
    %766 = arith.negf %765 : vector<2x32xf32>
    %767 = math.exp %766 : vector<2x32xf32>
    %cst_174 = arith.constant 1.000000e+00 : f32
    %768 = vector.broadcast %cst_174 : f32 to vector<2x32xf32>
    %769 = arith.addf %768, %767 : vector<2x32xf32>
    %770 = arith.divf %768, %769 : vector<2x32xf32>
    %771 = vector.extract_strided_slice %758 {offsets = [0, 64], sizes = [2, 32], strides = [1, 1]} : vector<2x128xf32> to vector<2x32xf32>
    %772 = math.tanh %771 : vector<2x32xf32>
    %773 = vector.extract_strided_slice %758 {offsets = [0, 96], sizes = [2, 32], strides = [1, 1]} : vector<2x128xf32> to vector<2x32xf32>
    %774 = arith.negf %773 : vector<2x32xf32>
    %775 = math.exp %774 : vector<2x32xf32>
    %cst_175 = arith.constant 1.000000e+00 : f32
    %776 = vector.broadcast %cst_175 : f32 to vector<2x32xf32>
    %777 = arith.addf %776, %775 : vector<2x32xf32>
    %778 = arith.divf %776, %777 : vector<2x32xf32>
    %779 = arith.mulf %770, %744 : vector<2x32xf32>
    %780 = arith.mulf %764, %772 : vector<2x32xf32>
    %781 = arith.addf %779, %780 : vector<2x32xf32>
    %782 = math.tanh %781 : vector<2x32xf32>
    %783 = arith.mulf %778, %782 : vector<2x32xf32>
    %cst_176 = arith.constant 3.000000e+00 : f32
    %784 = arith.addf %643, %cst_176 : f32
    %785 = vector.broadcast %784 : f32 to vector<2x1xf32>
    %786 = arith.cmpf ogt, %36, %785 : vector<2x1xf32>
    %787 = arith.extui %786 : vector<2x1xi1> to vector<2x1xi32>
    %788 = arith.sitofp %787 : vector<2x1xi32> to vector<2x1xf32>
    %789 = vector.broadcast %788 : vector<2x1xf32> to vector<2x32xf32>
    %790 = arith.mulf %783, %789 : vector<2x32xf32>
    %791 = arith.addf %754, %790 : vector<2x32xf32>
    %c3_i32 = arith.constant 3 : i32
    %792 = arith.index_cast %c3_i32 : i32 to index
    %c0_177 = arith.constant 0 : index
    %c0_178 = arith.constant 0 : index
    %793 = vector.load %arg14[%792, %c0_177, %c0_178] : memref<4x8x128xf32, #tpu.memory_space<vmem>>, vector<1x8x128xf32>
    %794 = vector.shape_cast %793 : vector<1x8x128xf32> to vector<8x128xf32>
    %c4_i32_179 = arith.constant 4 : i32
    %795 = arith.muli %c3_i32, %c4_i32_179 : i32
    %796 = arith.sitofp %795 : i32 to f32
    %797 = vector.extract_strided_slice %794 {offsets = [0, 0], sizes = [2, 128], strides = [1, 1]} : vector<8x128xf32> to vector<2x128xf32>
    %c0_180 = arith.constant 0 : index
    %c0_181 = arith.constant 0 : index
    %798 = vector.load %arg5[%c0_180, %c0_181] : memref<32x128xf32, #tpu.memory_space<vmem>>, vector<32x128xf32>
    %cst_182 = arith.constant dense<0.000000e+00> : vector<2x128xf32>
    %799 = tpu.matmul %783, %798, %cst_182 {dimension_numbers = #tpu.dot_dimension_numbers<[1], [0], [0], [1], [0, 0, 1, 1], [], []>} : vector<2x32xf32>, vector<32x128xf32>, vector<2x128xf32> -> vector<2x128xf32>
    %800 = arith.addf %797, %799 : vector<2x128xf32>
    %801 = vector.extract_strided_slice %800 {offsets = [0, 0], sizes = [2, 32], strides = [1, 1]} : vector<2x128xf32> to vector<2x32xf32>
    %802 = arith.negf %801 : vector<2x32xf32>
    %803 = math.exp %802 : vector<2x32xf32>
    %cst_183 = arith.constant 1.000000e+00 : f32
    %804 = vector.broadcast %cst_183 : f32 to vector<2x32xf32>
    %805 = arith.addf %804, %803 : vector<2x32xf32>
    %806 = arith.divf %804, %805 : vector<2x32xf32>
    %807 = vector.extract_strided_slice %800 {offsets = [0, 32], sizes = [2, 32], strides = [1, 1]} : vector<2x128xf32> to vector<2x32xf32>
    %808 = arith.negf %807 : vector<2x32xf32>
    %809 = math.exp %808 : vector<2x32xf32>
    %cst_184 = arith.constant 1.000000e+00 : f32
    %810 = vector.broadcast %cst_184 : f32 to vector<2x32xf32>
    %811 = arith.addf %810, %809 : vector<2x32xf32>
    %812 = arith.divf %810, %811 : vector<2x32xf32>
    %813 = vector.extract_strided_slice %800 {offsets = [0, 64], sizes = [2, 32], strides = [1, 1]} : vector<2x128xf32> to vector<2x32xf32>
    %814 = math.tanh %813 : vector<2x32xf32>
    %815 = vector.extract_strided_slice %800 {offsets = [0, 96], sizes = [2, 32], strides = [1, 1]} : vector<2x128xf32> to vector<2x32xf32>
    %816 = arith.negf %815 : vector<2x32xf32>
    %817 = math.exp %816 : vector<2x32xf32>
    %cst_185 = arith.constant 1.000000e+00 : f32
    %818 = vector.broadcast %cst_185 : f32 to vector<2x32xf32>
    %819 = arith.addf %818, %817 : vector<2x32xf32>
    %820 = arith.divf %818, %819 : vector<2x32xf32>
    %821 = arith.mulf %812, %781 : vector<2x32xf32>
    %822 = arith.mulf %806, %814 : vector<2x32xf32>
    %823 = arith.addf %821, %822 : vector<2x32xf32>
    %824 = math.tanh %823 : vector<2x32xf32>
    %825 = arith.mulf %820, %824 : vector<2x32xf32>
    %cst_186 = arith.constant 0.000000e+00 : f32
    %826 = arith.addf %796, %cst_186 : f32
    %827 = vector.broadcast %826 : f32 to vector<2x1xf32>
    %828 = arith.cmpf ogt, %36, %827 : vector<2x1xf32>
    %829 = arith.extui %828 : vector<2x1xi1> to vector<2x1xi32>
    %830 = arith.sitofp %829 : vector<2x1xi32> to vector<2x1xf32>
    %831 = vector.broadcast %830 : vector<2x1xf32> to vector<2x32xf32>
    %832 = arith.mulf %825, %831 : vector<2x32xf32>
    %833 = arith.addf %791, %832 : vector<2x32xf32>
    %834 = vector.extract_strided_slice %794 {offsets = [2, 0], sizes = [2, 128], strides = [1, 1]} : vector<8x128xf32> to vector<2x128xf32>
    %c0_187 = arith.constant 0 : index
    %c0_188 = arith.constant 0 : index
    %835 = vector.load %arg5[%c0_187, %c0_188] : memref<32x128xf32, #tpu.memory_space<vmem>>, vector<32x128xf32>
    %cst_189 = arith.constant dense<0.000000e+00> : vector<2x128xf32>
    %836 = tpu.matmul %825, %835, %cst_189 {dimension_numbers = #tpu.dot_dimension_numbers<[1], [0], [0], [1], [0, 0, 1, 1], [], []>} : vector<2x32xf32>, vector<32x128xf32>, vector<2x128xf32> -> vector<2x128xf32>
    %837 = arith.addf %834, %836 : vector<2x128xf32>
    %838 = vector.extract_strided_slice %837 {offsets = [0, 0], sizes = [2, 32], strides = [1, 1]} : vector<2x128xf32> to vector<2x32xf32>
    %839 = arith.negf %838 : vector<2x32xf32>
    %840 = math.exp %839 : vector<2x32xf32>
    %cst_190 = arith.constant 1.000000e+00 : f32
    %841 = vector.broadcast %cst_190 : f32 to vector<2x32xf32>
    %842 = arith.addf %841, %840 : vector<2x32xf32>
    %843 = arith.divf %841, %842 : vector<2x32xf32>
    %844 = vector.extract_strided_slice %837 {offsets = [0, 32], sizes = [2, 32], strides = [1, 1]} : vector<2x128xf32> to vector<2x32xf32>
    %845 = arith.negf %844 : vector<2x32xf32>
    %846 = math.exp %845 : vector<2x32xf32>
    %cst_191 = arith.constant 1.000000e+00 : f32
    %847 = vector.broadcast %cst_191 : f32 to vector<2x32xf32>
    %848 = arith.addf %847, %846 : vector<2x32xf32>
    %849 = arith.divf %847, %848 : vector<2x32xf32>
    %850 = vector.extract_strided_slice %837 {offsets = [0, 64], sizes = [2, 32], strides = [1, 1]} : vector<2x128xf32> to vector<2x32xf32>
    %851 = math.tanh %850 : vector<2x32xf32>
    %852 = vector.extract_strided_slice %837 {offsets = [0, 96], sizes = [2, 32], strides = [1, 1]} : vector<2x128xf32> to vector<2x32xf32>
    %853 = arith.negf %852 : vector<2x32xf32>
    %854 = math.exp %853 : vector<2x32xf32>
    %cst_192 = arith.constant 1.000000e+00 : f32
    %855 = vector.broadcast %cst_192 : f32 to vector<2x32xf32>
    %856 = arith.addf %855, %854 : vector<2x32xf32>
    %857 = arith.divf %855, %856 : vector<2x32xf32>
    %858 = arith.mulf %849, %823 : vector<2x32xf32>
    %859 = arith.mulf %843, %851 : vector<2x32xf32>
    %860 = arith.addf %858, %859 : vector<2x32xf32>
    %861 = math.tanh %860 : vector<2x32xf32>
    %862 = arith.mulf %857, %861 : vector<2x32xf32>
    %cst_193 = arith.constant 1.000000e+00 : f32
    %863 = arith.addf %796, %cst_193 : f32
    %864 = vector.broadcast %863 : f32 to vector<2x1xf32>
    %865 = arith.cmpf ogt, %36, %864 : vector<2x1xf32>
    %866 = arith.extui %865 : vector<2x1xi1> to vector<2x1xi32>
    %867 = arith.sitofp %866 : vector<2x1xi32> to vector<2x1xf32>
    %868 = vector.broadcast %867 : vector<2x1xf32> to vector<2x32xf32>
    %869 = arith.mulf %862, %868 : vector<2x32xf32>
    %870 = arith.addf %833, %869 : vector<2x32xf32>
    %871 = vector.extract_strided_slice %794 {offsets = [4, 0], sizes = [2, 128], strides = [1, 1]} : vector<8x128xf32> to vector<2x128xf32>
    %c0_194 = arith.constant 0 : index
    %c0_195 = arith.constant 0 : index
    %872 = vector.load %arg5[%c0_194, %c0_195] : memref<32x128xf32, #tpu.memory_space<vmem>>, vector<32x128xf32>
    %cst_196 = arith.constant dense<0.000000e+00> : vector<2x128xf32>
    %873 = tpu.matmul %862, %872, %cst_196 {dimension_numbers = #tpu.dot_dimension_numbers<[1], [0], [0], [1], [0, 0, 1, 1], [], []>} : vector<2x32xf32>, vector<32x128xf32>, vector<2x128xf32> -> vector<2x128xf32>
    %874 = arith.addf %871, %873 : vector<2x128xf32>
    %875 = vector.extract_strided_slice %874 {offsets = [0, 0], sizes = [2, 32], strides = [1, 1]} : vector<2x128xf32> to vector<2x32xf32>
    %876 = arith.negf %875 : vector<2x32xf32>
    %877 = math.exp %876 : vector<2x32xf32>
    %cst_197 = arith.constant 1.000000e+00 : f32
    %878 = vector.broadcast %cst_197 : f32 to vector<2x32xf32>
    %879 = arith.addf %878, %877 : vector<2x32xf32>
    %880 = arith.divf %878, %879 : vector<2x32xf32>
    %881 = vector.extract_strided_slice %874 {offsets = [0, 32], sizes = [2, 32], strides = [1, 1]} : vector<2x128xf32> to vector<2x32xf32>
    %882 = arith.negf %881 : vector<2x32xf32>
    %883 = math.exp %882 : vector<2x32xf32>
    %cst_198 = arith.constant 1.000000e+00 : f32
    %884 = vector.broadcast %cst_198 : f32 to vector<2x32xf32>
    %885 = arith.addf %884, %883 : vector<2x32xf32>
    %886 = arith.divf %884, %885 : vector<2x32xf32>
    %887 = vector.extract_strided_slice %874 {offsets = [0, 64], sizes = [2, 32], strides = [1, 1]} : vector<2x128xf32> to vector<2x32xf32>
    %888 = math.tanh %887 : vector<2x32xf32>
    %889 = vector.extract_strided_slice %874 {offsets = [0, 96], sizes = [2, 32], strides = [1, 1]} : vector<2x128xf32> to vector<2x32xf32>
    %890 = arith.negf %889 : vector<2x32xf32>
    %891 = math.exp %890 : vector<2x32xf32>
    %cst_199 = arith.constant 1.000000e+00 : f32
    %892 = vector.broadcast %cst_199 : f32 to vector<2x32xf32>
    %893 = arith.addf %892, %891 : vector<2x32xf32>
    %894 = arith.divf %892, %893 : vector<2x32xf32>
    %895 = arith.mulf %886, %860 : vector<2x32xf32>
    %896 = arith.mulf %880, %888 : vector<2x32xf32>
    %897 = arith.addf %895, %896 : vector<2x32xf32>
    %898 = math.tanh %897 : vector<2x32xf32>
    %899 = arith.mulf %894, %898 : vector<2x32xf32>
    %cst_200 = arith.constant 2.000000e+00 : f32
    %900 = arith.addf %796, %cst_200 : f32
    %901 = vector.broadcast %900 : f32 to vector<2x1xf32>
    %902 = arith.cmpf ogt, %36, %901 : vector<2x1xf32>
    %903 = arith.extui %902 : vector<2x1xi1> to vector<2x1xi32>
    %904 = arith.sitofp %903 : vector<2x1xi32> to vector<2x1xf32>
    %905 = vector.broadcast %904 : vector<2x1xf32> to vector<2x32xf32>
    %906 = arith.mulf %899, %905 : vector<2x32xf32>
    %907 = arith.addf %870, %906 : vector<2x32xf32>
    %908 = vector.extract_strided_slice %794 {offsets = [6, 0], sizes = [2, 128], strides = [1, 1]} : vector<8x128xf32> to vector<2x128xf32>
    %c0_201 = arith.constant 0 : index
    %c0_202 = arith.constant 0 : index
    %909 = vector.load %arg5[%c0_201, %c0_202] : memref<32x128xf32, #tpu.memory_space<vmem>>, vector<32x128xf32>
    %cst_203 = arith.constant dense<0.000000e+00> : vector<2x128xf32>
    %910 = tpu.matmul %899, %909, %cst_203 {dimension_numbers = #tpu.dot_dimension_numbers<[1], [0], [0], [1], [0, 0, 1, 1], [], []>} : vector<2x32xf32>, vector<32x128xf32>, vector<2x128xf32> -> vector<2x128xf32>
    %911 = arith.addf %908, %910 : vector<2x128xf32>
    %912 = vector.extract_strided_slice %911 {offsets = [0, 0], sizes = [2, 32], strides = [1, 1]} : vector<2x128xf32> to vector<2x32xf32>
    %913 = arith.negf %912 : vector<2x32xf32>
    %914 = math.exp %913 : vector<2x32xf32>
    %cst_204 = arith.constant 1.000000e+00 : f32
    %915 = vector.broadcast %cst_204 : f32 to vector<2x32xf32>
    %916 = arith.addf %915, %914 : vector<2x32xf32>
    %917 = arith.divf %915, %916 : vector<2x32xf32>
    %918 = vector.extract_strided_slice %911 {offsets = [0, 32], sizes = [2, 32], strides = [1, 1]} : vector<2x128xf32> to vector<2x32xf32>
    %919 = arith.negf %918 : vector<2x32xf32>
    %920 = math.exp %919 : vector<2x32xf32>
    %cst_205 = arith.constant 1.000000e+00 : f32
    %921 = vector.broadcast %cst_205 : f32 to vector<2x32xf32>
    %922 = arith.addf %921, %920 : vector<2x32xf32>
    %923 = arith.divf %921, %922 : vector<2x32xf32>
    %924 = vector.extract_strided_slice %911 {offsets = [0, 64], sizes = [2, 32], strides = [1, 1]} : vector<2x128xf32> to vector<2x32xf32>
    %925 = math.tanh %924 : vector<2x32xf32>
    %926 = vector.extract_strided_slice %911 {offsets = [0, 96], sizes = [2, 32], strides = [1, 1]} : vector<2x128xf32> to vector<2x32xf32>
    %927 = arith.negf %926 : vector<2x32xf32>
    %928 = math.exp %927 : vector<2x32xf32>
    %cst_206 = arith.constant 1.000000e+00 : f32
    %929 = vector.broadcast %cst_206 : f32 to vector<2x32xf32>
    %930 = arith.addf %929, %928 : vector<2x32xf32>
    %931 = arith.divf %929, %930 : vector<2x32xf32>
    %932 = arith.mulf %923, %897 : vector<2x32xf32>
    %933 = arith.mulf %917, %925 : vector<2x32xf32>
    %934 = arith.addf %932, %933 : vector<2x32xf32>
    %935 = math.tanh %934 : vector<2x32xf32>
    %936 = arith.mulf %931, %935 : vector<2x32xf32>
    %cst_207 = arith.constant 3.000000e+00 : f32
    %937 = arith.addf %796, %cst_207 : f32
    %938 = vector.broadcast %937 : f32 to vector<2x1xf32>
    %939 = arith.cmpf ogt, %36, %938 : vector<2x1xf32>
    %940 = arith.extui %939 : vector<2x1xi1> to vector<2x1xi32>
    %941 = arith.sitofp %940 : vector<2x1xi32> to vector<2x1xf32>
    %942 = vector.broadcast %941 : vector<2x1xf32> to vector<2x32xf32>
    %943 = arith.mulf %936, %942 : vector<2x32xf32>
    %944 = arith.addf %907, %943 : vector<2x32xf32>
    %c2_i32_208 = arith.constant 2 : i32
    %cst_209 = arith.constant 1.000000e+00 : f32
    %945 = vector.broadcast %cst_209 : f32 to vector<2x1xf32>
    %946 = arith.maximumf %36, %945 : vector<2x1xf32>
    %947 = vector.broadcast %946 : vector<2x1xf32> to vector<2x32xf32>
    %948 = arith.divf %944, %947 : vector<2x32xf32>
    %cst_210 = arith.constant 1.000000e+00 : f32
    %949 = vector.broadcast %cst_210 : f32 to vector<2x1xf32>
    %950 = arith.maximumf %37, %949 : vector<2x1xf32>
    %951 = vector.broadcast %950 : vector<2x1xf32> to vector<2x32xf32>
    %952 = arith.divf %638, %951 : vector<2x32xf32>
    %c0_211 = arith.constant 0 : index
    %c0_212 = arith.constant 0 : index
    %953 = vector.load %arg10[%c0_211, %c0_212] : memref<32x3xf32, #tpu.memory_space<vmem>>, vector<32x3xf32>
    %cst_213 = arith.constant dense<0.000000e+00> : vector<2x3xf32>
    %954 = tpu.matmul %952, %953, %cst_213 {dimension_numbers = #tpu.dot_dimension_numbers<[1], [0], [0], [1], [0, 0, 1, 1], [], []>} : vector<2x32xf32>, vector<32x3xf32>, vector<2x3xf32> -> vector<2x3xf32>
    %c0_214 = arith.constant 0 : index
    %c0_215 = arith.constant 0 : index
    %955 = vector.load %arg11[%c0_214, %c0_215] : memref<32x3xf32, #tpu.memory_space<vmem>>, vector<32x3xf32>
    %cst_216 = arith.constant dense<0.000000e+00> : vector<2x3xf32>
    %956 = tpu.matmul %948, %955, %cst_216 {dimension_numbers = #tpu.dot_dimension_numbers<[1], [0], [0], [1], [0, 0, 1, 1], [], []>} : vector<2x32xf32>, vector<32x3xf32>, vector<2x3xf32> -> vector<2x3xf32>
    %957 = arith.addf %954, %956 : vector<2x3xf32>
    %c0_217 = arith.constant 0 : index
    %c0_218 = arith.constant 0 : index
    %958 = vector.load %arg12[%c0_217, %c0_218] : memref<1x3xf32, #tpu.memory_space<vmem>>, vector<1x3xf32>
    %959 = vector.broadcast %958 : vector<1x3xf32> to vector<2x3xf32>
    %960 = arith.addf %957, %959 : vector<2x3xf32>
    %cst_219 = arith.constant dense<0xFF800000> : vector<2xf32>
    %961 = vector.multi_reduction <maximumf>, %960, %cst_219 [1] : vector<2x3xf32> to vector<2xf32>
    %962 = vector.shape_cast %961 : vector<2xf32> to vector<2x1xf32>
    %963 = vector.broadcast %962 : vector<2x1xf32> to vector<2x3xf32>
    %964 = arith.subf %960, %963 : vector<2x3xf32>
    %965 = math.exp %964 : vector<2x3xf32>
    %cst_220 = arith.constant dense<0.000000e+00> : vector<2xf32>
    %966 = vector.multi_reduction <add>, %965, %cst_220 [1] : vector<2x3xf32> to vector<2xf32>
    %967 = vector.shape_cast %966 : vector<2xf32> to vector<2x1xf32>
    %968 = vector.broadcast %967 : vector<2x1xf32> to vector<2x3xf32>
    %969 = arith.divf %965, %968 : vector<2x3xf32>
    %c0_221 = arith.constant 0 : index
    %c0_222 = arith.constant 0 : index
    %970 = vector.load %arg13[%c0_221, %c0_222] : memref<2x3xf32, #tpu.memory_space<vmem>>, vector<2x3xf32>
    tpu.vector_store %arg13[%c0_221, %c0_222], %969 {strides = array<i32>} : memref<2x3xf32, #tpu.memory_space<vmem>>, vector<2x3xf32>,
    return
  }
}

</mosaic_0001>

<llo_original>
// kernel: ian_forward.1
$region0: #{ian_forward.1}
  #allocation0 [shape = 'u32[]', space=smem, size = 0x4, offset = 0x4, fixed_abs, tag = 'smem constant byte address 0x4 - core index']
  #allocation1 [shape = 'u32[144,128]{1,0:T(1,128)}', space=vmem, size = 0x12000, scoped, tag = 'internal scratch']
  #allocation2 [shape = 'f32[4,8,128]{2,1,0:T(8,128)}', space=vmem, size = 0x4000, scoped, tag = 'scratch operand']
  #allocation3 [shape = 'f32[2,8,128]{2,1,0:T(8,128)}', space=vmem, size = 0x2000, scoped, tag = 'scratch operand']
  %s0 = inlined_call_operand.vmem [shape: f32[32,32], index: 0, kind: input, shape index: {}]
  %s1 = inlined_call_operand.vmem [shape: f32[16,32], index: 1, kind: input, shape index: {}]
  %s2 = inlined_call_operand.vmem [shape: f32[2,1], index: 2, kind: input, shape index: {}]
  %s3 = inlined_call_operand.vmem [shape: f32[2,1], index: 3, kind: input, shape index: {}]
  %s4 = inlined_call_operand.vmem [shape: f32[32,128], index: 4, kind: input, shape index: {}]
  %s5 = inlined_call_operand.vmem [shape: f32[32,128], index: 5, kind: input, shape index: {}]
  %s6 = inlined_call_operand.vmem [shape: f32[1,128], index: 6, kind: input, shape index: {}]
  %s7 = inlined_call_operand.vmem [shape: f32[32,128], index: 7, kind: input, shape index: {}]
  %s8 = inlined_call_operand.vmem [shape: f32[32,128], index: 8, kind: input, shape index: {}]
  %s9 = inlined_call_operand.vmem [shape: f32[1,128], index: 9, kind: input, shape index: {}]
  %s10 = inlined_call_operand.vmem [shape: f32[32,3], index: 10, kind: input, shape index: {}]
  %s11 = inlined_call_operand.vmem [shape: f32[32,3], index: 11, kind: input, shape index: {}]
  %s12 = inlined_call_operand.vmem [shape: f32[1,3], index: 12, kind: input, shape index: {}]
  %s13 = inlined_call_operand.hbm [shape: f32[2,3], index: 13, kind: output, shape index: {}]
  %s14 = sld [smem:[#allocation0]]
  $region62: #{ian_forward.1} parent=0
    _
  %s16 = ssub.s32 1, %s14
  %s17 = scalar_select 0, %s16, %s14
  $region1: #{ian_forward.1} parent=0
    #allocation4 [shape = 'u8[1024]{0}', space=vmem, size = 0x400, scoped, tag = 'output window, operand 0, single buffered']
    #allocation5 [shape = 's32[1]{0}', space=sflag, size = 0x4, scoped, tag = 'scoped memory for ian_forward.1']
    %18 = vsyncpa [#allocation5], 0
    // Predicated region
    $region2: #{ian_forward.1} parent=1 // pred_check
      _
    $region3: #{ian_forward.1} parent=1 // pred_check_branch
      %20 = sbr.rel (0) target = $region5
    $region4: #{ian_forward.1} parent=1 // pred_region
      _
    $region5: #{ian_forward.1} parent=1 // pred_fallthru
      _
    // Predicated region
    $region6: #{ian_forward.1} parent=1 // pred_check
      _
    $region7: #{ian_forward.1} parent=1 // pred_check_branch
      %22 = sbr.rel (0) target = $region9
    $region8: #{ian_forward.1} parent=1 // pred_region
      _
    $region9: #{ian_forward.1} parent=1 // pred_fallthru
      _
    // Predicated region
    $region10: #{ian_forward.1} parent=1 // pred_check
      _
    $region11: #{ian_forward.1} parent=1 // pred_check_branch
      %24 = sbr.rel (0) target = $region13
    $region12: #{ian_forward.1} parent=1 // pred_region
      _
    $region13: #{ian_forward.1} parent=1 // pred_fallthru
      _
    // Predicated region
    $region14: #{ian_forward.1} parent=1 // pred_check
      _
    $region15: #{ian_forward.1} parent=1 // pred_check_branch
      %26 = sbr.rel (0) target = $region17
    $region16: #{ian_forward.1} parent=1 // pred_region
      _
    $region17: #{ian_forward.1} parent=1 // pred_fallthru
      _
    // Predicated region
    $region18: #{ian_forward.1} parent=1 // pred_check
      _
    $region19: #{ian_forward.1} parent=1 // pred_check_branch
      %28 = sbr.rel (0) target = $region21
    $region20: #{ian_forward.1} parent=1 // pred_region
      _
    $region21: #{ian_forward.1} parent=1 // pred_fallthru
      _
    // Predicated region
    $region22: #{ian_forward.1} parent=1 // pred_check
      _
    $region23: #{ian_forward.1} parent=1 // pred_check_branch
      %30 = sbr.rel (0) target = $region25
    $region24: #{ian_forward.1} parent=1 // pred_region
      _
    $region25: #{ian_forward.1} parent=1 // pred_fallthru
      _
    // Predicated region
    $region26: #{ian_forward.1} parent=1 // pred_check
      _
    $region27: #{ian_forward.1} parent=1 // pred_check_branch
      %32 = sbr.rel (0) target = $region29
    $region28: #{ian_forward.1} parent=1 // pred_region
      _
    $region29: #{ian_forward.1} parent=1 // pred_fallthru
      _
    // Predicated region
    $region30: #{ian_forward.1} parent=1 // pred_check
      _
    $region31: #{ian_forward.1} parent=1 // pred_check_branch
      %34 = sbr.rel (0) target = $region33
    $region32: #{ian_forward.1} parent=1 // pred_region
      _
    $region33: #{ian_forward.1} parent=1 // pred_fallthru
      _
    // Predicated region
    $region34: #{ian_forward.1} parent=1 // pred_check
      _
    $region35: #{ian_forward.1} parent=1 // pred_check_branch
      %36 = sbr.rel (0) target = $region37
    $region36: #{ian_forward.1} parent=1 // pred_region
      _
    $region37: #{ian_forward.1} parent=1 // pred_fallthru
      _
    // Predicated region
    $region38: #{ian_forward.1} parent=1 // pred_check
      _
    $region39: #{ian_forward.1} parent=1 // pred_check_branch
      %38 = sbr.rel (0) target = $region41
    $region40: #{ian_forward.1} parent=1 // pred_region
      _
    $region41: #{ian_forward.1} parent=1 // pred_fallthru
      _
    // Predicated region
    $region42: #{ian_forward.1} parent=1 // pred_check
      _
    $region43: #{ian_forward.1} parent=1 // pred_check_branch
      %40 = sbr.rel (0) target = $region45
    $region44: #{ian_forward.1} parent=1 // pred_region
      _
    $region45: #{ian_forward.1} parent=1 // pred_fallthru
      _
    // Predicated region
    $region46: #{ian_forward.1} parent=1 // pred_check
      _
    $region47: #{ian_forward.1} parent=1 // pred_check_branch
      %42 = sbr.rel (0) target = $region49
    $region48: #{ian_forward.1} parent=1 // pred_region
      _
    $region49: #{ian_forward.1} parent=1 // pred_fallthru
      _
    // Predicated region
    $region50: #{ian_forward.1} parent=1 // pred_check
      _
    $region51: #{ian_forward.1} parent=1 // pred_check_branch
      %44 = sbr.rel (0) target = $region53
    $region52: #{ian_forward.1} parent=1 // pred_region
      _
    $region53: #{ian_forward.1} parent=1 // pred_fallthru
      _
    %v45 = vld [vmem:[%s0] sm:$0xff]
    %v46 = vld [vmem:[%s0 + $0x8] sm:$0xff]
    %v47 = vld [vmem:[%s0 + $0x10] sm:$0xff]
    %v48 = vld [vmem:[%s0 + $0x18] sm:$0xff]
    %v49 = vld [vmem:[%s4] sm:$0xff]
    %v50 = vld [vmem:[%s4 + $0x8] sm:$0xff]
    %v51 = vld [vmem:[%s4 + $0x10] sm:$0xff]
    %v52 = vld [vmem:[%s4 + $0x18] sm:$0xff]
    %v53 = vld [vmem:[%s6] sm:$0x1]
    %v55 = vlaneseq
    %v56 = vshrl.u32 %v55, 7
    %v57 = vsub.s32 0, %v56
    %v58 = vrot.slane %v53, %v57
    %vm60 = vcmask 261120
    %v62 = vsel %vm60, %v45, 0
    %v65 = vsel %vm60, %v46, 0
    %v68 = vsel %vm60, %v47, 0
    %v71 = vsel %vm60, %v48, 0
    %73 = vmatprep.subr.mxu0 0.0
    %74 = vmatpush1.msra.mxu0 %v49
    %75 = vmatprep.subr.mxu0 0.0
    %76 = vmatpush1.msra.mxu0 %v50
    %77 = vmatprep.subr.mxu0 0.0
    %78 = vmatpush1.msra.mxu0 %v51
    %79 = vmatprep.subr.mxu0 0.0
    %80 = vmatpush1.msra.mxu0 %v52
    %81 = vmatprep.subr.mxu0 0.0
    %82 = vmatpush1.msra.mxu0 0.0
    %83 = vmatprep.subr.mxu0 0.0
    %84 = vmatpush1.msra.mxu0 0.0
    %85 = vmatprep.subr.mxu0 0.0
    %86 = vmatpush1.msra.mxu0 0.0
    %87 = vmatprep.subr.mxu0 0.0
    %88 = vmatpush1.msra.mxu0 0.0
    %89 = vmatprep.subr.mxu0 0.0
    %90 = vmatpush1.msra.mxu0 0.0
    %91 = vmatprep.subr.mxu0 0.0
    %92 = vmatpush1.msra.mxu0 0.0
    %93 = vmatprep.subr.mxu0 0.0
    %94 = vmatpush1.msra.mxu0 0.0
    %95 = vmatprep.subr.mxu0 0.0
    %96 = vmatpush1.msra.mxu0 0.0
    %97 = vmatprep.subr.mxu0 0.0
    %98 = vmatpush1.msra.mxu0 0.0
    %99 = vmatprep.subr.mxu0 0.0
    %100 = vmatpush1.msra.mxu0 0.0
    %101 = vmatprep.subr.mxu0 0.0
    %102 = vmatpush1.msra.mxu0 0.0
    %103 = vmatprep.subr.mxu0 0.0
    %104 = vmatpush1.msra.mxu0 0.0
    %105 = vmatprep.subr.mxu0 0.0
    %106 = vmatpush1.msra.mxu0 0.0
    %107 = vmatprep.subr.mxu0 0.0
    %108 = vmatpush1.msra.mxu0 0.0
    %109 = vmatprep.subr.mxu0 0.0
    %110 = vmatpush1.msra.mxu0 0.0
    %111 = vmatprep.subr.mxu0 0.0
    %112 = vmatpush1.msra.mxu0 0.0
    %113 = vmatprep.subr.mxu0 0.0
    %114 = vmatpush1.msra.mxu0 0.0
    %115 = vmatprep.subr.mxu0 0.0
    %116 = vmatpush1.msra.mxu0 0.0
    %117 = vmatprep.subr.mxu0 0.0
    %118 = vmatpush1.msra.mxu0 0.0
    %119 = vmatprep.subr.mxu0 0.0
    %120 = vmatpush1.msra.mxu0 0.0
    %121 = vmatprep.subr.mxu0 0.0
    %122 = vmatpush1.msra.mxu0 0.0
    %123 = vmatprep.subr.mxu0 0.0
    %124 = vmatpush1.msra.mxu0 0.0
    %125 = vmatprep.subr.mxu0 0.0
    %126 = vmatpush1.msra.mxu0 0.0
    %127 = vmatprep.subr.mxu0 0.0
    %128 = vmatpush1.msra.mxu0 0.0
    %129 = vmatprep.subr.mxu0 0.0
    %130 = vmatpush1.msra.mxu0 0.0
    %131 = vmatprep.subr.mxu0 0.0
    %132 = vmatpush1.msra.mxu0 0.0
    %133 = vmatprep.subr.mxu0 0.0
    %134 = vmatpush1.msra.mxu0 0.0
    %135 = vmatprep.subr.mxu0 0.0
    %136 = vmatpush1.msra.mxu0 0.0
    %137 = vmatprep.mubr.f32.mxu0 0.0
    %138 = vmatmul.mubr.f32.gmra.mrb[0].mxu0 %v62
    %v139 = vpop.f32.mrb[0].mxu0
    %v140 = vadd.f32 %v58, %v139
    %v141 = vpop.f32.mrb[0].mxu0
    %142 = vmatprep.mubr.f32.mxu0 0.0
    %143 = vmatmul.mubr.f32.gmra.mrb[0].mxu0 %v65
    %v144 = vpop.f32.mrb[0].mxu0
    %v145 = vadd.f32 %v58, %v144
    %v146 = vpop.f32.mrb[0].mxu0
    %147 = vmatprep.mubr.f32.mxu0 0.0
    %148 = vmatmul.mubr.f32.gmra.mrb[0].mxu0 %v68
    %v149 = vpop.f32.mrb[0].mxu0
    %v150 = vadd.f32 %v58, %v149
    %v151 = vpop.f32.mrb[0].mxu0
    %152 = vmatprep.mubr.f32.mxu0 0.0
    %153 = vmatmul.mubr.f32.gmra.mrb[0].mxu0 %v71
    %v154 = vpop.f32.mrb[0].mxu0
    %v155 = vadd.f32 %v58, %v154
    %v156 = vpop.f32.mrb[0].mxu0
    %157 = vdwg.mxu0
    %158 = vst [vmem:[#allocation2] sm:$0xff] %v140
    %s159 = scalar_lea.vmem [#allocation2], 8
    %160 = vst [vmem:[%s159] sm:$0xff] %v145
    %s161 = scalar_lea.vmem [#allocation2], 16
    %162 = vst [vmem:[%s161] sm:$0xff] %v150
    %s163 = scalar_lea.vmem [#allocation2], 24
    %164 = vst [vmem:[%s163] sm:$0xff] %v155
    %v165 = vld [vmem:[%s1] sm:$0xff]
    %v166 = vld [vmem:[%s1 + $0x8] sm:$0xff]
    %v167 = vld [vmem:[%s7] sm:$0xff]
    %v168 = vld [vmem:[%s7 + $0x8] sm:$0xff]
    %v169 = vld [vmem:[%s7 + $0x10] sm:$0xff]
    %v170 = vld [vmem:[%s7 + $0x18] sm:$0xff]
    %v171 = vld [vmem:[%s9] sm:$0x1]
    %v173 = vlaneseq
    %v174 = vshrl.u32 %v173, 7
    %v175 = vsub.s32 0, %v174
    %v176 = vrot.slane %v171, %v175
    %v179 = vsel %vm60, %v165, 0
    %v182 = vsel %vm60, %v166, 0
    %184 = vmatprep.subr.mxu0 0.0
    %185 = vmatpush1.msra.mxu0 %v167
    %186 = vmatprep.subr.mxu0 0.0
    %187 = vmatpush1.msra.mxu0 %v168
    %188 = vmatprep.subr.mxu0 0.0
    %189 = vmatpush1.msra.mxu0 %v169
    %190 = vmatprep.subr.mxu0 0.0
    %191 = vmatpush1.msra.mxu0 %v170
    %192 = vmatprep.subr.mxu0 0.0
    %193 = vmatpush1.msra.mxu0 0.0
    %194 = vmatprep.subr.mxu0 0.0
    %195 = vmatpush1.msra.mxu0 0.0
    %196 = vmatprep.subr.mxu0 0.0
    %197 = vmatpush1.msra.mxu0 0.0
    %198 = vmatprep.subr.mxu0 0.0
    %199 = vmatpush1.msra.mxu0 0.0
    %200 = vmatprep.subr.mxu0 0.0
    %201 = vmatpush1.msra.mxu0 0.0
    %202 = vmatprep.subr.mxu0 0.0
    %203 = vmatpush1.msra.mxu0 0.0
    %204 = vmatprep.subr.mxu0 0.0
    %205 = vmatpush1.msra.mxu0 0.0
    %206 = vmatprep.subr.mxu0 0.0
    %207 = vmatpush1.msra.mxu0 0.0
    %208 = vmatprep.subr.mxu0 0.0
    %209 = vmatpush1.msra.mxu0 0.0
    %210 = vmatprep.subr.mxu0 0.0
    %211 = vmatpush1.msra.mxu0 0.0
    %212 = vmatprep.subr.mxu0 0.0
    %213 = vmatpush1.msra.mxu0 0.0
    %214 = vmatprep.subr.mxu0 0.0
    %215 = vmatpush1.msra.mxu0 0.0
    %216 = vmatprep.subr.mxu0 0.0
    %217 = vmatpush1.msra.mxu0 0.0
    %218 = vmatprep.subr.mxu0 0.0
    %219 = vmatpush1.msra.mxu0 0.0
    %220 = vmatprep.subr.mxu0 0.0
    %221 = vmatpush1.msra.mxu0 0.0
    %222 = vmatprep.subr.mxu0 0.0
    %223 = vmatpush1.msra.mxu0 0.0
    %224 = vmatprep.subr.mxu0 0.0
    %225 = vmatpush1.msra.mxu0 0.0
    %226 = vmatprep.subr.mxu0 0.0
    %227 = vmatpush1.msra.mxu0 0.0
    %228 = vmatprep.subr.mxu0 0.0
    %229 = vmatpush1.msra.mxu0 0.0
    %230 = vmatprep.subr.mxu0 0.0
    %231 = vmatpush1.msra.mxu0 0.0
    %232 = vmatprep.subr.mxu0 0.0
    %233 = vmatpush1.msra.mxu0 0.0
    %234 = vmatprep.subr.mxu0 0.0
    %235 = vmatpush1.msra.mxu0 0.0
    %236 = vmatprep.subr.mxu0 0.0
    %237 = vmatpush1.msra.mxu0 0.0
    %238 = vmatprep.subr.mxu0 0.0
    %239 = vmatpush1.msra.mxu0 0.0
    %240 = vmatprep.subr.mxu0 0.0
    %241 = vmatpush1.msra.mxu0 0.0
    %242 = vmatprep.subr.mxu0 0.0
    %243 = vmatpush1.msra.mxu0 0.0
    %244 = vmatprep.subr.mxu0 0.0
    %245 = vmatpush1.msra.mxu0 0.0
    %246 = vmatprep.subr.mxu0 0.0
    %247 = vmatpush1.msra.mxu0 0.0
    %248 = vmatprep.mubr.f32.mxu0 0.0
    %249 = vmatmul.mubr.f32.gmra.mrb[0].mxu0 %v179
    %v250 = vpop.f32.mrb[0].mxu0
    %v251 = vadd.f32 %v176, %v250
    %v252 = vpop.f32.mrb[0].mxu0
    %253 = vmatprep.mubr.f32.mxu0 0.0
    %254 = vmatmul.mubr.f32.gmra.mrb[0].mxu0 %v182
    %v255 = vpop.f32.mrb[0].mxu0
    %v256 = vadd.f32 %v176, %v255
    %v257 = vpop.f32.mrb[0].mxu0
    %258 = vdwg.mxu0
    %259 = vst [vmem:[#allocation3] sm:$0xff] %v251
    %s260 = scalar_lea.vmem [#allocation3], 8
    %261 = vst [vmem:[%s260] sm:$0xff] %v256
    %v262 = vld [vmem:[%s2] sm:$0x3]
    %v263 = vld [vmem:[%s3] sm:$0x3]
    %v264 = vld [vmem:[#allocation2] sm:$0xff]
    %v265 = vld [vmem:[#allocation3] sm:$0xff]
    %v266 = vld [vmem:[%s5] sm:$0xff]
    %v267 = vld [vmem:[%s5 + $0x8] sm:$0xff]
    %v268 = vld [vmem:[%s5 + $0x10] sm:$0xff]
    %v269 = vld [vmem:[%s5 + $0x18] sm:$0xff]
    %v271 = vsel %vm60, 0.0, 0
    %273 = vmatprep.subr.mxu0 0.0
    %274 = vmatpush1.msra.mxu0 %v266
    %275 = vmatprep.subr.mxu0 0.0
    %276 = vmatpush1.msra.mxu0 %v267
    %277 = vmatprep.subr.mxu0 0.0
    %278 = vmatpush1.msra.mxu0 %v268
    %279 = vmatprep.subr.mxu0 0.0
    %280 = vmatpush1.msra.mxu0 %v269
    %281 = vmatprep.subr.mxu0 0.0
    %282 = vmatpush1.msra.mxu0 0.0
    %283 = vmatprep.subr.mxu0 0.0
    %284 = vmatpush1.msra.mxu0 0.0
    %285 = vmatprep.subr.mxu0 0.0
    %286 = vmatpush1.msra.mxu0 0.0
    %287 = vmatprep.subr.mxu0 0.0
    %288 = vmatpush1.msra.mxu0 0.0
    %289 = vmatprep.subr.mxu0 0.0
    %290 = vmatpush1.msra.mxu0 0.0
    %291 = vmatprep.subr.mxu0 0.0
    %292 = vmatpush1.msra.mxu0 0.0
    %293 = vmatprep.subr.mxu0 0.0
    %294 = vmatpush1.msra.mxu0 0.0
    %295 = vmatprep.subr.mxu0 0.0
    %296 = vmatpush1.msra.mxu0 0.0
    %297 = vmatprep.subr.mxu0 0.0
    %298 = vmatpush1.msra.mxu0 0.0
    %299 = vmatprep.subr.mxu0 0.0
    %300 = vmatpush1.msra.mxu0 0.0
    %301 = vmatprep.subr.mxu0 0.0
    %302 = vmatpush1.msra.mxu0 0.0
    %303 = vmatprep.subr.mxu0 0.0
    %304 = vmatpush1.msra.mxu0 0.0
    %305 = vmatprep.subr.mxu0 0.0
    %306 = vmatpush1.msra.mxu0 0.0
    %307 = vmatprep.subr.mxu0 0.0
    %308 = vmatpush1.msra.mxu0 0.0
    %309 = vmatprep.subr.mxu0 0.0
    %310 = vmatpush1.msra.mxu0 0.0
    %311 = vmatprep.subr.mxu0 0.0
    %312 = vmatpush1.msra.mxu0 0.0
    %313 = vmatprep.subr.mxu0 0.0
    %314 = vmatpush1.msra.mxu0 0.0
    %315 = vmatprep.subr.mxu0 0.0
    %316 = vmatpush1.msra.mxu0 0.0
    %317 = vmatprep.subr.mxu0 0.0
    %318 = vmatpush1.msra.mxu0 0.0
    %319 = vmatprep.subr.mxu0 0.0
    %320 = vmatpush1.msra.mxu0 0.0
    %321 = vmatprep.subr.mxu0 0.0
    %322 = vmatpush1.msra.mxu0 0.0
    %323 = vmatprep.subr.mxu0 0.0
    %324 = vmatpush1.msra.mxu0 0.0
    %325 = vmatprep.subr.mxu0 0.0
    %326 = vmatpush1.msra.mxu0 0.0
    %327 = vmatprep.subr.mxu0 0.0
    %328 = vmatpush1.msra.mxu0 0.0
    %329 = vmatprep.subr.mxu0 0.0
    %330 = vmatpush1.msra.mxu0 0.0
    %331 = vmatprep.subr.mxu0 0.0
    %332 = vmatpush1.msra.mxu0 0.0
    %333 = vmatprep.subr.mxu0 0.0
    %334 = vmatpush1.msra.mxu0 0.0
    %335 = vmatprep.subr.mxu0 0.0
    %336 = vmatpush1.msra.mxu0 0.0
    %337 = vmatprep.mubr.f32.mxu0 0.0
    %338 = vmatmul.mubr.f32.gmra.mrb[0].mxu0 %v271
    %v339 = vpop.f32.mrb[0].mxu0
    %v340 = vadd.f32 0.0, %v339
    %v341 = vpop.f32.mrb[0].mxu0
    %342 = vdwg.mxu0
    %v343 = vadd.f32 %v264, %v340
    %v344 = vxor.u32 %v343, 2147483648
    %v345 = vmul.f32 %v344, 1.442695
    %v346 = vpow.pop %v345
    %v347 = vadd.f32 %v346, 1.0
    %v348 = vrcp.pop %v347
    %v349 = vmul.f32 1.0, %v348
    %v350 = vtanh.pop %v343
    %v351 = vmul.f32 %v349, 0.0
    %353 = vrot.lane.b32.xlu0 %v350, 64
    %v354 = vpop.permute.xlu0 %353
    %v356 = vmul.f32 %v349, %v354
    %358 = vrot.lane.b32.xlu0 %v356, 32
    %v359 = vpop.permute.xlu0 %358
    %v361 = vadd.f32 %v351, %v359
    %v362 = vtanh.pop %v361
    %364 = vrot.lane.b32.xlu0 %v362, 64
    %v365 = vpop.permute.xlu0 %364
    %v367 = vmul.f32 %v349, %v365
    %v368 = vld [vmem:[%s8] sm:$0xff]
    %v369 = vld [vmem:[%s8 + $0x8] sm:$0xff]
    %v370 = vld [vmem:[%s8 + $0x10] sm:$0xff]
    %v371 = vld [vmem:[%s8 + $0x18] sm:$0xff]
    %372 = vmatprep.subr.mxu0 0.0
    %373 = vmatpush1.msra.mxu0 %v368
    %374 = vmatprep.subr.mxu0 0.0
    %375 = vmatpush1.msra.mxu0 %v369
    %376 = vmatprep.subr.mxu0 0.0
    %377 = vmatpush1.msra.mxu0 %v370
    %378 = vmatprep.subr.mxu0 0.0
    %379 = vmatpush1.msra.mxu0 %v371
    %380 = vmatprep.subr.mxu0 0.0
    %381 = vmatpush1.msra.mxu0 0.0
    %382 = vmatprep.subr.mxu0 0.0
    %383 = vmatpush1.msra.mxu0 0.0
    %384 = vmatprep.subr.mxu0 0.0
    %385 = vmatpush1.msra.mxu0 0.0
    %386 = vmatprep.subr.mxu0 0.0
    %387 = vmatpush1.msra.mxu0 0.0
    %388 = vmatprep.subr.mxu0 0.0
    %389 = vmatpush1.msra.mxu0 0.0
    %390 = vmatprep.subr.mxu0 0.0
    %391 = vmatpush1.msra.mxu0 0.0
    %392 = vmatprep.subr.mxu0 0.0
    %393 = vmatpush1.msra.mxu0 0.0
    %394 = vmatprep.subr.mxu0 0.0
    %395 = vmatpush1.msra.mxu0 0.0
    %396 = vmatprep.subr.mxu0 0.0
    %397 = vmatpush1.msra.mxu0 0.0
    %398 = vmatprep.subr.mxu0 0.0
    %399 = vmatpush1.msra.mxu0 0.0
    %400 = vmatprep.subr.mxu0 0.0
    %401 = vmatpush1.msra.mxu0 0.0
    %402 = vmatprep.subr.mxu0 0.0
    %403 = vmatpush1.msra.mxu0 0.0
    %404 = vmatprep.subr.mxu0 0.0
    %405 = vmatpush1.msra.mxu0 0.0
    %406 = vmatprep.subr.mxu0 0.0
    %407 = vmatpush1.msra.mxu0 0.0
    %408 = vmatprep.subr.mxu0 0.0
    %409 = vmatpush1.msra.mxu0 0.0
    %410 = vmatprep.subr.mxu0 0.0
    %411 = vmatpush1.msra.mxu0 0.0
    %412 = vmatprep.subr.mxu0 0.0
    %413 = vmatpush1.msra.mxu0 0.0
    %414 = vmatprep.subr.mxu0 0.0
    %415 = vmatpush1.msra.mxu0 0.0
    %416 = vmatprep.subr.mxu0 0.0
    %417 = vmatpush1.msra.mxu0 0.0
    %418 = vmatprep.subr.mxu0 0.0
    %419 = vmatpush1.msra.mxu0 0.0
    %420 = vmatprep.subr.mxu0 0.0
    %421 = vmatpush1.msra.mxu0 0.0
    %422 = vmatprep.subr.mxu0 0.0
    %423 = vmatpush1.msra.mxu0 0.0
    %424 = vmatprep.subr.mxu0 0.0
    %425 = vmatpush1.msra.mxu0 0.0
    %426 = vmatprep.subr.mxu0 0.0
    %427 = vmatpush1.msra.mxu0 0.0
    %428 = vmatprep.subr.mxu0 0.0
    %429 = vmatpush1.msra.mxu0 0.0
    %430 = vmatprep.subr.mxu0 0.0
    %431 = vmatpush1.msra.mxu0 0.0
    %432 = vmatprep.subr.mxu0 0.0
    %433 = vmatpush1.msra.mxu0 0.0
    %434 = vmatprep.subr.mxu0 0.0
    %435 = vmatpush1.msra.mxu0 0.0
    %436 = vmatprep.mubr.f32.mxu0 0.0
    %437 = vmatmul.mubr.f32.gmra.mrb[0].mxu0 %v271
    %v438 = vpop.f32.mrb[0].mxu0
    %v439 = vadd.f32 0.0, %v438
    %v440 = vpop.f32.mrb[0].mxu0
    %441 = vdwg.mxu0
    %v442 = vadd.f32 %v265, %v439
    %v443 = vxor.u32 %v442, 2147483648
    %v444 = vmul.f32 %v443, 1.442695
    %v445 = vpow.pop %v444
    %v446 = vadd.f32 %v445, 1.0
    %v447 = vrcp.pop %v446
    %v448 = vmul.f32 1.0, %v447
    %v449 = vtanh.pop %v442
    %v450 = vmul.f32 %v448, 0.0
    %452 = vrot.lane.b32.xlu0 %v449, 64
    %v453 = vpop.permute.xlu0 %452
    %v455 = vmul.f32 %v448, %v453
    %457 = vrot.lane.b32.xlu0 %v455, 32
    %v458 = vpop.permute.xlu0 %457
    %v460 = vadd.f32 %v450, %v458
    %v461 = vtanh.pop %v460
    %463 = vrot.lane.b32.xlu0 %v461, 64
    %v464 = vpop.permute.xlu0 %463
    %v466 = vmul.f32 %v448, %v464
    %vm467 = vcmp.gt.f32.partialorder %v262, 0.0
    %v468 = vsel %vm467, 1, 0
    %v469 = vcvt.s32.f32 %v468
    %471 = vset.pattern.permute.xlu0 0
    %472 = vperm.xlu0 %471, %v469
    %v473 = vpop.permute.xlu0 %472
    %v475 = vmul.f32 %v367, %v473
    %v476 = vadd.f32 %v475, 0.0
    %vm477 = vcmp.gt.f32.partialorder %v263, 0.0
    %v478 = vsel %vm477, 1, 0
    %v479 = vcvt.s32.f32 %v478
    %481 = vset.pattern.permute.xlu0 0
    %482 = vperm.xlu0 %481, %v479
    %v483 = vpop.permute.xlu0 %482
    %v485 = vmul.f32 %v466, %v483
    %v486 = vadd.f32 %v485, 0.0
    %488 = vrot.lane.b32.xlu0 %v367, 32
    %v489 = vpop.permute.xlu0 %488
    %v490 = vsel %vm60, %v489, 0
    %492 = vmatprep.subr.mxu0 0.0
    %493 = vmatpush1.msra.mxu0 %v266
    %494 = vmatprep.subr.mxu0 0.0
    %495 = vmatpush1.msra.mxu0 %v267
    %496 = vmatprep.subr.mxu0 0.0
    %497 = vmatpush1.msra.mxu0 %v268
    %498 = vmatprep.subr.mxu0 0.0
    %499 = vmatpush1.msra.mxu0 %v269
    %500 = vmatprep.subr.mxu0 0.0
    %501 = vmatpush1.msra.mxu0 0.0
    %502 = vmatprep.subr.mxu0 0.0
    %503 = vmatpush1.msra.mxu0 0.0
    %504 = vmatprep.subr.mxu0 0.0
    %505 = vmatpush1.msra.mxu0 0.0
    %506 = vmatprep.subr.mxu0 0.0
    %507 = vmatpush1.msra.mxu0 0.0
    %508 = vmatprep.subr.mxu0 0.0
    %509 = vmatpush1.msra.mxu0 0.0
    %510 = vmatprep.subr.mxu0 0.0
    %511 = vmatpush1.msra.mxu0 0.0
    %512 = vmatprep.subr.mxu0 0.0
    %513 = vmatpush1.msra.mxu0 0.0
    %514 = vmatprep.subr.mxu0 0.0
    %515 = vmatpush1.msra.mxu0 0.0
    %516 = vmatprep.subr.mxu0 0.0
    %517 = vmatpush1.msra.mxu0 0.0
    %518 = vmatprep.subr.mxu0 0.0
    %519 = vmatpush1.msra.mxu0 0.0
    %520 = vmatprep.subr.mxu0 0.0
    %521 = vmatpush1.msra.mxu0 0.0
    %522 = vmatprep.subr.mxu0 0.0
    %523 = vmatpush1.msra.mxu0 0.0
    %524 = vmatprep.subr.mxu0 0.0
    %525 = vmatpush1.msra.mxu0 0.0
    %526 = vmatprep.subr.mxu0 0.0
    %527 = vmatpush1.msra.mxu0 0.0
    %528 = vmatprep.subr.mxu0 0.0
    %529 = vmatpush1.msra.mxu0 0.0
    %530 = vmatprep.subr.mxu0 0.0
    %531 = vmatpush1.msra.mxu0 0.0
    %532 = vmatprep.subr.mxu0 0.0
    %533 = vmatpush1.msra.mxu0 0.0
    %534 = vmatprep.subr.mxu0 0.0
    %535 = vmatpush1.msra.mxu0 0.0
    %536 = vmatprep.subr.mxu0 0.0
    %537 = vmatpush1.msra.mxu0 0.0
    %538 = vmatprep.subr.mxu0 0.0
    %539 = vmatpush1.msra.mxu0 0.0
    %540 = vmatprep.subr.mxu0 0.0
    %541 = vmatpush1.msra.mxu0 0.0
    %542 = vmatprep.subr.mxu0 0.0
    %543 = vmatpush1.msra.mxu0 0.0
    %544 = vmatprep.subr.mxu0 0.0
    %545 = vmatpush1.msra.mxu0 0.0
    %546 = vmatprep.subr.mxu0 0.0
    %547 = vmatpush1.msra.mxu0 0.0
    %548 = vmatprep.subr.mxu0 0.0
    %549 = vmatpush1.msra.mxu0 0.0
    %550 = vmatprep.subr.mxu0 0.0
    %551 = vmatpush1.msra.mxu0 0.0
    %552 = vmatprep.subr.mxu0 0.0
    %553 = vmatpush1.msra.mxu0 0.0
    %554 = vmatprep.subr.mxu0 0.0
    %555 = vmatpush1.msra.mxu0 0.0
    %556 = vmatprep.mubr.f32.mxu0 0.0
    %557 = vmatmul.mubr.f32.gmra.mrb[0].mxu0 %v490
    %v558 = vpop.f32.mrb[0].mxu0
    %v559 = vadd.f32 0.0, %v558
    %v560 = vpop.f32.mrb[0].mxu0
    %561 = vdwg.mxu0
    %v563 = vrot.slane %v559, 6
    %v565 = vadd.f32 %v264, %v563
    %v566 = vxor.u32 %v565, 2147483648
    %v567 = vmul.f32 %v566, 1.442695
    %v568 = vpow.pop %v567
    %v569 = vadd.f32 %v568, 1.0
    %v570 = vrcp.pop %v569
    %v571 = vmul.f32 1.0, %v570
    %v572 = vtanh.pop %v565
    %v574 = vrot.slane %v361, 6
    %v576 = vmul.f32 %v571, %v574
    %578 = vrot.lane.b32.xlu0 %v572, 64
    %v579 = vpop.permute.xlu0 %578
    %v581 = vmul.f32 %v571, %v579
    %583 = vrot.lane.b32.xlu0 %v581, 32
    %v584 = vpop.permute.xlu0 %583
    %v586 = vadd.f32 %v576, %v584
    %v587 = vtanh.pop %v586
    %589 = vrot.lane.b32.xlu0 %v587, 64
    %v590 = vpop.permute.xlu0 %589
    %v592 = vmul.f32 %v571, %v590
    %594 = vrot.lane.b32.xlu0 %v466, 32
    %v595 = vpop.permute.xlu0 %594
    %v596 = vsel %vm60, %v595, 0
    %598 = vmatprep.subr.mxu0 0.0
    %599 = vmatpush1.msra.mxu0 %v368
    %600 = vmatprep.subr.mxu0 0.0
    %601 = vmatpush1.msra.mxu0 %v369
    %602 = vmatprep.subr.mxu0 0.0
    %603 = vmatpush1.msra.mxu0 %v370
    %604 = vmatprep.subr.mxu0 0.0
    %605 = vmatpush1.msra.mxu0 %v371
    %606 = vmatprep.subr.mxu0 0.0
    %607 = vmatpush1.msra.mxu0 0.0
    %608 = vmatprep.subr.mxu0 0.0
    %609 = vmatpush1.msra.mxu0 0.0
    %610 = vmatprep.subr.mxu0 0.0
    %611 = vmatpush1.msra.mxu0 0.0
    %612 = vmatprep.subr.mxu0 0.0
    %613 = vmatpush1.msra.mxu0 0.0
    %614 = vmatprep.subr.mxu0 0.0
    %615 = vmatpush1.msra.mxu0 0.0
    %616 = vmatprep.subr.mxu0 0.0
    %617 = vmatpush1.msra.mxu0 0.0
    %618 = vmatprep.subr.mxu0 0.0
    %619 = vmatpush1.msra.mxu0 0.0
    %620 = vmatprep.subr.mxu0 0.0
    %621 = vmatpush1.msra.mxu0 0.0
    %622 = vmatprep.subr.mxu0 0.0
    %623 = vmatpush1.msra.mxu0 0.0
    %624 = vmatprep.subr.mxu0 0.0
    %625 = vmatpush1.msra.mxu0 0.0
    %626 = vmatprep.subr.mxu0 0.0
    %627 = vmatpush1.msra.mxu0 0.0
    %628 = vmatprep.subr.mxu0 0.0
    %629 = vmatpush1.msra.mxu0 0.0
    %630 = vmatprep.subr.mxu0 0.0
    %631 = vmatpush1.msra.mxu0 0.0
    %632 = vmatprep.subr.mxu0 0.0
    %633 = vmatpush1.msra.mxu0 0.0
    %634 = vmatprep.subr.mxu0 0.0
    %635 = vmatpush1.msra.mxu0 0.0
    %636 = vmatprep.subr.mxu0 0.0
    %637 = vmatpush1.msra.mxu0 0.0
    %638 = vmatprep.subr.mxu0 0.0
    %639 = vmatpush1.msra.mxu0 0.0
    %640 = vmatprep.subr.mxu0 0.0
    %641 = vmatpush1.msra.mxu0 0.0
    %642 = vmatprep.subr.mxu0 0.0
    %643 = vmatpush1.msra.mxu0 0.0
    %644 = vmatprep.subr.mxu0 0.0
    %645 = vmatpush1.msra.mxu0 0.0
    %646 = vmatprep.subr.mxu0 0.0
    %647 = vmatpush1.msra.mxu0 0.0
    %648 = vmatprep.subr.mxu0 0.0
    %649 = vmatpush1.msra.mxu0 0.0
    %650 = vmatprep.subr.mxu0 0.0
    %651 = vmatpush1.msra.mxu0 0.0
    %652 = vmatprep.subr.mxu0 0.0
    %653 = vmatpush1.msra.mxu0 0.0
    %654 = vmatprep.subr.mxu0 0.0
    %655 = vmatpush1.msra.mxu0 0.0
    %656 = vmatprep.subr.mxu0 0.0
    %657 = vmatpush1.msra.mxu0 0.0
    %658 = vmatprep.subr.mxu0 0.0
    %659 = vmatpush1.msra.mxu0 0.0
    %660 = vmatprep.subr.mxu0 0.0
    %661 = vmatpush1.msra.mxu0 0.0
    %662 = vmatprep.mubr.f32.mxu0 0.0
    %663 = vmatmul.mubr.f32.gmra.mrb[0].mxu0 %v596
    %v664 = vpop.f32.mrb[0].mxu0
    %v665 = vadd.f32 0.0, %v664
    %v666 = vpop.f32.mrb[0].mxu0
    %667 = vdwg.mxu0
    %v669 = vrot.slane %v665, 6
    %v671 = vadd.f32 %v265, %v669
    %v672 = vxor.u32 %v671, 2147483648
    %v673 = vmul.f32 %v672, 1.442695
    %v674 = vpow.pop %v673
    %v675 = vadd.f32 %v674, 1.0
    %v676 = vrcp.pop %v675
    %v677 = vmul.f32 1.0, %v676
    %v678 = vtanh.pop %v671
    %v680 = vrot.slane %v460, 6
    %v682 = vmul.f32 %v677, %v680
    %684 = vrot.lane.b32.xlu0 %v678, 64
    %v685 = vpop.permute.xlu0 %684
    %v687 = vmul.f32 %v677, %v685
    %689 = vrot.lane.b32.xlu0 %v687, 32
    %v690 = vpop.permute.xlu0 %689
    %v692 = vadd.f32 %v682, %v690
    %v693 = vtanh.pop %v692
    %695 = vrot.lane.b32.xlu0 %v693, 64
    %v696 = vpop.permute.xlu0 %695
    %v698 = vmul.f32 %v677, %v696
    %vm699 = vcmp.gt.f32.partialorder %v262, 1.0
    %v700 = vsel %vm699, 1, 0
    %v701 = vcvt.s32.f32 %v700
    %703 = vset.pattern.permute.xlu0 0
    %704 = vperm.xlu0 %703, %v701
    %v705 = vpop.permute.xlu0 %704
    %v706 = vrot.slane %v705, 6
    %v708 = vmul.f32 %v592, %v706
    %v710 = vrot.slane %v708, 2
    %v712 = vadd.f32 %v476, %v710
    %vm713 = vcmp.gt.f32.partialorder %v263, 1.0
    %v714 = vsel %vm713, 1, 0
    %v715 = vcvt.s32.f32 %v714
    %717 = vset.pattern.permute.xlu0 0
    %718 = vperm.xlu0 %717, %v715
    %v719 = vpop.permute.xlu0 %718
    %v720 = vrot.slane %v719, 6
    %v722 = vmul.f32 %v698, %v720
    %v724 = vrot.slane %v722, 2
    %v726 = vadd.f32 %v486, %v724
    %v728 = vrot.slane %v592, 2
    %729 = vrot.lane.b32.xlu0 %v728, 32
    %v730 = vpop.permute.xlu0 %729
    %v731 = vsel %vm60, %v730, 0
    %733 = vmatprep.subr.mxu0 0.0
    %734 = vmatpush1.msra.mxu0 %v266
    %735 = vmatprep.subr.mxu0 0.0
    %736 = vmatpush1.msra.mxu0 %v267
    %737 = vmatprep.subr.mxu0 0.0
    %738 = vmatpush1.msra.mxu0 %v268
    %739 = vmatprep.subr.mxu0 0.0
    %740 = vmatpush1.msra.mxu0 %v269
    %741 = vmatprep.subr.mxu0 0.0
    %742 = vmatpush1.msra.mxu0 0.0
    %743 = vmatprep.subr.mxu0 0.0
    %744 = vmatpush1.msra.mxu0 0.0
    %745 = vmatprep.subr.mxu0 0.0
    %746 = vmatpush1.msra.mxu0 0.0
    %747 = vmatprep.subr.mxu0 0.0
    %748 = vmatpush1.msra.mxu0 0.0
    %749 = vmatprep.subr.mxu0 0.0
    %750 = vmatpush1.msra.mxu0 0.0
    %751 = vmatprep.subr.mxu0 0.0
    %752 = vmatpush1.msra.mxu0 0.0
    %753 = vmatprep.subr.mxu0 0.0
    %754 = vmatpush1.msra.mxu0 0.0
    %755 = vmatprep.subr.mxu0 0.0
    %756 = vmatpush1.msra.mxu0 0.0
    %757 = vmatprep.subr.mxu0 0.0
    %758 = vmatpush1.msra.mxu0 0.0
    %759 = vmatprep.subr.mxu0 0.0
    %760 = vmatpush1.msra.mxu0 0.0
    %761 = vmatprep.subr.mxu0 0.0
    %762 = vmatpush1.msra.mxu0 0.0
    %763 = vmatprep.subr.mxu0 0.0
    %764 = vmatpush1.msra.mxu0 0.0
    %765 = vmatprep.subr.mxu0 0.0
    %766 = vmatpush1.msra.mxu0 0.0
    %767 = vmatprep.subr.mxu0 0.0
    %768 = vmatpush1.msra.mxu0 0.0
    %769 = vmatprep.subr.mxu0 0.0
    %770 = vmatpush1.msra.mxu0 0.0
    %771 = vmatprep.subr.mxu0 0.0
    %772 = vmatpush1.msra.mxu0 0.0
    %773 = vmatprep.subr.mxu0 0.0
    %774 = vmatpush1.msra.mxu0 0.0
    %775 = vmatprep.subr.mxu0 0.0
    %776 = vmatpush1.msra.mxu0 0.0
    %777 = vmatprep.subr.mxu0 0.0
    %778 = vmatpush1.msra.mxu0 0.0
    %779 = vmatprep.subr.mxu0 0.0
    %780 = vmatpush1.msra.mxu0 0.0
    %781 = vmatprep.subr.mxu0 0.0
    %782 = vmatpush1.msra.mxu0 0.0
    %783 = vmatprep.subr.mxu0 0.0
    %784 = vmatpush1.msra.mxu0 0.0
    %785 = vmatprep.subr.mxu0 0.0
    %786 = vmatpush1.msra.mxu0 0.0
    %787 = vmatprep.subr.mxu0 0.0
    %788 = vmatpush1.msra.mxu0 0.0
    %789 = vmatprep.subr.mxu0 0.0
    %790 = vmatpush1.msra.mxu0 0.0
    %791 = vmatprep.subr.mxu0 0.0
    %792 = vmatpush1.msra.mxu0 0.0
    %793 = vmatprep.subr.mxu0 0.0
    %794 = vmatpush1.msra.mxu0 0.0
    %795 = vmatprep.subr.mxu0 0.0
    %796 = vmatpush1.msra.mxu0 0.0
    %797 = vmatprep.mubr.f32.mxu0 0.0
    %798 = vmatmul.mubr.f32.gmra.mrb[0].mxu0 %v731
    %v799 = vpop.f32.mrb[0].mxu0
    %v800 = vadd.f32 0.0, %v799
    %v801 = vpop.f32.mrb[0].mxu0
    %802 = vdwg.mxu0
    %v804 = vrot.slane %v800, 4
    %v806 = vadd.f32 %v264, %v804
    %v807 = vxor.u32 %v806, 2147483648
    %v808 = vmul.f32 %v807, 1.442695
    %v809 = vpow.pop %v808
    %v810 = vadd.f32 %v809, 1.0
    %v811 = vrcp.pop %v810
    %v812 = vmul.f32 1.0, %v811
    %v813 = vtanh.pop %v806
    %v815 = vrot.slane %v586, 6
    %v817 = vmul.f32 %v812, %v815
    %819 = vrot.lane.b32.xlu0 %v813, 64
    %v820 = vpop.permute.xlu0 %819
    %v822 = vmul.f32 %v812, %v820
    %824 = vrot.lane.b32.xlu0 %v822, 32
    %v825 = vpop.permute.xlu0 %824
    %v827 = vadd.f32 %v817, %v825
    %v828 = vtanh.pop %v827
    %830 = vrot.lane.b32.xlu0 %v828, 64
    %v831 = vpop.permute.xlu0 %830
    %v833 = vmul.f32 %v812, %v831
    %v835 = vrot.slane %v698, 2
    %836 = vrot.lane.b32.xlu0 %v835, 32
    %v837 = vpop.permute.xlu0 %836
    %v838 = vsel %vm60, %v837, 0
    %840 = vmatprep.subr.mxu0 0.0
    %841 = vmatpush1.msra.mxu0 %v368
    %842 = vmatprep.subr.mxu0 0.0
    %843 = vmatpush1.msra.mxu0 %v369
    %844 = vmatprep.subr.mxu0 0.0
    %845 = vmatpush1.msra.mxu0 %v370
    %846 = vmatprep.subr.mxu0 0.0
    %847 = vmatpush1.msra.mxu0 %v371
    %848 = vmatprep.subr.mxu0 0.0
    %849 = vmatpush1.msra.mxu0 0.0
    %850 = vmatprep.subr.mxu0 0.0
    %851 = vmatpush1.msra.mxu0 0.0
    %852 = vmatprep.subr.mxu0 0.0
    %853 = vmatpush1.msra.mxu0 0.0
    %854 = vmatprep.subr.mxu0 0.0
    %855 = vmatpush1.msra.mxu0 0.0
    %856 = vmatprep.subr.mxu0 0.0
    %857 = vmatpush1.msra.mxu0 0.0
    %858 = vmatprep.subr.mxu0 0.0
    %859 = vmatpush1.msra.mxu0 0.0
    %860 = vmatprep.subr.mxu0 0.0
    %861 = vmatpush1.msra.mxu0 0.0
    %862 = vmatprep.subr.mxu0 0.0
    %863 = vmatpush1.msra.mxu0 0.0
    %864 = vmatprep.subr.mxu0 0.0
    %865 = vmatpush1.msra.mxu0 0.0
    %866 = vmatprep.subr.mxu0 0.0
    %867 = vmatpush1.msra.mxu0 0.0
    %868 = vmatprep.subr.mxu0 0.0
    %869 = vmatpush1.msra.mxu0 0.0
    %870 = vmatprep.subr.mxu0 0.0
    %871 = vmatpush1.msra.mxu0 0.0
    %872 = vmatprep.subr.mxu0 0.0
    %873 = vmatpush1.msra.mxu0 0.0
    %874 = vmatprep.subr.mxu0 0.0
    %875 = vmatpush1.msra.mxu0 0.0
    %876 = vmatprep.subr.mxu0 0.0
    %877 = vmatpush1.msra.mxu0 0.0
    %878 = vmatprep.subr.mxu0 0.0
    %879 = vmatpush1.msra.mxu0 0.0
    %880 = vmatprep.subr.mxu0 0.0
    %881 = vmatpush1.msra.mxu0 0.0
    %882 = vmatprep.subr.mxu0 0.0
    %883 = vmatpush1.msra.mxu0 0.0
    %884 = vmatprep.subr.mxu0 0.0
    %885 = vmatpush1.msra.mxu0 0.0
    %886 = vmatprep.subr.mxu0 0.0
    %887 = vmatpush1.msra.mxu0 0.0
    %888 = vmatprep.subr.mxu0 0.0
    %889 = vmatpush1.msra.mxu0 0.0
    %890 = vmatprep.subr.mxu0 0.0
    %891 = vmatpush1.msra.mxu0 0.0
    %892 = vmatprep.subr.mxu0 0.0
    %893 = vmatpush1.msra.mxu0 0.0
    %894 = vmatprep.subr.mxu0 0.0
    %895 = vmatpush1.msra.mxu0 0.0
    %896 = vmatprep.subr.mxu0 0.0
    %897 = vmatpush1.msra.mxu0 0.0
    %898 = vmatprep.subr.mxu0 0.0
    %899 = vmatpush1.msra.mxu0 0.0
    %900 = vmatprep.subr.mxu0 0.0
    %901 = vmatpush1.msra.mxu0 0.0
    %902 = vmatprep.subr.mxu0 0.0
    %903 = vmatpush1.msra.mxu0 0.0
    %904 = vmatprep.mubr.f32.mxu0 0.0
    %905 = vmatmul.mubr.f32.gmra.mrb[0].mxu0 %v838
    %v906 = vpop.f32.mrb[0].mxu0
    %v907 = vadd.f32 0.0, %v906
    %v908 = vpop.f32.mrb[0].mxu0
    %909 = vdwg.mxu0
    %v911 = vrot.slane %v907, 4
    %v913 = vadd.f32 %v265, %v911
    %v914 = vxor.u32 %v913, 2147483648
    %v915 = vmul.f32 %v914, 1.442695
    %v916 = vpow.pop %v915
    %v917 = vadd.f32 %v916, 1.0
    %v918 = vrcp.pop %v917
    %v919 = vmul.f32 1.0, %v918
    %v920 = vtanh.pop %v913
    %v922 = vrot.slane %v692, 6
    %v924 = vmul.f32 %v919, %v922
    %926 = vrot.lane.b32.xlu0 %v920, 64
    %v927 = vpop.permute.xlu0 %926
    %v929 = vmul.f32 %v919, %v927
    %931 = vrot.lane.b32.xlu0 %v929, 32
    %v932 = vpop.permute.xlu0 %931
    %v934 = vadd.f32 %v924, %v932
    %v935 = vtanh.pop %v934
    %937 = vrot.lane.b32.xlu0 %v935, 64
    %v938 = vpop.permute.xlu0 %937
    %v940 = vmul.f32 %v919, %v938
    %vm941 = vcmp.gt.f32.partialorder %v262, 2.0
    %v942 = vsel %vm941, 1, 0
    %v943 = vcvt.s32.f32 %v942
    %945 = vset.pattern.permute.xlu0 0
    %946 = vperm.xlu0 %945, %v943
    %v947 = vpop.permute.xlu0 %946
    %v948 = vrot.slane %v947, 4
    %v950 = vmul.f32 %v833, %v948
    %v952 = vrot.slane %v950, 4
    %v954 = vadd.f32 %v712, %v952
    %vm955 = vcmp.gt.f32.partialorder %v263, 2.0
    %v956 = vsel %vm955, 1, 0
    %v957 = vcvt.s32.f32 %v956
    %959 = vset.pattern.permute.xlu0 0
    %960 = vperm.xlu0 %959, %v957
    %v961 = vpop.permute.xlu0 %960
    %v962 = vrot.slane %v961, 4
    %v964 = vmul.f32 %v940, %v962
    %v966 = vrot.slane %v964, 4
    %v968 = vadd.f32 %v726, %v966
    %v970 = vrot.slane %v833, 4
    %971 = vrot.lane.b32.xlu0 %v970, 32
    %v972 = vpop.permute.xlu0 %971
    %v973 = vsel %vm60, %v972, 0
    %975 = vmatprep.subr.mxu0 0.0
    %976 = vmatpush1.msra.mxu0 %v266
    %977 = vmatprep.subr.mxu0 0.0
    %978 = vmatpush1.msra.mxu0 %v267
    %979 = vmatprep.subr.mxu0 0.0
    %980 = vmatpush1.msra.mxu0 %v268
    %981 = vmatprep.subr.mxu0 0.0
    %982 = vmatpush1.msra.mxu0 %v269
    %983 = vmatprep.subr.mxu0 0.0
    %984 = vmatpush1.msra.mxu0 0.0
    %985 = vmatprep.subr.mxu0 0.0
    %986 = vmatpush1.msra.mxu0 0.0
    %987 = vmatprep.subr.mxu0 0.0
    %988 = vmatpush1.msra.mxu0 0.0
    %989 = vmatprep.subr.mxu0 0.0
    %990 = vmatpush1.msra.mxu0 0.0
    %991 = vmatprep.subr.mxu0 0.0
    %992 = vmatpush1.msra.mxu0 0.0
    %993 = vmatprep.subr.mxu0 0.0
    %994 = vmatpush1.msra.mxu0 0.0
    %995 = vmatprep.subr.mxu0 0.0
    %996 = vmatpush1.msra.mxu0 0.0
    %997 = vmatprep.subr.mxu0 0.0
    %998 = vmatpush1.msra.mxu0 0.0
    %999 = vmatprep.subr.mxu0 0.0
    %1000 = vmatpush1.msra.mxu0 0.0
    %1001 = vmatprep.subr.mxu0 0.0
    %1002 = vmatpush1.msra.mxu0 0.0
    %1003 = vmatprep.subr.mxu0 0.0
    %1004 = vmatpush1.msra.mxu0 0.0
    %1005 = vmatprep.subr.mxu0 0.0
    %1006 = vmatpush1.msra.mxu0 0.0
    %1007 = vmatprep.subr.mxu0 0.0
    %1008 = vmatpush1.msra.mxu0 0.0
    %1009 = vmatprep.subr.mxu0 0.0
    %1010 = vmatpush1.msra.mxu0 0.0
    %1011 = vmatprep.subr.mxu0 0.0
    %1012 = vmatpush1.msra.mxu0 0.0
    %1013 = vmatprep.subr.mxu0 0.0
    %1014 = vmatpush1.msra.mxu0 0.0
    %1015 = vmatprep.subr.mxu0 0.0
    %1016 = vmatpush1.msra.mxu0 0.0
    %1017 = vmatprep.subr.mxu0 0.0
    %1018 = vmatpush1.msra.mxu0 0.0
    %1019 = vmatprep.subr.mxu0 0.0
    %1020 = vmatpush1.msra.mxu0 0.0
    %1021 = vmatprep.subr.mxu0 0.0
    %1022 = vmatpush1.msra.mxu0 0.0
    %1023 = vmatprep.subr.mxu0 0.0
    %1024 = vmatpush1.msra.mxu0 0.0
    %1025 = vmatprep.subr.mxu0 0.0
    %1026 = vmatpush1.msra.mxu0 0.0
    %1027 = vmatprep.subr.mxu0 0.0
    %1028 = vmatpush1.msra.mxu0 0.0
    %1029 = vmatprep.subr.mxu0 0.0
    %1030 = vmatpush1.msra.mxu0 0.0
    %1031 = vmatprep.subr.mxu0 0.0
    %1032 = vmatpush1.msra.mxu0 0.0
    %1033 = vmatprep.subr.mxu0 0.0
    %1034 = vmatpush1.msra.mxu0 0.0
    %1035 = vmatprep.subr.mxu0 0.0
    %1036 = vmatpush1.msra.mxu0 0.0
    %1037 = vmatprep.subr.mxu0 0.0
    %1038 = vmatpush1.msra.mxu0 0.0
    %1039 = vmatprep.mubr.f32.mxu0 0.0
    %1040 = vmatmul.mubr.f32.gmra.mrb[0].mxu0 %v973
    %v1041 = vpop.f32.mrb[0].mxu0
    %v1042 = vadd.f32 0.0, %v1041
    %v1043 = vpop.f32.mrb[0].mxu0
    %1044 = vdwg.mxu0
    %v1046 = vrot.slane %v1042, 2
    %v1048 = vadd.f32 %v264, %v1046
    %v1049 = vxor.u32 %v1048, 2147483648
    %v1050 = vmul.f32 %v1049, 1.442695
    %v1051 = vpow.pop %v1050
    %v1052 = vadd.f32 %v1051, 1.0
    %v1053 = vrcp.pop %v1052
    %v1054 = vmul.f32 1.0, %v1053
    %v1055 = vtanh.pop %v1048
    %v1057 = vrot.slane %v827, 6
    %v1059 = vmul.f32 %v1054, %v1057
    %1061 = vrot.lane.b32.xlu0 %v1055, 64
    %v1062 = vpop.permute.xlu0 %1061
    %v1064 = vmul.f32 %v1054, %v1062
    %1066 = vrot.lane.b32.xlu0 %v1064, 32
    %v1067 = vpop.permute.xlu0 %1066
    %v1069 = vadd.f32 %v1059, %v1067
    %v1070 = vtanh.pop %v1069
    %1072 = vrot.lane.b32.xlu0 %v1070, 64
    %v1073 = vpop.permute.xlu0 %1072
    %v1075 = vmul.f32 %v1054, %v1073
    %v1077 = vrot.slane %v940, 4
    %1078 = vrot.lane.b32.xlu0 %v1077, 32
    %v1079 = vpop.permute.xlu0 %1078
    %v1080 = vsel %vm60, %v1079, 0
    %1082 = vmatprep.subr.mxu0 0.0
    %1083 = vmatpush1.msra.mxu0 %v368
    %1084 = vmatprep.subr.mxu0 0.0
    %1085 = vmatpush1.msra.mxu0 %v369
    %1086 = vmatprep.subr.mxu0 0.0
    %1087 = vmatpush1.msra.mxu0 %v370
    %1088 = vmatprep.subr.mxu0 0.0
    %1089 = vmatpush1.msra.mxu0 %v371
    %1090 = vmatprep.subr.mxu0 0.0
    %1091 = vmatpush1.msra.mxu0 0.0
    %1092 = vmatprep.subr.mxu0 0.0
    %1093 = vmatpush1.msra.mxu0 0.0
    %1094 = vmatprep.subr.mxu0 0.0
    %1095 = vmatpush1.msra.mxu0 0.0
    %1096 = vmatprep.subr.mxu0 0.0
    %1097 = vmatpush1.msra.mxu0 0.0
    %1098 = vmatprep.subr.mxu0 0.0
    %1099 = vmatpush1.msra.mxu0 0.0
    %1100 = vmatprep.subr.mxu0 0.0
    %1101 = vmatpush1.msra.mxu0 0.0
    %1102 = vmatprep.subr.mxu0 0.0
    %1103 = vmatpush1.msra.mxu0 0.0
    %1104 = vmatprep.subr.mxu0 0.0
    %1105 = vmatpush1.msra.mxu0 0.0
    %1106 = vmatprep.subr.mxu0 0.0
    %1107 = vmatpush1.msra.mxu0 0.0
    %1108 = vmatprep.subr.mxu0 0.0
    %1109 = vmatpush1.msra.mxu0 0.0
    %1110 = vmatprep.subr.mxu0 0.0
    %1111 = vmatpush1.msra.mxu0 0.0
    %1112 = vmatprep.subr.mxu0 0.0
    %1113 = vmatpush1.msra.mxu0 0.0
    %1114 = vmatprep.subr.mxu0 0.0
    %1115 = vmatpush1.msra.mxu0 0.0
    %1116 = vmatprep.subr.mxu0 0.0
    %1117 = vmatpush1.msra.mxu0 0.0
    %1118 = vmatprep.subr.mxu0 0.0
    %1119 = vmatpush1.msra.mxu0 0.0
    %1120 = vmatprep.subr.mxu0 0.0
    %1121 = vmatpush1.msra.mxu0 0.0
    %1122 = vmatprep.subr.mxu0 0.0
    %1123 = vmatpush1.msra.mxu0 0.0
    %1124 = vmatprep.subr.mxu0 0.0
    %1125 = vmatpush1.msra.mxu0 0.0
    %1126 = vmatprep.subr.mxu0 0.0
    %1127 = vmatpush1.msra.mxu0 0.0
    %1128 = vmatprep.subr.mxu0 0.0
    %1129 = vmatpush1.msra.mxu0 0.0
    %1130 = vmatprep.subr.mxu0 0.0
    %1131 = vmatpush1.msra.mxu0 0.0
    %1132 = vmatprep.subr.mxu0 0.0
    %1133 = vmatpush1.msra.mxu0 0.0
    %1134 = vmatprep.subr.mxu0 0.0
    %1135 = vmatpush1.msra.mxu0 0.0
    %1136 = vmatprep.subr.mxu0 0.0
    %1137 = vmatpush1.msra.mxu0 0.0
    %1138 = vmatprep.subr.mxu0 0.0
    %1139 = vmatpush1.msra.mxu0 0.0
    %1140 = vmatprep.subr.mxu0 0.0
    %1141 = vmatpush1.msra.mxu0 0.0
    %1142 = vmatprep.subr.mxu0 0.0
    %1143 = vmatpush1.msra.mxu0 0.0
    %1144 = vmatprep.subr.mxu0 0.0
    %1145 = vmatpush1.msra.mxu0 0.0
    %1146 = vmatprep.mubr.f32.mxu0 0.0
    %1147 = vmatmul.mubr.f32.gmra.mrb[0].mxu0 %v1080
    %v1148 = vpop.f32.mrb[0].mxu0
    %v1149 = vadd.f32 0.0, %v1148
    %v1150 = vpop.f32.mrb[0].mxu0
    %1151 = vdwg.mxu0
    %v1153 = vrot.slane %v1149, 2
    %v1155 = vadd.f32 %v265, %v1153
    %v1156 = vxor.u32 %v1155, 2147483648
    %v1157 = vmul.f32 %v1156, 1.442695
    %v1158 = vpow.pop %v1157
    %v1159 = vadd.f32 %v1158, 1.0
    %v1160 = vrcp.pop %v1159
    %v1161 = vmul.f32 1.0, %v1160
    %v1162 = vtanh.pop %v1155
    %v1164 = vrot.slane %v934, 6
    %v1166 = vmul.f32 %v1161, %v1164
    %1168 = vrot.lane.b32.xlu0 %v1162, 64
    %v1169 = vpop.permute.xlu0 %1168
    %v1171 = vmul.f32 %v1161, %v1169
    %1173 = vrot.lane.b32.xlu0 %v1171, 32
    %v1174 = vpop.permute.xlu0 %1173
    %v1176 = vadd.f32 %v1166, %v1174
    %v1177 = vtanh.pop %v1176
    %1179 = vrot.lane.b32.xlu0 %v1177, 64
    %v1180 = vpop.permute.xlu0 %1179
    %v1182 = vmul.f32 %v1161, %v1180
    %vm1183 = vcmp.gt.f32.partialorder %v262, 3.0
    %v1184 = vsel %vm1183, 1, 0
    %v1185 = vcvt.s32.f32 %v1184
    %1187 = vset.pattern.permute.xlu0 0
    %1188 = vperm.xlu0 %1187, %v1185
    %v1189 = vpop.permute.xlu0 %1188
    %v1190 = vrot.slane %v1189, 2
    %v1192 = vmul.f32 %v1075, %v1190
    %v1194 = vrot.slane %v1192, 6
    %v1196 = vadd.f32 %v954, %v1194
    %vm1197 = vcmp.gt.f32.partialorder %v263, 3.0
    %v1198 = vsel %vm1197, 1, 0
    %v1199 = vcvt.s32.f32 %v1198
    %1201 = vset.pattern.permute.xlu0 0
    %1202 = vperm.xlu0 %1201, %v1199
    %v1203 = vpop.permute.xlu0 %1202
    %v1204 = vrot.slane %v1203, 2
    %v1206 = vmul.f32 %v1182, %v1204
    %v1208 = vrot.slane %v1206, 6
    %v1210 = vadd.f32 %v968, %v1208
    %v1211 = vld [vmem:[%s159] sm:$0xff]
    %v1212 = vld [vmem:[%s260] sm:$0xff]
    %v1214 = vrot.slane %v1075, 6
    %1215 = vrot.lane.b32.xlu0 %v1214, 32
    %v1216 = vpop.permute.xlu0 %1215
    %v1217 = vsel %vm60, %v1216, 0
    %1219 = vmatprep.subr.mxu0 0.0
    %1220 = vmatpush1.msra.mxu0 %v266
    %1221 = vmatprep.subr.mxu0 0.0
    %1222 = vmatpush1.msra.mxu0 %v267
    %1223 = vmatprep.subr.mxu0 0.0
    %1224 = vmatpush1.msra.mxu0 %v268
    %1225 = vmatprep.subr.mxu0 0.0
    %1226 = vmatpush1.msra.mxu0 %v269
    %1227 = vmatprep.subr.mxu0 0.0
    %1228 = vmatpush1.msra.mxu0 0.0
    %1229 = vmatprep.subr.mxu0 0.0
    %1230 = vmatpush1.msra.mxu0 0.0
    %1231 = vmatprep.subr.mxu0 0.0
    %1232 = vmatpush1.msra.mxu0 0.0
    %1233 = vmatprep.subr.mxu0 0.0
    %1234 = vmatpush1.msra.mxu0 0.0
    %1235 = vmatprep.subr.mxu0 0.0
    %1236 = vmatpush1.msra.mxu0 0.0
    %1237 = vmatprep.subr.mxu0 0.0
    %1238 = vmatpush1.msra.mxu0 0.0
    %1239 = vmatprep.subr.mxu0 0.0
    %1240 = vmatpush1.msra.mxu0 0.0
    %1241 = vmatprep.subr.mxu0 0.0
    %1242 = vmatpush1.msra.mxu0 0.0
    %1243 = vmatprep.subr.mxu0 0.0
    %1244 = vmatpush1.msra.mxu0 0.0
    %1245 = vmatprep.subr.mxu0 0.0
    %1246 = vmatpush1.msra.mxu0 0.0
    %1247 = vmatprep.subr.mxu0 0.0
    %1248 = vmatpush1.msra.mxu0 0.0
    %1249 = vmatprep.subr.mxu0 0.0
    %1250 = vmatpush1.msra.mxu0 0.0
    %1251 = vmatprep.subr.mxu0 0.0
    %1252 = vmatpush1.msra.mxu0 0.0
    %1253 = vmatprep.subr.mxu0 0.0
    %1254 = vmatpush1.msra.mxu0 0.0
    %1255 = vmatprep.subr.mxu0 0.0
    %1256 = vmatpush1.msra.mxu0 0.0
    %1257 = vmatprep.subr.mxu0 0.0
    %1258 = vmatpush1.msra.mxu0 0.0
    %1259 = vmatprep.subr.mxu0 0.0
    %1260 = vmatpush1.msra.mxu0 0.0
    %1261 = vmatprep.subr.mxu0 0.0
    %1262 = vmatpush1.msra.mxu0 0.0
    %1263 = vmatprep.subr.mxu0 0.0
    %1264 = vmatpush1.msra.mxu0 0.0
    %1265 = vmatprep.subr.mxu0 0.0
    %1266 = vmatpush1.msra.mxu0 0.0
    %1267 = vmatprep.subr.mxu0 0.0
    %1268 = vmatpush1.msra.mxu0 0.0
    %1269 = vmatprep.subr.mxu0 0.0
    %1270 = vmatpush1.msra.mxu0 0.0
    %1271 = vmatprep.subr.mxu0 0.0
    %1272 = vmatpush1.msra.mxu0 0.0
    %1273 = vmatprep.subr.mxu0 0.0
    %1274 = vmatpush1.msra.mxu0 0.0
    %1275 = vmatprep.subr.mxu0 0.0
    %1276 = vmatpush1.msra.mxu0 0.0
    %1277 = vmatprep.subr.mxu0 0.0
    %1278 = vmatpush1.msra.mxu0 0.0
    %1279 = vmatprep.subr.mxu0 0.0
    %1280 = vmatpush1.msra.mxu0 0.0
    %1281 = vmatprep.subr.mxu0 0.0
    %1282 = vmatpush1.msra.mxu0 0.0
    %1283 = vmatprep.mubr.f32.mxu0 0.0
    %1284 = vmatmul.mubr.f32.gmra.mrb[0].mxu0 %v1217
    %v1285 = vpop.f32.mrb[0].mxu0
    %v1286 = vadd.f32 0.0, %v1285
    %v1287 = vpop.f32.mrb[0].mxu0
    %1288 = vdwg.mxu0
    %v1289 = vadd.f32 %v1211, %v1286
    %v1290 = vxor.u32 %v1289, 2147483648
    %v1291 = vmul.f32 %v1290, 1.442695
    %v1292 = vpow.pop %v1291
    %v1293 = vadd.f32 %v1292, 1.0
    %v1294 = vrcp.pop %v1293
    %v1295 = vmul.f32 1.0, %v1294
    %v1296 = vtanh.pop %v1289
    %v1298 = vrot.slane %v1069, 6
    %v1300 = vmul.f32 %v1295, %v1298
    %1302 = vrot.lane.b32.xlu0 %v1296, 64
    %v1303 = vpop.permute.xlu0 %1302
    %v1305 = vmul.f32 %v1295, %v1303
    %1307 = vrot.lane.b32.xlu0 %v1305, 32
    %v1308 = vpop.permute.xlu0 %1307
    %v1310 = vadd.f32 %v1300, %v1308
    %v1311 = vtanh.pop %v1310
    %1313 = vrot.lane.b32.xlu0 %v1311, 64
    %v1314 = vpop.permute.xlu0 %1313
    %v1316 = vmul.f32 %v1295, %v1314
    %v1318 = vrot.slane %v1182, 6
    %1319 = vrot.lane.b32.xlu0 %v1318, 32
    %v1320 = vpop.permute.xlu0 %1319
    %v1321 = vsel %vm60, %v1320, 0
    %1323 = vmatprep.subr.mxu0 0.0
    %1324 = vmatpush1.msra.mxu0 %v368
    %1325 = vmatprep.subr.mxu0 0.0
    %1326 = vmatpush1.msra.mxu0 %v369
    %1327 = vmatprep.subr.mxu0 0.0
    %1328 = vmatpush1.msra.mxu0 %v370
    %1329 = vmatprep.subr.mxu0 0.0
    %1330 = vmatpush1.msra.mxu0 %v371
    %1331 = vmatprep.subr.mxu0 0.0
    %1332 = vmatpush1.msra.mxu0 0.0
    %1333 = vmatprep.subr.mxu0 0.0
    %1334 = vmatpush1.msra.mxu0 0.0
    %1335 = vmatprep.subr.mxu0 0.0
    %1336 = vmatpush1.msra.mxu0 0.0
    %1337 = vmatprep.subr.mxu0 0.0
    %1338 = vmatpush1.msra.mxu0 0.0
    %1339 = vmatprep.subr.mxu0 0.0
    %1340 = vmatpush1.msra.mxu0 0.0
    %1341 = vmatprep.subr.mxu0 0.0
    %1342 = vmatpush1.msra.mxu0 0.0
    %1343 = vmatprep.subr.mxu0 0.0
    %1344 = vmatpush1.msra.mxu0 0.0
    %1345 = vmatprep.subr.mxu0 0.0
    %1346 = vmatpush1.msra.mxu0 0.0
    %1347 = vmatprep.subr.mxu0 0.0
    %1348 = vmatpush1.msra.mxu0 0.0
    %1349 = vmatprep.subr.mxu0 0.0
    %1350 = vmatpush1.msra.mxu0 0.0
    %1351 = vmatprep.subr.mxu0 0.0
    %1352 = vmatpush1.msra.mxu0 0.0
    %1353 = vmatprep.subr.mxu0 0.0
    %1354 = vmatpush1.msra.mxu0 0.0
    %1355 = vmatprep.subr.mxu0 0.0
    %1356 = vmatpush1.msra.mxu0 0.0
    %1357 = vmatprep.subr.mxu0 0.0
    %1358 = vmatpush1.msra.mxu0 0.0
    %1359 = vmatprep.subr.mxu0 0.0
    %1360 = vmatpush1.msra.mxu0 0.0
    %1361 = vmatprep.subr.mxu0 0.0
    %1362 = vmatpush1.msra.mxu0 0.0
    %1363 = vmatprep.subr.mxu0 0.0
    %1364 = vmatpush1.msra.mxu0 0.0
    %1365 = vmatprep.subr.mxu0 0.0
    %1366 = vmatpush1.msra.mxu0 0.0
    %1367 = vmatprep.subr.mxu0 0.0
    %1368 = vmatpush1.msra.mxu0 0.0
    %1369 = vmatprep.subr.mxu0 0.0
    %1370 = vmatpush1.msra.mxu0 0.0
    %1371 = vmatprep.subr.mxu0 0.0
    %1372 = vmatpush1.msra.mxu0 0.0
    %1373 = vmatprep.subr.mxu0 0.0
    %1374 = vmatpush1.msra.mxu0 0.0
    %1375 = vmatprep.subr.mxu0 0.0
    %1376 = vmatpush1.msra.mxu0 0.0
    %1377 = vmatprep.subr.mxu0 0.0
    %1378 = vmatpush1.msra.mxu0 0.0
    %1379 = vmatprep.subr.mxu0 0.0
    %1380 = vmatpush1.msra.mxu0 0.0
    %1381 = vmatprep.subr.mxu0 0.0
    %1382 = vmatpush1.msra.mxu0 0.0
    %1383 = vmatprep.subr.mxu0 0.0
    %1384 = vmatpush1.msra.mxu0 0.0
    %1385 = vmatprep.subr.mxu0 0.0
    %1386 = vmatpush1.msra.mxu0 0.0
    %1387 = vmatprep.mubr.f32.mxu0 0.0
    %1388 = vmatmul.mubr.f32.gmra.mrb[0].mxu0 %v1321
    %v1389 = vpop.f32.mrb[0].mxu0
    %v1390 = vadd.f32 0.0, %v1389
    %v1391 = vpop.f32.mrb[0].mxu0
    %1392 = vdwg.mxu0
    %v1393 = vadd.f32 %v1212, %v1390
    %v1394 = vxor.u32 %v1393, 2147483648
    %v1395 = vmul.f32 %v1394, 1.442695
    %v1396 = vpow.pop %v1395
    %v1397 = vadd.f32 %v1396, 1.0
    %v1398 = vrcp.pop %v1397
    %v1399 = vmul.f32 1.0, %v1398
    %v1400 = vtanh.pop %v1393
    %v1402 = vrot.slane %v1176, 6
    %v1404 = vmul.f32 %v1399, %v1402
    %1406 = vrot.lane.b32.xlu0 %v1400, 64
    %v1407 = vpop.permute.xlu0 %1406
    %v1409 = vmul.f32 %v1399, %v1407
    %1411 = vrot.lane.b32.xlu0 %v1409, 32
    %v1412 = vpop.permute.xlu0 %1411
    %v1414 = vadd.f32 %v1404, %v1412
    %v1415 = vtanh.pop %v1414
    %1417 = vrot.lane.b32.xlu0 %v1415, 64
    %v1418 = vpop.permute.xlu0 %1417
    %v1420 = vmul.f32 %v1399, %v1418
    %vm1421 = vcmp.gt.f32.partialorder %v262, 4.0
    %v1422 = vsel %vm1421, 1, 0
    %v1423 = vcvt.s32.f32 %v1422
    %1425 = vset.pattern.permute.xlu0 0
    %1426 = vperm.xlu0 %1425, %v1423
    %v1427 = vpop.permute.xlu0 %1426
    %v1429 = vmul.f32 %v1316, %v1427
    %v1430 = vadd.f32 %v1196, %v1429
    %vm1431 = vcmp.gt.f32.partialorder %v263, 4.0
    %v1432 = vsel %vm1431, 1, 0
    %v1433 = vcvt.s32.f32 %v1432
    %1435 = vset.pattern.permute.xlu0 0
    %1436 = vperm.xlu0 %1435, %v1433
    %v1437 = vpop.permute.xlu0 %1436
    %v1439 = vmul.f32 %v1420, %v1437
    %v1440 = vadd.f32 %v1210, %v1439
    %1442 = vrot.lane.b32.xlu0 %v1316, 32
    %v1443 = vpop.permute.xlu0 %1442
    %v1444 = vsel %vm60, %v1443, 0
    %1446 = vmatprep.subr.mxu0 0.0
    %1447 = vmatpush1.msra.mxu0 %v266
    %1448 = vmatprep.subr.mxu0 0.0
    %1449 = vmatpush1.msra.mxu0 %v267
    %1450 = vmatprep.subr.mxu0 0.0
    %1451 = vmatpush1.msra.mxu0 %v268
    %1452 = vmatprep.subr.mxu0 0.0
    %1453 = vmatpush1.msra.mxu0 %v269
    %1454 = vmatprep.subr.mxu0 0.0
    %1455 = vmatpush1.msra.mxu0 0.0
    %1456 = vmatprep.subr.mxu0 0.0
    %1457 = vmatpush1.msra.mxu0 0.0
    %1458 = vmatprep.subr.mxu0 0.0
    %1459 = vmatpush1.msra.mxu0 0.0
    %1460 = vmatprep.subr.mxu0 0.0
    %1461 = vmatpush1.msra.mxu0 0.0
    %1462 = vmatprep.subr.mxu0 0.0
    %1463 = vmatpush1.msra.mxu0 0.0
    %1464 = vmatprep.subr.mxu0 0.0
    %1465 = vmatpush1.msra.mxu0 0.0
    %1466 = vmatprep.subr.mxu0 0.0
    %1467 = vmatpush1.msra.mxu0 0.0
    %1468 = vmatprep.subr.mxu0 0.0
    %1469 = vmatpush1.msra.mxu0 0.0
    %1470 = vmatprep.subr.mxu0 0.0
    %1471 = vmatpush1.msra.mxu0 0.0
    %1472 = vmatprep.subr.mxu0 0.0
    %1473 = vmatpush1.msra.mxu0 0.0
    %1474 = vmatprep.subr.mxu0 0.0
    %1475 = vmatpush1.msra.mxu0 0.0
    %1476 = vmatprep.subr.mxu0 0.0
    %1477 = vmatpush1.msra.mxu0 0.0
    %1478 = vmatprep.subr.mxu0 0.0
    %1479 = vmatpush1.msra.mxu0 0.0
    %1480 = vmatprep.subr.mxu0 0.0
    %1481 = vmatpush1.msra.mxu0 0.0
    %1482 = vmatprep.subr.mxu0 0.0
    %1483 = vmatpush1.msra.mxu0 0.0
    %1484 = vmatprep.subr.mxu0 0.0
    %1485 = vmatpush1.msra.mxu0 0.0
    %1486 = vmatprep.subr.mxu0 0.0
    %1487 = vmatpush1.msra.mxu0 0.0
    %1488 = vmatprep.subr.mxu0 0.0
    %1489 = vmatpush1.msra.mxu0 0.0
    %1490 = vmatprep.subr.mxu0 0.0
    %1491 = vmatpush1.msra.mxu0 0.0
    %1492 = vmatprep.subr.mxu0 0.0
    %1493 = vmatpush1.msra.mxu0 0.0
    %1494 = vmatprep.subr.mxu0 0.0
    %1495 = vmatpush1.msra.mxu0 0.0
    %1496 = vmatprep.subr.mxu0 0.0
    %1497 = vmatpush1.msra.mxu0 0.0
    %1498 = vmatprep.subr.mxu0 0.0
    %1499 = vmatpush1.msra.mxu0 0.0
    %1500 = vmatprep.subr.mxu0 0.0
    %1501 = vmatpush1.msra.mxu0 0.0
    %1502 = vmatprep.subr.mxu0 0.0
    %1503 = vmatpush1.msra.mxu0 0.0
    %1504 = vmatprep.subr.mxu0 0.0
    %1505 = vmatpush1.msra.mxu0 0.0
    %1506 = vmatprep.subr.mxu0 0.0
    %1507 = vmatpush1.msra.mxu0 0.0
    %1508 = vmatprep.subr.mxu0 0.0
    %1509 = vmatpush1.msra.mxu0 0.0
    %1510 = vmatprep.mubr.f32.mxu0 0.0
    %1511 = vmatmul.mubr.f32.gmra.mrb[0].mxu0 %v1444
    %v1512 = vpop.f32.mrb[0].mxu0
    %v1513 = vadd.f32 0.0, %v1512
    %v1514 = vpop.f32.mrb[0].mxu0
    %1515 = vdwg.mxu0
    %v1517 = vrot.slane %v1513, 6
    %v1519 = vadd.f32 %v1211, %v1517
    %v1520 = vxor.u32 %v1519, 2147483648
    %v1521 = vmul.f32 %v1520, 1.442695
    %v1522 = vpow.pop %v1521
    %v1523 = vadd.f32 %v1522, 1.0
    %v1524 = vrcp.pop %v1523
    %v1525 = vmul.f32 1.0, %v1524
    %v1526 = vtanh.pop %v1519
    %v1528 = vrot.slane %v1310, 6
    %v1530 = vmul.f32 %v1525, %v1528
    %1532 = vrot.lane.b32.xlu0 %v1526, 64
    %v1533 = vpop.permute.xlu0 %1532
    %v1535 = vmul.f32 %v1525, %v1533
    %1537 = vrot.lane.b32.xlu0 %v1535, 32
    %v1538 = vpop.permute.xlu0 %1537
    %v1540 = vadd.f32 %v1530, %v1538
    %v1541 = vtanh.pop %v1540
    %1543 = vrot.lane.b32.xlu0 %v1541, 64
    %v1544 = vpop.permute.xlu0 %1543
    %v1546 = vmul.f32 %v1525, %v1544
    %1548 = vrot.lane.b32.xlu0 %v1420, 32
    %v1549 = vpop.permute.xlu0 %1548
    %v1550 = vsel %vm60, %v1549, 0
    %1552 = vmatprep.subr.mxu0 0.0
    %1553 = vmatpush1.msra.mxu0 %v368
    %1554 = vmatprep.subr.mxu0 0.0
    %1555 = vmatpush1.msra.mxu0 %v369
    %1556 = vmatprep.subr.mxu0 0.0
    %1557 = vmatpush1.msra.mxu0 %v370
    %1558 = vmatprep.subr.mxu0 0.0
    %1559 = vmatpush1.msra.mxu0 %v371
    %1560 = vmatprep.subr.mxu0 0.0
    %1561 = vmatpush1.msra.mxu0 0.0
    %1562 = vmatprep.subr.mxu0 0.0
    %1563 = vmatpush1.msra.mxu0 0.0
    %1564 = vmatprep.subr.mxu0 0.0
    %1565 = vmatpush1.msra.mxu0 0.0
    %1566 = vmatprep.subr.mxu0 0.0
    %1567 = vmatpush1.msra.mxu0 0.0
    %1568 = vmatprep.subr.mxu0 0.0
    %1569 = vmatpush1.msra.mxu0 0.0
    %1570 = vmatprep.subr.mxu0 0.0
    %1571 = vmatpush1.msra.mxu0 0.0
    %1572 = vmatprep.subr.mxu0 0.0
    %1573 = vmatpush1.msra.mxu0 0.0
    %1574 = vmatprep.subr.mxu0 0.0
    %1575 = vmatpush1.msra.mxu0 0.0
    %1576 = vmatprep.subr.mxu0 0.0
    %1577 = vmatpush1.msra.mxu0 0.0
    %1578 = vmatprep.subr.mxu0 0.0
    %1579 = vmatpush1.msra.mxu0 0.0
    %1580 = vmatprep.subr.mxu0 0.0
    %1581 = vmatpush1.msra.mxu0 0.0
    %1582 = vmatprep.subr.mxu0 0.0
    %1583 = vmatpush1.msra.mxu0 0.0
    %1584 = vmatprep.subr.mxu0 0.0
    %1585 = vmatpush1.msra.mxu0 0.0
    %1586 = vmatprep.subr.mxu0 0.0
    %1587 = vmatpush1.msra.mxu0 0.0
    %1588 = vmatprep.subr.mxu0 0.0
    %1589 = vmatpush1.msra.mxu0 0.0
    %1590 = vmatprep.subr.mxu0 0.0
    %1591 = vmatpush1.msra.mxu0 0.0
    %1592 = vmatprep.subr.mxu0 0.0
    %1593 = vmatpush1.msra.mxu0 0.0
    %1594 = vmatprep.subr.mxu0 0.0
    %1595 = vmatpush1.msra.mxu0 0.0
    %1596 = vmatprep.subr.mxu0 0.0
    %1597 = vmatpush1.msra.mxu0 0.0
    %1598 = vmatprep.subr.mxu0 0.0
    %1599 = vmatpush1.msra.mxu0 0.0
    %1600 = vmatprep.subr.mxu0 0.0
    %1601 = vmatpush1.msra.mxu0 0.0
    %1602 = vmatprep.subr.mxu0 0.0
    %1603 = vmatpush1.msra.mxu0 0.0
    %1604 = vmatprep.subr.mxu0 0.0
    %1605 = vmatpush1.msra.mxu0 0.0
    %1606 = vmatprep.subr.mxu0 0.0
    %1607 = vmatpush1.msra.mxu0 0.0
    %1608 = vmatprep.subr.mxu0 0.0
    %1609 = vmatpush1.msra.mxu0 0.0
    %1610 = vmatprep.subr.mxu0 0.0
    %1611 = vmatpush1.msra.mxu0 0.0
    %1612 = vmatprep.subr.mxu0 0.0
    %1613 = vmatpush1.msra.mxu0 0.0
    %1614 = vmatprep.subr.mxu0 0.0
    %1615 = vmatpush1.msra.mxu0 0.0
    %1616 = vmatprep.mubr.f32.mxu0 0.0
    %1617 = vmatmul.mubr.f32.gmra.mrb[0].mxu0 %v1550
    %v1618 = vpop.f32.mrb[0].mxu0
    %v1619 = vadd.f32 0.0, %v1618
    %v1620 = vpop.f32.mrb[0].mxu0
    %1621 = vdwg.mxu0
    %v1623 = vrot.slane %v1619, 6
    %v1625 = vadd.f32 %v1212, %v1623
    %v1626 = vxor.u32 %v1625, 2147483648
    %v1627 = vmul.f32 %v1626, 1.442695
    %v1628 = vpow.pop %v1627
    %v1629 = vadd.f32 %v1628, 1.0
    %v1630 = vrcp.pop %v1629
    %v1631 = vmul.f32 1.0, %v1630
    %v1632 = vtanh.pop %v1625
    %v1634 = vrot.slane %v1414, 6
    %v1636 = vmul.f32 %v1631, %v1634
    %1638 = vrot.lane.b32.xlu0 %v1632, 64
    %v1639 = vpop.permute.xlu0 %1638
    %v1641 = vmul.f32 %v1631, %v1639
    %1643 = vrot.lane.b32.xlu0 %v1641, 32
    %v1644 = vpop.permute.xlu0 %1643
    %v1646 = vadd.f32 %v1636, %v1644
    %v1647 = vtanh.pop %v1646
    %1649 = vrot.lane.b32.xlu0 %v1647, 64
    %v1650 = vpop.permute.xlu0 %1649
    %v1652 = vmul.f32 %v1631, %v1650
    %vm1653 = vcmp.gt.f32.partialorder %v262, 5.0
    %v1654 = vsel %vm1653, 1, 0
    %v1655 = vcvt.s32.f32 %v1654
    %1657 = vset.pattern.permute.xlu0 0
    %1658 = vperm.xlu0 %1657, %v1655
    %v1659 = vpop.permute.xlu0 %1658
    %v1660 = vrot.slane %v1659, 6
    %v1662 = vmul.f32 %v1546, %v1660
    %v1664 = vrot.slane %v1662, 2
    %v1666 = vadd.f32 %v1430, %v1664
    %vm1667 = vcmp.gt.f32.partialorder %v263, 5.0
    %v1668 = vsel %vm1667, 1, 0
    %v1669 = vcvt.s32.f32 %v1668
    %1671 = vset.pattern.permute.xlu0 0
    %1672 = vperm.xlu0 %1671, %v1669
    %v1673 = vpop.permute.xlu0 %1672
    %v1674 = vrot.slane %v1673, 6
    %v1676 = vmul.f32 %v1652, %v1674
    %v1678 = vrot.slane %v1676, 2
    %v1680 = vadd.f32 %v1440, %v1678
    %v1682 = vrot.slane %v1546, 2
    %1683 = vrot.lane.b32.xlu0 %v1682, 32
    %v1684 = vpop.permute.xlu0 %1683
    %v1685 = vsel %vm60, %v1684, 0
    %1687 = vmatprep.subr.mxu0 0.0
    %1688 = vmatpush1.msra.mxu0 %v266
    %1689 = vmatprep.subr.mxu0 0.0
    %1690 = vmatpush1.msra.mxu0 %v267
    %1691 = vmatprep.subr.mxu0 0.0
    %1692 = vmatpush1.msra.mxu0 %v268
    %1693 = vmatprep.subr.mxu0 0.0
    %1694 = vmatpush1.msra.mxu0 %v269
    %1695 = vmatprep.subr.mxu0 0.0
    %1696 = vmatpush1.msra.mxu0 0.0
    %1697 = vmatprep.subr.mxu0 0.0
    %1698 = vmatpush1.msra.mxu0 0.0
    %1699 = vmatprep.subr.mxu0 0.0
    %1700 = vmatpush1.msra.mxu0 0.0
    %1701 = vmatprep.subr.mxu0 0.0
    %1702 = vmatpush1.msra.mxu0 0.0
    %1703 = vmatprep.subr.mxu0 0.0
    %1704 = vmatpush1.msra.mxu0 0.0
    %1705 = vmatprep.subr.mxu0 0.0
    %1706 = vmatpush1.msra.mxu0 0.0
    %1707 = vmatprep.subr.mxu0 0.0
    %1708 = vmatpush1.msra.mxu0 0.0
    %1709 = vmatprep.subr.mxu0 0.0
    %1710 = vmatpush1.msra.mxu0 0.0
    %1711 = vmatprep.subr.mxu0 0.0
    %1712 = vmatpush1.msra.mxu0 0.0
    %1713 = vmatprep.subr.mxu0 0.0
    %1714 = vmatpush1.msra.mxu0 0.0
    %1715 = vmatprep.subr.mxu0 0.0
    %1716 = vmatpush1.msra.mxu0 0.0
    %1717 = vmatprep.subr.mxu0 0.0
    %1718 = vmatpush1.msra.mxu0 0.0
    %1719 = vmatprep.subr.mxu0 0.0
    %1720 = vmatpush1.msra.mxu0 0.0
    %1721 = vmatprep.subr.mxu0 0.0
    %1722 = vmatpush1.msra.mxu0 0.0
    %1723 = vmatprep.subr.mxu0 0.0
    %1724 = vmatpush1.msra.mxu0 0.0
    %1725 = vmatprep.subr.mxu0 0.0
    %1726 = vmatpush1.msra.mxu0 0.0
    %1727 = vmatprep.subr.mxu0 0.0
    %1728 = vmatpush1.msra.mxu0 0.0
    %1729 = vmatprep.subr.mxu0 0.0
    %1730 = vmatpush1.msra.mxu0 0.0
    %1731 = vmatprep.subr.mxu0 0.0
    %1732 = vmatpush1.msra.mxu0 0.0
    %1733 = vmatprep.subr.mxu0 0.0
    %1734 = vmatpush1.msra.mxu0 0.0
    %1735 = vmatprep.subr.mxu0 0.0
    %1736 = vmatpush1.msra.mxu0 0.0
    %1737 = vmatprep.subr.mxu0 0.0
    %1738 = vmatpush1.msra.mxu0 0.0
    %1739 = vmatprep.subr.mxu0 0.0
    %1740 = vmatpush1.msra.mxu0 0.0
    %1741 = vmatprep.subr.mxu0 0.0
    %1742 = vmatpush1.msra.mxu0 0.0
    %1743 = vmatprep.subr.mxu0 0.0
    %1744 = vmatpush1.msra.mxu0 0.0
    %1745 = vmatprep.subr.mxu0 0.0
    %1746 = vmatpush1.msra.mxu0 0.0
    %1747 = vmatprep.subr.mxu0 0.0
    %1748 = vmatpush1.msra.mxu0 0.0
    %1749 = vmatprep.subr.mxu0 0.0
    %1750 = vmatpush1.msra.mxu0 0.0
    %1751 = vmatprep.mubr.f32.mxu0 0.0
    %1752 = vmatmul.mubr.f32.gmra.mrb[0].mxu0 %v1685
    %v1753 = vpop.f32.mrb[0].mxu0
    %v1754 = vadd.f32 0.0, %v1753
    %v1755 = vpop.f32.mrb[0].mxu0
    %1756 = vdwg.mxu0
    %v1758 = vrot.slane %v1754, 4
    %v1760 = vadd.f32 %v1211, %v1758
    %v1761 = vxor.u32 %v1760, 2147483648
    %v1762 = vmul.f32 %v1761, 1.442695
    %v1763 = vpow.pop %v1762
    %v1764 = vadd.f32 %v1763, 1.0
    %v1765 = vrcp.pop %v1764
    %v1766 = vmul.f32 1.0, %v1765
    %v1767 = vtanh.pop %v1760
    %v1769 = vrot.slane %v1540, 6
    %v1771 = vmul.f32 %v1766, %v1769
    %1773 = vrot.lane.b32.xlu0 %v1767, 64
    %v1774 = vpop.permute.xlu0 %1773
    %v1776 = vmul.f32 %v1766, %v1774
    %1778 = vrot.lane.b32.xlu0 %v1776, 32
    %v1779 = vpop.permute.xlu0 %1778
    %v1781 = vadd.f32 %v1771, %v1779
    %v1782 = vtanh.pop %v1781
    %1784 = vrot.lane.b32.xlu0 %v1782, 64
    %v1785 = vpop.permute.xlu0 %1784
    %v1787 = vmul.f32 %v1766, %v1785
    %v1789 = vrot.slane %v1652, 2
    %1790 = vrot.lane.b32.xlu0 %v1789, 32
    %v1791 = vpop.permute.xlu0 %1790
    %v1792 = vsel %vm60, %v1791, 0
    %1794 = vmatprep.subr.mxu0 0.0
    %1795 = vmatpush1.msra.mxu0 %v368
    %1796 = vmatprep.subr.mxu0 0.0
    %1797 = vmatpush1.msra.mxu0 %v369
    %1798 = vmatprep.subr.mxu0 0.0
    %1799 = vmatpush1.msra.mxu0 %v370
    %1800 = vmatprep.subr.mxu0 0.0
    %1801 = vmatpush1.msra.mxu0 %v371
    %1802 = vmatprep.subr.mxu0 0.0
    %1803 = vmatpush1.msra.mxu0 0.0
    %1804 = vmatprep.subr.mxu0 0.0
    %1805 = vmatpush1.msra.mxu0 0.0
    %1806 = vmatprep.subr.mxu0 0.0
    %1807 = vmatpush1.msra.mxu0 0.0
    %1808 = vmatprep.subr.mxu0 0.0
    %1809 = vmatpush1.msra.mxu0 0.0
    %1810 = vmatprep.subr.mxu0 0.0
    %1811 = vmatpush1.msra.mxu0 0.0
    %1812 = vmatprep.subr.mxu0 0.0
    %1813 = vmatpush1.msra.mxu0 0.0
    %1814 = vmatprep.subr.mxu0 0.0
    %1815 = vmatpush1.msra.mxu0 0.0
    %1816 = vmatprep.subr.mxu0 0.0
    %1817 = vmatpush1.msra.mxu0 0.0
    %1818 = vmatprep.subr.mxu0 0.0
    %1819 = vmatpush1.msra.mxu0 0.0
    %1820 = vmatprep.subr.mxu0 0.0
    %1821 = vmatpush1.msra.mxu0 0.0
    %1822 = vmatprep.subr.mxu0 0.0
    %1823 = vmatpush1.msra.mxu0 0.0
    %1824 = vmatprep.subr.mxu0 0.0
    %1825 = vmatpush1.msra.mxu0 0.0
    %1826 = vmatprep.subr.mxu0 0.0
    %1827 = vmatpush1.msra.mxu0 0.0
    %1828 = vmatprep.subr.mxu0 0.0
    %1829 = vmatpush1.msra.mxu0 0.0
    %1830 = vmatprep.subr.mxu0 0.0
    %1831 = vmatpush1.msra.mxu0 0.0
    %1832 = vmatprep.subr.mxu0 0.0
    %1833 = vmatpush1.msra.mxu0 0.0
    %1834 = vmatprep.subr.mxu0 0.0
    %1835 = vmatpush1.msra.mxu0 0.0
    %1836 = vmatprep.subr.mxu0 0.0
    %1837 = vmatpush1.msra.mxu0 0.0
    %1838 = vmatprep.subr.mxu0 0.0
    %1839 = vmatpush1.msra.mxu0 0.0
    %1840 = vmatprep.subr.mxu0 0.0
    %1841 = vmatpush1.msra.mxu0 0.0
    %1842 = vmatprep.subr.mxu0 0.0
    %1843 = vmatpush1.msra.mxu0 0.0
    %1844 = vmatprep.subr.mxu0 0.0
    %1845 = vmatpush1.msra.mxu0 0.0
    %1846 = vmatprep.subr.mxu0 0.0
    %1847 = vmatpush1.msra.mxu0 0.0
    %1848 = vmatprep.subr.mxu0 0.0
    %1849 = vmatpush1.msra.mxu0 0.0
    %1850 = vmatprep.subr.mxu0 0.0
    %1851 = vmatpush1.msra.mxu0 0.0
    %1852 = vmatprep.subr.mxu0 0.0
    %1853 = vmatpush1.msra.mxu0 0.0
    %1854 = vmatprep.subr.mxu0 0.0
    %1855 = vmatpush1.msra.mxu0 0.0
    %1856 = vmatprep.subr.mxu0 0.0
    %1857 = vmatpush1.msra.mxu0 0.0
    %1858 = vmatprep.mubr.f32.mxu0 0.0
    %1859 = vmatmul.mubr.f32.gmra.mrb[0].mxu0 %v1792
    %v1860 = vpop.f32.mrb[0].mxu0
    %v1861 = vadd.f32 0.0, %v1860
    %v1862 = vpop.f32.mrb[0].mxu0
    %1863 = vdwg.mxu0
    %v1865 = vrot.slane %v1861, 4
    %v1867 = vadd.f32 %v1212, %v1865
    %v1868 = vxor.u32 %v1867, 2147483648
    %v1869 = vmul.f32 %v1868, 1.442695
    %v1870 = vpow.pop %v1869
    %v1871 = vadd.f32 %v1870, 1.0
    %v1872 = vrcp.pop %v1871
    %v1873 = vmul.f32 1.0, %v1872
    %v1874 = vtanh.pop %v1867
    %v1876 = vrot.slane %v1646, 6
    %v1878 = vmul.f32 %v1873, %v1876
    %1880 = vrot.lane.b32.xlu0 %v1874, 64
    %v1881 = vpop.permute.xlu0 %1880
    %v1883 = vmul.f32 %v1873, %v1881
    %1885 = vrot.lane.b32.xlu0 %v1883, 32
    %v1886 = vpop.permute.xlu0 %1885
    %v1888 = vadd.f32 %v1878, %v1886
    %v1889 = vtanh.pop %v1888
    %1891 = vrot.lane.b32.xlu0 %v1889, 64
    %v1892 = vpop.permute.xlu0 %1891
    %v1894 = vmul.f32 %v1873, %v1892
    %vm1895 = vcmp.gt.f32.partialorder %v262, 6.0
    %v1896 = vsel %vm1895, 1, 0
    %v1897 = vcvt.s32.f32 %v1896
    %1899 = vset.pattern.permute.xlu0 0
    %1900 = vperm.xlu0 %1899, %v1897
    %v1901 = vpop.permute.xlu0 %1900
    %v1902 = vrot.slane %v1901, 4
    %v1904 = vmul.f32 %v1787, %v1902
    %v1906 = vrot.slane %v1904, 4
    %v1908 = vadd.f32 %v1666, %v1906
    %vm1909 = vcmp.gt.f32.partialorder %v263, 6.0
    %v1910 = vsel %vm1909, 1, 0
    %v1911 = vcvt.s32.f32 %v1910
    %1913 = vset.pattern.permute.xlu0 0
    %1914 = vperm.xlu0 %1913, %v1911
    %v1915 = vpop.permute.xlu0 %1914
    %v1916 = vrot.slane %v1915, 4
    %v1918 = vmul.f32 %v1894, %v1916
    %v1920 = vrot.slane %v1918, 4
    %v1922 = vadd.f32 %v1680, %v1920
    %v1924 = vrot.slane %v1787, 4
    %1925 = vrot.lane.b32.xlu0 %v1924, 32
    %v1926 = vpop.permute.xlu0 %1925
    %v1927 = vsel %vm60, %v1926, 0
    %1929 = vmatprep.subr.mxu0 0.0
    %1930 = vmatpush1.msra.mxu0 %v266
    %1931 = vmatprep.subr.mxu0 0.0
    %1932 = vmatpush1.msra.mxu0 %v267
    %1933 = vmatprep.subr.mxu0 0.0
    %1934 = vmatpush1.msra.mxu0 %v268
    %1935 = vmatprep.subr.mxu0 0.0
    %1936 = vmatpush1.msra.mxu0 %v269
    %1937 = vmatprep.subr.mxu0 0.0
    %1938 = vmatpush1.msra.mxu0 0.0
    %1939 = vmatprep.subr.mxu0 0.0
    %1940 = vmatpush1.msra.mxu0 0.0
    %1941 = vmatprep.subr.mxu0 0.0
    %1942 = vmatpush1.msra.mxu0 0.0
    %1943 = vmatprep.subr.mxu0 0.0
    %1944 = vmatpush1.msra.mxu0 0.0
    %1945 = vmatprep.subr.mxu0 0.0
    %1946 = vmatpush1.msra.mxu0 0.0
    %1947 = vmatprep.subr.mxu0 0.0
    %1948 = vmatpush1.msra.mxu0 0.0
    %1949 = vmatprep.subr.mxu0 0.0
    %1950 = vmatpush1.msra.mxu0 0.0
    %1951 = vmatprep.subr.mxu0 0.0
    %1952 = vmatpush1.msra.mxu0 0.0
    %1953 = vmatprep.subr.mxu0 0.0
    %1954 = vmatpush1.msra.mxu0 0.0
    %1955 = vmatprep.subr.mxu0 0.0
    %1956 = vmatpush1.msra.mxu0 0.0
    %1957 = vmatprep.subr.mxu0 0.0
    %1958 = vmatpush1.msra.mxu0 0.0
    %1959 = vmatprep.subr.mxu0 0.0
    %1960 = vmatpush1.msra.mxu0 0.0
    %1961 = vmatprep.subr.mxu0 0.0
    %1962 = vmatpush1.msra.mxu0 0.0
    %1963 = vmatprep.subr.mxu0 0.0
    %1964 = vmatpush1.msra.mxu0 0.0
    %1965 = vmatprep.subr.mxu0 0.0
    %1966 = vmatpush1.msra.mxu0 0.0
    %1967 = vmatprep.subr.mxu0 0.0
    %1968 = vmatpush1.msra.mxu0 0.0
    %1969 = vmatprep.subr.mxu0 0.0
    %1970 = vmatpush1.msra.mxu0 0.0
    %1971 = vmatprep.subr.mxu0 0.0
    %1972 = vmatpush1.msra.mxu0 0.0
    %1973 = vmatprep.subr.mxu0 0.0
    %1974 = vmatpush1.msra.mxu0 0.0
    %1975 = vmatprep.subr.mxu0 0.0
    %1976 = vmatpush1.msra.mxu0 0.0
    %1977 = vmatprep.subr.mxu0 0.0
    %1978 = vmatpush1.msra.mxu0 0.0
    %1979 = vmatprep.subr.mxu0 0.0
    %1980 = vmatpush1.msra.mxu0 0.0
    %1981 = vmatprep.subr.mxu0 0.0
    %1982 = vmatpush1.msra.mxu0 0.0
    %1983 = vmatprep.subr.mxu0 0.0
    %1984 = vmatpush1.msra.mxu0 0.0
    %1985 = vmatprep.subr.mxu0 0.0
    %1986 = vmatpush1.msra.mxu0 0.0
    %1987 = vmatprep.subr.mxu0 0.0
    %1988 = vmatpush1.msra.mxu0 0.0
    %1989 = vmatprep.subr.mxu0 0.0
    %1990 = vmatpush1.msra.mxu0 0.0
    %1991 = vmatprep.subr.mxu0 0.0
    %1992 = vmatpush1.msra.mxu0 0.0
    %1993 = vmatprep.mubr.f32.mxu0 0.0
    %1994 = vmatmul.mubr.f32.gmra.mrb[0].mxu0 %v1927
    %v1995 = vpop.f32.mrb[0].mxu0
    %v1996 = vadd.f32 0.0, %v1995
    %v1997 = vpop.f32.mrb[0].mxu0
    %1998 = vdwg.mxu0
    %v2000 = vrot.slane %v1996, 2
    %v2002 = vadd.f32 %v1211, %v2000
    %v2003 = vxor.u32 %v2002, 2147483648
    %v2004 = vmul.f32 %v2003, 1.442695
    %v2005 = vpow.pop %v2004
    %v2006 = vadd.f32 %v2005, 1.0
    %v2007 = vrcp.pop %v2006
    %v2008 = vmul.f32 1.0, %v2007
    %v2009 = vtanh.pop %v2002
    %v2011 = vrot.slane %v1781, 6
    %v2013 = vmul.f32 %v2008, %v2011
    %2015 = vrot.lane.b32.xlu0 %v2009, 64
    %v2016 = vpop.permute.xlu0 %2015
    %v2018 = vmul.f32 %v2008, %v2016
    %2020 = vrot.lane.b32.xlu0 %v2018, 32
    %v2021 = vpop.permute.xlu0 %2020
    %v2023 = vadd.f32 %v2013, %v2021
    %v2024 = vtanh.pop %v2023
    %2026 = vrot.lane.b32.xlu0 %v2024, 64
    %v2027 = vpop.permute.xlu0 %2026
    %v2029 = vmul.f32 %v2008, %v2027
    %v2031 = vrot.slane %v1894, 4
    %2032 = vrot.lane.b32.xlu0 %v2031, 32
    %v2033 = vpop.permute.xlu0 %2032
    %v2034 = vsel %vm60, %v2033, 0
    %2036 = vmatprep.subr.mxu0 0.0
    %2037 = vmatpush1.msra.mxu0 %v368
    %2038 = vmatprep.subr.mxu0 0.0
    %2039 = vmatpush1.msra.mxu0 %v369
    %2040 = vmatprep.subr.mxu0 0.0
    %2041 = vmatpush1.msra.mxu0 %v370
    %2042 = vmatprep.subr.mxu0 0.0
    %2043 = vmatpush1.msra.mxu0 %v371
    %2044 = vmatprep.subr.mxu0 0.0
    %2045 = vmatpush1.msra.mxu0 0.0
    %2046 = vmatprep.subr.mxu0 0.0
    %2047 = vmatpush1.msra.mxu0 0.0
    %2048 = vmatprep.subr.mxu0 0.0
    %2049 = vmatpush1.msra.mxu0 0.0
    %2050 = vmatprep.subr.mxu0 0.0
    %2051 = vmatpush1.msra.mxu0 0.0
    %2052 = vmatprep.subr.mxu0 0.0
    %2053 = vmatpush1.msra.mxu0 0.0
    %2054 = vmatprep.subr.mxu0 0.0
    %2055 = vmatpush1.msra.mxu0 0.0
    %2056 = vmatprep.subr.mxu0 0.0
    %2057 = vmatpush1.msra.mxu0 0.0
    %2058 = vmatprep.subr.mxu0 0.0
    %2059 = vmatpush1.msra.mxu0 0.0
    %2060 = vmatprep.subr.mxu0 0.0
    %2061 = vmatpush1.msra.mxu0 0.0
    %2062 = vmatprep.subr.mxu0 0.0
    %2063 = vmatpush1.msra.mxu0 0.0
    %2064 = vmatprep.subr.mxu0 0.0
    %2065 = vmatpush1.msra.mxu0 0.0
    %2066 = vmatprep.subr.mxu0 0.0
    %2067 = vmatpush1.msra.mxu0 0.0
    %2068 = vmatprep.subr.mxu0 0.0
    %2069 = vmatpush1.msra.mxu0 0.0
    %2070 = vmatprep.subr.mxu0 0.0
    %2071 = vmatpush1.msra.mxu0 0.0
    %2072 = vmatprep.subr.mxu0 0.0
    %2073 = vmatpush1.msra.mxu0 0.0
    %2074 = vmatprep.subr.mxu0 0.0
    %2075 = vmatpush1.msra.mxu0 0.0
    %2076 = vmatprep.subr.mxu0 0.0
    %2077 = vmatpush1.msra.mxu0 0.0
    %2078 = vmatprep.subr.mxu0 0.0
    %2079 = vmatpush1.msra.mxu0 0.0
    %2080 = vmatprep.subr.mxu0 0.0
    %2081 = vmatpush1.msra.mxu0 0.0
    %2082 = vmatprep.subr.mxu0 0.0
    %2083 = vmatpush1.msra.mxu0 0.0
    %2084 = vmatprep.subr.mxu0 0.0
    %2085 = vmatpush1.msra.mxu0 0.0
    %2086 = vmatprep.subr.mxu0 0.0
    %2087 = vmatpush1.msra.mxu0 0.0
    %2088 = vmatprep.subr.mxu0 0.0
    %2089 = vmatpush1.msra.mxu0 0.0
    %2090 = vmatprep.subr.mxu0 0.0
    %2091 = vmatpush1.msra.mxu0 0.0
    %2092 = vmatprep.subr.mxu0 0.0
    %2093 = vmatpush1.msra.mxu0 0.0
    %2094 = vmatprep.subr.mxu0 0.0
    %2095 = vmatpush1.msra.mxu0 0.0
    %2096 = vmatprep.subr.mxu0 0.0
    %2097 = vmatpush1.msra.mxu0 0.0
    %2098 = vmatprep.subr.mxu0 0.0
    %2099 = vmatpush1.msra.mxu0 0.0
    %2100 = vmatprep.mubr.f32.mxu0 0.0
    %2101 = vmatmul.mubr.f32.gmra.mrb[0].mxu0 %v2034
    %v2102 = vpop.f32.mrb[0].mxu0
    %v2103 = vadd.f32 0.0, %v2102
    %v2104 = vpop.f32.mrb[0].mxu0
    %2105 = vdwg.mxu0
    %v2107 = vrot.slane %v2103, 2
    %v2109 = vadd.f32 %v1212, %v2107
    %v2110 = vxor.u32 %v2109, 2147483648
    %v2111 = vmul.f32 %v2110, 1.442695
    %v2112 = vpow.pop %v2111
    %v2113 = vadd.f32 %v2112, 1.0
    %v2114 = vrcp.pop %v2113
    %v2115 = vmul.f32 1.0, %v2114
    %v2116 = vtanh.pop %v2109
    %v2118 = vrot.slane %v1888, 6
    %v2120 = vmul.f32 %v2115, %v2118
    %2122 = vrot.lane.b32.xlu0 %v2116, 64
    %v2123 = vpop.permute.xlu0 %2122
    %v2125 = vmul.f32 %v2115, %v2123
    %2127 = vrot.lane.b32.xlu0 %v2125, 32
    %v2128 = vpop.permute.xlu0 %2127
    %v2130 = vadd.f32 %v2120, %v2128
    %v2131 = vtanh.pop %v2130
    %2133 = vrot.lane.b32.xlu0 %v2131, 64
    %v2134 = vpop.permute.xlu0 %2133
    %v2136 = vmul.f32 %v2115, %v2134
    %vm2137 = vcmp.gt.f32.partialorder %v262, 7.0
    %v2138 = vsel %vm2137, 1, 0
    %v2139 = vcvt.s32.f32 %v2138
    %2141 = vset.pattern.permute.xlu0 0
    %2142 = vperm.xlu0 %2141, %v2139
    %v2143 = vpop.permute.xlu0 %2142
    %v2144 = vrot.slane %v2143, 2
    %v2146 = vmul.f32 %v2029, %v2144
    %v2148 = vrot.slane %v2146, 6
    %v2150 = vadd.f32 %v1908, %v2148
    %vm2151 = vcmp.gt.f32.partialorder %v263, 7.0
    %v2152 = vsel %vm2151, 1, 0
    %v2153 = vcvt.s32.f32 %v2152
    %2155 = vset.pattern.permute.xlu0 0
    %2156 = vperm.xlu0 %2155, %v2153
    %v2157 = vpop.permute.xlu0 %2156
    %v2158 = vrot.slane %v2157, 2
    %v2160 = vmul.f32 %v2136, %v2158
    %v2162 = vrot.slane %v2160, 6
    %v2164 = vadd.f32 %v1922, %v2162
    %v2165 = vld [vmem:[%s161] sm:$0xff]
    %v2167 = vrot.slane %v2029, 6
    %2168 = vrot.lane.b32.xlu0 %v2167, 32
    %v2169 = vpop.permute.xlu0 %2168
    %v2170 = vsel %vm60, %v2169, 0
    %2172 = vmatprep.subr.mxu0 0.0
    %2173 = vmatpush1.msra.mxu0 %v266
    %2174 = vmatprep.subr.mxu0 0.0
    %2175 = vmatpush1.msra.mxu0 %v267
    %2176 = vmatprep.subr.mxu0 0.0
    %2177 = vmatpush1.msra.mxu0 %v268
    %2178 = vmatprep.subr.mxu0 0.0
    %2179 = vmatpush1.msra.mxu0 %v269
    %2180 = vmatprep.subr.mxu0 0.0
    %2181 = vmatpush1.msra.mxu0 0.0
    %2182 = vmatprep.subr.mxu0 0.0
    %2183 = vmatpush1.msra.mxu0 0.0
    %2184 = vmatprep.subr.mxu0 0.0
    %2185 = vmatpush1.msra.mxu0 0.0
    %2186 = vmatprep.subr.mxu0 0.0
    %2187 = vmatpush1.msra.mxu0 0.0
    %2188 = vmatprep.subr.mxu0 0.0
    %2189 = vmatpush1.msra.mxu0 0.0
    %2190 = vmatprep.subr.mxu0 0.0
    %2191 = vmatpush1.msra.mxu0 0.0
    %2192 = vmatprep.subr.mxu0 0.0
    %2193 = vmatpush1.msra.mxu0 0.0
    %2194 = vmatprep.subr.mxu0 0.0
    %2195 = vmatpush1.msra.mxu0 0.0
    %2196 = vmatprep.subr.mxu0 0.0
    %2197 = vmatpush1.msra.mxu0 0.0
    %2198 = vmatprep.subr.mxu0 0.0
    %2199 = vmatpush1.msra.mxu0 0.0
    %2200 = vmatprep.subr.mxu0 0.0
    %2201 = vmatpush1.msra.mxu0 0.0
    %2202 = vmatprep.subr.mxu0 0.0
    %2203 = vmatpush1.msra.mxu0 0.0
    %2204 = vmatprep.subr.mxu0 0.0
    %2205 = vmatpush1.msra.mxu0 0.0
    %2206 = vmatprep.subr.mxu0 0.0
    %2207 = vmatpush1.msra.mxu0 0.0
    %2208 = vmatprep.subr.mxu0 0.0
    %2209 = vmatpush1.msra.mxu0 0.0
    %2210 = vmatprep.subr.mxu0 0.0
    %2211 = vmatpush1.msra.mxu0 0.0
    %2212 = vmatprep.subr.mxu0 0.0
    %2213 = vmatpush1.msra.mxu0 0.0
    %2214 = vmatprep.subr.mxu0 0.0
    %2215 = vmatpush1.msra.mxu0 0.0
    %2216 = vmatprep.subr.mxu0 0.0
    %2217 = vmatpush1.msra.mxu0 0.0
    %2218 = vmatprep.subr.mxu0 0.0
    %2219 = vmatpush1.msra.mxu0 0.0
    %2220 = vmatprep.subr.mxu0 0.0
    %2221 = vmatpush1.msra.mxu0 0.0
    %2222 = vmatprep.subr.mxu0 0.0
    %2223 = vmatpush1.msra.mxu0 0.0
    %2224 = vmatprep.subr.mxu0 0.0
    %2225 = vmatpush1.msra.mxu0 0.0
    %2226 = vmatprep.subr.mxu0 0.0
    %2227 = vmatpush1.msra.mxu0 0.0
    %2228 = vmatprep.subr.mxu0 0.0
    %2229 = vmatpush1.msra.mxu0 0.0
    %2230 = vmatprep.subr.mxu0 0.0
    %2231 = vmatpush1.msra.mxu0 0.0
    %2232 = vmatprep.subr.mxu0 0.0
    %2233 = vmatpush1.msra.mxu0 0.0
    %2234 = vmatprep.subr.mxu0 0.0
    %2235 = vmatpush1.msra.mxu0 0.0
    %2236 = vmatprep.mubr.f32.mxu0 0.0
    %2237 = vmatmul.mubr.f32.gmra.mrb[0].mxu0 %v2170
    %v2238 = vpop.f32.mrb[0].mxu0
    %v2239 = vadd.f32 0.0, %v2238
    %v2240 = vpop.f32.mrb[0].mxu0
    %2241 = vdwg.mxu0
    %v2242 = vadd.f32 %v2165, %v2239
    %v2243 = vxor.u32 %v2242, 2147483648
    %v2244 = vmul.f32 %v2243, 1.442695
    %v2245 = vpow.pop %v2244
    %v2246 = vadd.f32 %v2245, 1.0
    %v2247 = vrcp.pop %v2246
    %v2248 = vmul.f32 1.0, %v2247
    %v2249 = vtanh.pop %v2242
    %v2251 = vrot.slane %v2023, 6
    %v2253 = vmul.f32 %v2248, %v2251
    %2255 = vrot.lane.b32.xlu0 %v2249, 64
    %v2256 = vpop.permute.xlu0 %2255
    %v2258 = vmul.f32 %v2248, %v2256
    %2260 = vrot.lane.b32.xlu0 %v2258, 32
    %v2261 = vpop.permute.xlu0 %2260
    %v2263 = vadd.f32 %v2253, %v2261
    %v2264 = vtanh.pop %v2263
    %2266 = vrot.lane.b32.xlu0 %v2264, 64
    %v2267 = vpop.permute.xlu0 %2266
    %v2269 = vmul.f32 %v2248, %v2267
    %vm2270 = vcmp.gt.f32.partialorder %v262, 8.0
    %v2271 = vsel %vm2270, 1, 0
    %v2272 = vcvt.s32.f32 %v2271
    %2274 = vset.pattern.permute.xlu0 0
    %2275 = vperm.xlu0 %2274, %v2272
    %v2276 = vpop.permute.xlu0 %2275
    %v2278 = vmul.f32 %v2269, %v2276
    %v2279 = vadd.f32 %v2150, %v2278
    %2281 = vrot.lane.b32.xlu0 %v2269, 32
    %v2282 = vpop.permute.xlu0 %2281
    %v2283 = vsel %vm60, %v2282, 0
    %2285 = vmatprep.subr.mxu0 0.0
    %2286 = vmatpush1.msra.mxu0 %v266
    %2287 = vmatprep.subr.mxu0 0.0
    %2288 = vmatpush1.msra.mxu0 %v267
    %2289 = vmatprep.subr.mxu0 0.0
    %2290 = vmatpush1.msra.mxu0 %v268
    %2291 = vmatprep.subr.mxu0 0.0
    %2292 = vmatpush1.msra.mxu0 %v269
    %2293 = vmatprep.subr.mxu0 0.0
    %2294 = vmatpush1.msra.mxu0 0.0
    %2295 = vmatprep.subr.mxu0 0.0
    %2296 = vmatpush1.msra.mxu0 0.0
    %2297 = vmatprep.subr.mxu0 0.0
    %2298 = vmatpush1.msra.mxu0 0.0
    %2299 = vmatprep.subr.mxu0 0.0
    %2300 = vmatpush1.msra.mxu0 0.0
    %2301 = vmatprep.subr.mxu0 0.0
    %2302 = vmatpush1.msra.mxu0 0.0
    %2303 = vmatprep.subr.mxu0 0.0
    %2304 = vmatpush1.msra.mxu0 0.0
    %2305 = vmatprep.subr.mxu0 0.0
    %2306 = vmatpush1.msra.mxu0 0.0
    %2307 = vmatprep.subr.mxu0 0.0
    %2308 = vmatpush1.msra.mxu0 0.0
    %2309 = vmatprep.subr.mxu0 0.0
    %2310 = vmatpush1.msra.mxu0 0.0
    %2311 = vmatprep.subr.mxu0 0.0
    %2312 = vmatpush1.msra.mxu0 0.0
    %2313 = vmatprep.subr.mxu0 0.0
    %2314 = vmatpush1.msra.mxu0 0.0
    %2315 = vmatprep.subr.mxu0 0.0
    %2316 = vmatpush1.msra.mxu0 0.0
    %2317 = vmatprep.subr.mxu0 0.0
    %2318 = vmatpush1.msra.mxu0 0.0
    %2319 = vmatprep.subr.mxu0 0.0
    %2320 = vmatpush1.msra.mxu0 0.0
    %2321 = vmatprep.subr.mxu0 0.0
    %2322 = vmatpush1.msra.mxu0 0.0
    %2323 = vmatprep.subr.mxu0 0.0
    %2324 = vmatpush1.msra.mxu0 0.0
    %2325 = vmatprep.subr.mxu0 0.0
    %2326 = vmatpush1.msra.mxu0 0.0
    %2327 = vmatprep.subr.mxu0 0.0
    %2328 = vmatpush1.msra.mxu0 0.0
    %2329 = vmatprep.subr.mxu0 0.0
    %2330 = vmatpush1.msra.mxu0 0.0
    %2331 = vmatprep.subr.mxu0 0.0
    %2332 = vmatpush1.msra.mxu0 0.0
    %2333 = vmatprep.subr.mxu0 0.0
    %2334 = vmatpush1.msra.mxu0 0.0
    %2335 = vmatprep.subr.mxu0 0.0
    %2336 = vmatpush1.msra.mxu0 0.0
    %2337 = vmatprep.subr.mxu0 0.0
    %2338 = vmatpush1.msra.mxu0 0.0
    %2339 = vmatprep.subr.mxu0 0.0
    %2340 = vmatpush1.msra.mxu0 0.0
    %2341 = vmatprep.subr.mxu0 0.0
    %2342 = vmatpush1.msra.mxu0 0.0
    %2343 = vmatprep.subr.mxu0 0.0
    %2344 = vmatpush1.msra.mxu0 0.0
    %2345 = vmatprep.subr.mxu0 0.0
    %2346 = vmatpush1.msra.mxu0 0.0
    %2347 = vmatprep.subr.mxu0 0.0
    %2348 = vmatpush1.msra.mxu0 0.0
    %2349 = vmatprep.mubr.f32.mxu0 0.0
    %2350 = vmatmul.mubr.f32.gmra.mrb[0].mxu0 %v2283
    %v2351 = vpop.f32.mrb[0].mxu0
    %v2352 = vadd.f32 0.0, %v2351
    %v2353 = vpop.f32.mrb[0].mxu0
    %2354 = vdwg.mxu0
    %v2356 = vrot.slane %v2352, 6
    %v2358 = vadd.f32 %v2165, %v2356
    %v2359 = vxor.u32 %v2358, 2147483648
    %v2360 = vmul.f32 %v2359, 1.442695
    %v2361 = vpow.pop %v2360
    %v2362 = vadd.f32 %v2361, 1.0
    %v2363 = vrcp.pop %v2362
    %v2364 = vmul.f32 1.0, %v2363
    %v2365 = vtanh.pop %v2358
    %v2367 = vrot.slane %v2263, 6
    %v2369 = vmul.f32 %v2364, %v2367
    %2371 = vrot.lane.b32.xlu0 %v2365, 64
    %v2372 = vpop.permute.xlu0 %2371
    %v2374 = vmul.f32 %v2364, %v2372
    %2376 = vrot.lane.b32.xlu0 %v2374, 32
    %v2377 = vpop.permute.xlu0 %2376
    %v2379 = vadd.f32 %v2369, %v2377
    %v2380 = vtanh.pop %v2379
    %2382 = vrot.lane.b32.xlu0 %v2380, 64
    %v2383 = vpop.permute.xlu0 %2382
    %v2385 = vmul.f32 %v2364, %v2383
    %vm2386 = vcmp.gt.f32.partialorder %v262, 9.0
    %v2387 = vsel %vm2386, 1, 0
    %v2388 = vcvt.s32.f32 %v2387
    %2390 = vset.pattern.permute.xlu0 0
    %2391 = vperm.xlu0 %2390, %v2388
    %v2392 = vpop.permute.xlu0 %2391
    %v2393 = vrot.slane %v2392, 6
    %v2395 = vmul.f32 %v2385, %v2393
    %v2397 = vrot.slane %v2395, 2
    %v2399 = vadd.f32 %v2279, %v2397
    %v2401 = vrot.slane %v2385, 2
    %2402 = vrot.lane.b32.xlu0 %v2401, 32
    %v2403 = vpop.permute.xlu0 %2402
    %v2404 = vsel %vm60, %v2403, 0
    %2406 = vmatprep.subr.mxu0 0.0
    %2407 = vmatpush1.msra.mxu0 %v266
    %2408 = vmatprep.subr.mxu0 0.0
    %2409 = vmatpush1.msra.mxu0 %v267
    %2410 = vmatprep.subr.mxu0 0.0
    %2411 = vmatpush1.msra.mxu0 %v268
    %2412 = vmatprep.subr.mxu0 0.0
    %2413 = vmatpush1.msra.mxu0 %v269
    %2414 = vmatprep.subr.mxu0 0.0
    %2415 = vmatpush1.msra.mxu0 0.0
    %2416 = vmatprep.subr.mxu0 0.0
    %2417 = vmatpush1.msra.mxu0 0.0
    %2418 = vmatprep.subr.mxu0 0.0
    %2419 = vmatpush1.msra.mxu0 0.0
    %2420 = vmatprep.subr.mxu0 0.0
    %2421 = vmatpush1.msra.mxu0 0.0
    %2422 = vmatprep.subr.mxu0 0.0
    %2423 = vmatpush1.msra.mxu0 0.0
    %2424 = vmatprep.subr.mxu0 0.0
    %2425 = vmatpush1.msra.mxu0 0.0
    %2426 = vmatprep.subr.mxu0 0.0
    %2427 = vmatpush1.msra.mxu0 0.0
    %2428 = vmatprep.subr.mxu0 0.0
    %2429 = vmatpush1.msra.mxu0 0.0
    %2430 = vmatprep.subr.mxu0 0.0
    %2431 = vmatpush1.msra.mxu0 0.0
    %2432 = vmatprep.subr.mxu0 0.0
    %2433 = vmatpush1.msra.mxu0 0.0
    %2434 = vmatprep.subr.mxu0 0.0
    %2435 = vmatpush1.msra.mxu0 0.0
    %2436 = vmatprep.subr.mxu0 0.0
    %2437 = vmatpush1.msra.mxu0 0.0
    %2438 = vmatprep.subr.mxu0 0.0
    %2439 = vmatpush1.msra.mxu0 0.0
    %2440 = vmatprep.subr.mxu0 0.0
    %2441 = vmatpush1.msra.mxu0 0.0
    %2442 = vmatprep.subr.mxu0 0.0
    %2443 = vmatpush1.msra.mxu0 0.0
    %2444 = vmatprep.subr.mxu0 0.0
    %2445 = vmatpush1.msra.mxu0 0.0
    %2446 = vmatprep.subr.mxu0 0.0
    %2447 = vmatpush1.msra.mxu0 0.0
    %2448 = vmatprep.subr.mxu0 0.0
    %2449 = vmatpush1.msra.mxu0 0.0
    %2450 = vmatprep.subr.mxu0 0.0
    %2451 = vmatpush1.msra.mxu0 0.0
    %2452 = vmatprep.subr.mxu0 0.0
    %2453 = vmatpush1.msra.mxu0 0.0
    %2454 = vmatprep.subr.mxu0 0.0
    %2455 = vmatpush1.msra.mxu0 0.0
    %2456 = vmatprep.subr.mxu0 0.0
    %2457 = vmatpush1.msra.mxu0 0.0
    %2458 = vmatprep.subr.mxu0 0.0
    %2459 = vmatpush1.msra.mxu0 0.0
    %2460 = vmatprep.subr.mxu0 0.0
    %2461 = vmatpush1.msra.mxu0 0.0
    %2462 = vmatprep.subr.mxu0 0.0
    %2463 = vmatpush1.msra.mxu0 0.0
    %2464 = vmatprep.subr.mxu0 0.0
    %2465 = vmatpush1.msra.mxu0 0.0
    %2466 = vmatprep.subr.mxu0 0.0
    %2467 = vmatpush1.msra.mxu0 0.0
    %2468 = vmatprep.subr.mxu0 0.0
    %2469 = vmatpush1.msra.mxu0 0.0
    %2470 = vmatprep.mubr.f32.mxu0 0.0
    %2471 = vmatmul.mubr.f32.gmra.mrb[0].mxu0 %v2404
    %v2472 = vpop.f32.mrb[0].mxu0
    %v2473 = vadd.f32 0.0, %v2472
    %v2474 = vpop.f32.mrb[0].mxu0
    %2475 = vdwg.mxu0
    %v2477 = vrot.slane %v2473, 4
    %v2479 = vadd.f32 %v2165, %v2477
    %v2480 = vxor.u32 %v2479, 2147483648
    %v2481 = vmul.f32 %v2480, 1.442695
    %v2482 = vpow.pop %v2481
    %v2483 = vadd.f32 %v2482, 1.0
    %v2484 = vrcp.pop %v2483
    %v2485 = vmul.f32 1.0, %v2484
    %v2486 = vtanh.pop %v2479
    %v2488 = vrot.slane %v2379, 6
    %v2490 = vmul.f32 %v2485, %v2488
    %2492 = vrot.lane.b32.xlu0 %v2486, 64
    %v2493 = vpop.permute.xlu0 %2492
    %v2495 = vmul.f32 %v2485, %v2493
    %2497 = vrot.lane.b32.xlu0 %v2495, 32
    %v2498 = vpop.permute.xlu0 %2497
    %v2500 = vadd.f32 %v2490, %v2498
    %v2501 = vtanh.pop %v2500
    %2503 = vrot.lane.b32.xlu0 %v2501, 64
    %v2504 = vpop.permute.xlu0 %2503
    %v2506 = vmul.f32 %v2485, %v2504
    %vm2507 = vcmp.gt.f32.partialorder %v262, 10.0
    %v2508 = vsel %vm2507, 1, 0
    %v2509 = vcvt.s32.f32 %v2508
    %2511 = vset.pattern.permute.xlu0 0
    %2512 = vperm.xlu0 %2511, %v2509
    %v2513 = vpop.permute.xlu0 %2512
    %v2514 = vrot.slane %v2513, 4
    %v2516 = vmul.f32 %v2506, %v2514
    %v2518 = vrot.slane %v2516, 4
    %v2520 = vadd.f32 %v2399, %v2518
    %v2522 = vrot.slane %v2506, 4
    %2523 = vrot.lane.b32.xlu0 %v2522, 32
    %v2524 = vpop.permute.xlu0 %2523
    %v2525 = vsel %vm60, %v2524, 0
    %2527 = vmatprep.subr.mxu0 0.0
    %2528 = vmatpush1.msra.mxu0 %v266
    %2529 = vmatprep.subr.mxu0 0.0
    %2530 = vmatpush1.msra.mxu0 %v267
    %2531 = vmatprep.subr.mxu0 0.0
    %2532 = vmatpush1.msra.mxu0 %v268
    %2533 = vmatprep.subr.mxu0 0.0
    %2534 = vmatpush1.msra.mxu0 %v269
    %2535 = vmatprep.subr.mxu0 0.0
    %2536 = vmatpush1.msra.mxu0 0.0
    %2537 = vmatprep.subr.mxu0 0.0
    %2538 = vmatpush1.msra.mxu0 0.0
    %2539 = vmatprep.subr.mxu0 0.0
    %2540 = vmatpush1.msra.mxu0 0.0
    %2541 = vmatprep.subr.mxu0 0.0
    %2542 = vmatpush1.msra.mxu0 0.0
    %2543 = vmatprep.subr.mxu0 0.0
    %2544 = vmatpush1.msra.mxu0 0.0
    %2545 = vmatprep.subr.mxu0 0.0
    %2546 = vmatpush1.msra.mxu0 0.0
    %2547 = vmatprep.subr.mxu0 0.0
    %2548 = vmatpush1.msra.mxu0 0.0
    %2549 = vmatprep.subr.mxu0 0.0
    %2550 = vmatpush1.msra.mxu0 0.0
    %2551 = vmatprep.subr.mxu0 0.0
    %2552 = vmatpush1.msra.mxu0 0.0
    %2553 = vmatprep.subr.mxu0 0.0
    %2554 = vmatpush1.msra.mxu0 0.0
    %2555 = vmatprep.subr.mxu0 0.0
    %2556 = vmatpush1.msra.mxu0 0.0
    %2557 = vmatprep.subr.mxu0 0.0
    %2558 = vmatpush1.msra.mxu0 0.0
    %2559 = vmatprep.subr.mxu0 0.0
    %2560 = vmatpush1.msra.mxu0 0.0
    %2561 = vmatprep.subr.mxu0 0.0
    %2562 = vmatpush1.msra.mxu0 0.0
    %2563 = vmatprep.subr.mxu0 0.0
    %2564 = vmatpush1.msra.mxu0 0.0
    %2565 = vmatprep.subr.mxu0 0.0
    %2566 = vmatpush1.msra.mxu0 0.0
    %2567 = vmatprep.subr.mxu0 0.0
    %2568 = vmatpush1.msra.mxu0 0.0
    %2569 = vmatprep.subr.mxu0 0.0
    %2570 = vmatpush1.msra.mxu0 0.0
    %2571 = vmatprep.subr.mxu0 0.0
    %2572 = vmatpush1.msra.mxu0 0.0
    %2573 = vmatprep.subr.mxu0 0.0
    %2574 = vmatpush1.msra.mxu0 0.0
    %2575 = vmatprep.subr.mxu0 0.0
    %2576 = vmatpush1.msra.mxu0 0.0
    %2577 = vmatprep.subr.mxu0 0.0
    %2578 = vmatpush1.msra.mxu0 0.0
    %2579 = vmatprep.subr.mxu0 0.0
    %2580 = vmatpush1.msra.mxu0 0.0
    %2581 = vmatprep.subr.mxu0 0.0
    %2582 = vmatpush1.msra.mxu0 0.0
    %2583 = vmatprep.subr.mxu0 0.0
    %2584 = vmatpush1.msra.mxu0 0.0
    %2585 = vmatprep.subr.mxu0 0.0
    %2586 = vmatpush1.msra.mxu0 0.0
    %2587 = vmatprep.subr.mxu0 0.0
    %2588 = vmatpush1.msra.mxu0 0.0
    %2589 = vmatprep.subr.mxu0 0.0
    %2590 = vmatpush1.msra.mxu0 0.0
    %2591 = vmatprep.mubr.f32.mxu0 0.0
    %2592 = vmatmul.mubr.f32.gmra.mrb[0].mxu0 %v2525
    %v2593 = vpop.f32.mrb[0].mxu0
    %v2594 = vadd.f32 0.0, %v2593
    %v2595 = vpop.f32.mrb[0].mxu0
    %2596 = vdwg.mxu0
    %v2598 = vrot.slane %v2594, 2
    %v2600 = vadd.f32 %v2165, %v2598
    %v2601 = vxor.u32 %v2600, 2147483648
    %v2602 = vmul.f32 %v2601, 1.442695
    %v2603 = vpow.pop %v2602
    %v2604 = vadd.f32 %v2603, 1.0
    %v2605 = vrcp.pop %v2604
    %v2606 = vmul.f32 1.0, %v2605
    %v2607 = vtanh.pop %v2600
    %v2609 = vrot.slane %v2500, 6
    %v2611 = vmul.f32 %v2606, %v2609
    %2613 = vrot.lane.b32.xlu0 %v2607, 64
    %v2614 = vpop.permute.xlu0 %2613
    %v2616 = vmul.f32 %v2606, %v2614
    %2618 = vrot.lane.b32.xlu0 %v2616, 32
    %v2619 = vpop.permute.xlu0 %2618
    %v2621 = vadd.f32 %v2611, %v2619
    %v2622 = vtanh.pop %v2621
    %2624 = vrot.lane.b32.xlu0 %v2622, 64
    %v2625 = vpop.permute.xlu0 %2624
    %v2627 = vmul.f32 %v2606, %v2625
    %vm2628 = vcmp.gt.f32.partialorder %v262, 11.0
    %v2629 = vsel %vm2628, 1, 0
    %v2630 = vcvt.s32.f32 %v2629
    %2632 = vset.pattern.permute.xlu0 0
    %2633 = vperm.xlu0 %2632, %v2630
    %v2634 = vpop.permute.xlu0 %2633
    %v2635 = vrot.slane %v2634, 2
    %v2637 = vmul.f32 %v2627, %v2635
    %v2639 = vrot.slane %v2637, 6
    %v2641 = vadd.f32 %v2520, %v2639
    %v2642 = vld [vmem:[%s163] sm:$0xff]
    %v2644 = vrot.slane %v2627, 6
    %2645 = vrot.lane.b32.xlu0 %v2644, 32
    %v2646 = vpop.permute.xlu0 %2645
    %v2647 = vsel %vm60, %v2646, 0
    %2649 = vmatprep.subr.mxu0 0.0
    %2650 = vmatpush1.msra.mxu0 %v266
    %2651 = vmatprep.subr.mxu0 0.0
    %2652 = vmatpush1.msra.mxu0 %v267
    %2653 = vmatprep.subr.mxu0 0.0
    %2654 = vmatpush1.msra.mxu0 %v268
    %2655 = vmatprep.subr.mxu0 0.0
    %2656 = vmatpush1.msra.mxu0 %v269
    %2657 = vmatprep.subr.mxu0 0.0
    %2658 = vmatpush1.msra.mxu0 0.0
    %2659 = vmatprep.subr.mxu0 0.0
    %2660 = vmatpush1.msra.mxu0 0.0
    %2661 = vmatprep.subr.mxu0 0.0
    %2662 = vmatpush1.msra.mxu0 0.0
    %2663 = vmatprep.subr.mxu0 0.0
    %2664 = vmatpush1.msra.mxu0 0.0
    %2665 = vmatprep.subr.mxu0 0.0
    %2666 = vmatpush1.msra.mxu0 0.0
    %2667 = vmatprep.subr.mxu0 0.0
    %2668 = vmatpush1.msra.mxu0 0.0
    %2669 = vmatprep.subr.mxu0 0.0
    %2670 = vmatpush1.msra.mxu0 0.0
    %2671 = vmatprep.subr.mxu0 0.0
    %2672 = vmatpush1.msra.mxu0 0.0
    %2673 = vmatprep.subr.mxu0 0.0
    %2674 = vmatpush1.msra.mxu0 0.0
    %2675 = vmatprep.subr.mxu0 0.0
    %2676 = vmatpush1.msra.mxu0 0.0
    %2677 = vmatprep.subr.mxu0 0.0
    %2678 = vmatpush1.msra.mxu0 0.0
    %2679 = vmatprep.subr.mxu0 0.0
    %2680 = vmatpush1.msra.mxu0 0.0
    %2681 = vmatprep.subr.mxu0 0.0
    %2682 = vmatpush1.msra.mxu0 0.0
    %2683 = vmatprep.subr.mxu0 0.0
    %2684 = vmatpush1.msra.mxu0 0.0
    %2685 = vmatprep.subr.mxu0 0.0
    %2686 = vmatpush1.msra.mxu0 0.0
    %2687 = vmatprep.subr.mxu0 0.0
    %2688 = vmatpush1.msra.mxu0 0.0
    %2689 = vmatprep.subr.mxu0 0.0
    %2690 = vmatpush1.msra.mxu0 0.0
    %2691 = vmatprep.subr.mxu0 0.0
    %2692 = vmatpush1.msra.mxu0 0.0
    %2693 = vmatprep.subr.mxu0 0.0
    %2694 = vmatpush1.msra.mxu0 0.0
    %2695 = vmatprep.subr.mxu0 0.0
    %2696 = vmatpush1.msra.mxu0 0.0
    %2697 = vmatprep.subr.mxu0 0.0
    %2698 = vmatpush1.msra.mxu0 0.0
    %2699 = vmatprep.subr.mxu0 0.0
    %2700 = vmatpush1.msra.mxu0 0.0
    %2701 = vmatprep.subr.mxu0 0.0
    %2702 = vmatpush1.msra.mxu0 0.0
    %2703 = vmatprep.subr.mxu0 0.0
    %2704 = vmatpush1.msra.mxu0 0.0
    %2705 = vmatprep.subr.mxu0 0.0
    %2706 = vmatpush1.msra.mxu0 0.0
    %2707 = vmatprep.subr.mxu0 0.0
    %2708 = vmatpush1.msra.mxu0 0.0
    %2709 = vmatprep.subr.mxu0 0.0
    %2710 = vmatpush1.msra.mxu0 0.0
    %2711 = vmatprep.subr.mxu0 0.0
    %2712 = vmatpush1.msra.mxu0 0.0
    %2713 = vmatprep.mubr.f32.mxu0 0.0
    %2714 = vmatmul.mubr.f32.gmra.mrb[0].mxu0 %v2647
    %v2715 = vpop.f32.mrb[0].mxu0
    %v2716 = vadd.f32 0.0, %v2715
    %v2717 = vpop.f32.mrb[0].mxu0
    %2718 = vdwg.mxu0
    %v2719 = vadd.f32 %v2642, %v2716
    %v2720 = vxor.u32 %v2719, 2147483648
    %v2721 = vmul.f32 %v2720, 1.442695
    %v2722 = vpow.pop %v2721
    %v2723 = vadd.f32 %v2722, 1.0
    %v2724 = vrcp.pop %v2723
    %v2725 = vmul.f32 1.0, %v2724
    %v2726 = vtanh.pop %v2719
    %v2728 = vrot.slane %v2621, 6
    %v2730 = vmul.f32 %v2725, %v2728
    %2732 = vrot.lane.b32.xlu0 %v2726, 64
    %v2733 = vpop.permute.xlu0 %2732
    %v2735 = vmul.f32 %v2725, %v2733
    %2737 = vrot.lane.b32.xlu0 %v2735, 32
    %v2738 = vpop.permute.xlu0 %2737
    %v2740 = vadd.f32 %v2730, %v2738
    %v2741 = vtanh.pop %v2740
    %2743 = vrot.lane.b32.xlu0 %v2741, 64
    %v2744 = vpop.permute.xlu0 %2743
    %v2746 = vmul.f32 %v2725, %v2744
    %vm2747 = vcmp.gt.f32.partialorder %v262, 12.0
    %v2748 = vsel %vm2747, 1, 0
    %v2749 = vcvt.s32.f32 %v2748
    %2751 = vset.pattern.permute.xlu0 0
    %2752 = vperm.xlu0 %2751, %v2749
    %v2753 = vpop.permute.xlu0 %2752
    %v2755 = vmul.f32 %v2746, %v2753
    %v2756 = vadd.f32 %v2641, %v2755
    %2758 = vrot.lane.b32.xlu0 %v2746, 32
    %v2759 = vpop.permute.xlu0 %2758
    %v2760 = vsel %vm60, %v2759, 0
    %2762 = vmatprep.subr.mxu0 0.0
    %2763 = vmatpush1.msra.mxu0 %v266
    %2764 = vmatprep.subr.mxu0 0.0
    %2765 = vmatpush1.msra.mxu0 %v267
    %2766 = vmatprep.subr.mxu0 0.0
    %2767 = vmatpush1.msra.mxu0 %v268
    %2768 = vmatprep.subr.mxu0 0.0
    %2769 = vmatpush1.msra.mxu0 %v269
    %2770 = vmatprep.subr.mxu0 0.0
    %2771 = vmatpush1.msra.mxu0 0.0
    %2772 = vmatprep.subr.mxu0 0.0
    %2773 = vmatpush1.msra.mxu0 0.0
    %2774 = vmatprep.subr.mxu0 0.0
    %2775 = vmatpush1.msra.mxu0 0.0
    %2776 = vmatprep.subr.mxu0 0.0
    %2777 = vmatpush1.msra.mxu0 0.0
    %2778 = vmatprep.subr.mxu0 0.0
    %2779 = vmatpush1.msra.mxu0 0.0
    %2780 = vmatprep.subr.mxu0 0.0
    %2781 = vmatpush1.msra.mxu0 0.0
    %2782 = vmatprep.subr.mxu0 0.0
    %2783 = vmatpush1.msra.mxu0 0.0
    %2784 = vmatprep.subr.mxu0 0.0
    %2785 = vmatpush1.msra.mxu0 0.0
    %2786 = vmatprep.subr.mxu0 0.0
    %2787 = vmatpush1.msra.mxu0 0.0
    %2788 = vmatprep.subr.mxu0 0.0
    %2789 = vmatpush1.msra.mxu0 0.0
    %2790 = vmatprep.subr.mxu0 0.0
    %2791 = vmatpush1.msra.mxu0 0.0
    %2792 = vmatprep.subr.mxu0 0.0
    %2793 = vmatpush1.msra.mxu0 0.0
    %2794 = vmatprep.subr.mxu0 0.0
    %2795 = vmatpush1.msra.mxu0 0.0
    %2796 = vmatprep.subr.mxu0 0.0
    %2797 = vmatpush1.msra.mxu0 0.0
    %2798 = vmatprep.subr.mxu0 0.0
    %2799 = vmatpush1.msra.mxu0 0.0
    %2800 = vmatprep.subr.mxu0 0.0
    %2801 = vmatpush1.msra.mxu0 0.0
    %2802 = vmatprep.subr.mxu0 0.0
    %2803 = vmatpush1.msra.mxu0 0.0
    %2804 = vmatprep.subr.mxu0 0.0
    %2805 = vmatpush1.msra.mxu0 0.0
    %2806 = vmatprep.subr.mxu0 0.0
    %2807 = vmatpush1.msra.mxu0 0.0
    %2808 = vmatprep.subr.mxu0 0.0
    %2809 = vmatpush1.msra.mxu0 0.0
    %2810 = vmatprep.subr.mxu0 0.0
    %2811 = vmatpush1.msra.mxu0 0.0
    %2812 = vmatprep.subr.mxu0 0.0
    %2813 = vmatpush1.msra.mxu0 0.0
    %2814 = vmatprep.subr.mxu0 0.0
    %2815 = vmatpush1.msra.mxu0 0.0
    %2816 = vmatprep.subr.mxu0 0.0
    %2817 = vmatpush1.msra.mxu0 0.0
    %2818 = vmatprep.subr.mxu0 0.0
    %2819 = vmatpush1.msra.mxu0 0.0
    %2820 = vmatprep.subr.mxu0 0.0
    %2821 = vmatpush1.msra.mxu0 0.0
    %2822 = vmatprep.subr.mxu0 0.0
    %2823 = vmatpush1.msra.mxu0 0.0
    %2824 = vmatprep.subr.mxu0 0.0
    %2825 = vmatpush1.msra.mxu0 0.0
    %2826 = vmatprep.mubr.f32.mxu0 0.0
    %2827 = vmatmul.mubr.f32.gmra.mrb[0].mxu0 %v2760
    %v2828 = vpop.f32.mrb[0].mxu0
    %v2829 = vadd.f32 0.0, %v2828
    %v2830 = vpop.f32.mrb[0].mxu0
    %2831 = vdwg.mxu0
    %v2833 = vrot.slane %v2829, 6
    %v2835 = vadd.f32 %v2642, %v2833
    %v2836 = vxor.u32 %v2835, 2147483648
    %v2837 = vmul.f32 %v2836, 1.442695
    %v2838 = vpow.pop %v2837
    %v2839 = vadd.f32 %v2838, 1.0
    %v2840 = vrcp.pop %v2839
    %v2841 = vmul.f32 1.0, %v2840
    %v2842 = vtanh.pop %v2835
    %v2844 = vrot.slane %v2740, 6
    %v2846 = vmul.f32 %v2841, %v2844
    %2848 = vrot.lane.b32.xlu0 %v2842, 64
    %v2849 = vpop.permute.xlu0 %2848
    %v2851 = vmul.f32 %v2841, %v2849
    %2853 = vrot.lane.b32.xlu0 %v2851, 32
    %v2854 = vpop.permute.xlu0 %2853
    %v2856 = vadd.f32 %v2846, %v2854
    %v2857 = vtanh.pop %v2856
    %2859 = vrot.lane.b32.xlu0 %v2857, 64
    %v2860 = vpop.permute.xlu0 %2859
    %v2862 = vmul.f32 %v2841, %v2860
    %vm2863 = vcmp.gt.f32.partialorder %v262, 13.0
    %v2864 = vsel %vm2863, 1, 0
    %v2865 = vcvt.s32.f32 %v2864
    %2867 = vset.pattern.permute.xlu0 0
    %2868 = vperm.xlu0 %2867, %v2865
    %v2869 = vpop.permute.xlu0 %2868
    %v2870 = vrot.slane %v2869, 6
    %v2872 = vmul.f32 %v2862, %v2870
    %v2874 = vrot.slane %v2872, 2
    %v2876 = vadd.f32 %v2756, %v2874
    %v2878 = vrot.slane %v2862, 2
    %2879 = vrot.lane.b32.xlu0 %v2878, 32
    %v2880 = vpop.permute.xlu0 %2879
    %v2881 = vsel %vm60, %v2880, 0
    %2883 = vmatprep.subr.mxu0 0.0
    %2884 = vmatpush1.msra.mxu0 %v266
    %2885 = vmatprep.subr.mxu0 0.0
    %2886 = vmatpush1.msra.mxu0 %v267
    %2887 = vmatprep.subr.mxu0 0.0
    %2888 = vmatpush1.msra.mxu0 %v268
    %2889 = vmatprep.subr.mxu0 0.0
    %2890 = vmatpush1.msra.mxu0 %v269
    %2891 = vmatprep.subr.mxu0 0.0
    %2892 = vmatpush1.msra.mxu0 0.0
    %2893 = vmatprep.subr.mxu0 0.0
    %2894 = vmatpush1.msra.mxu0 0.0
    %2895 = vmatprep.subr.mxu0 0.0
    %2896 = vmatpush1.msra.mxu0 0.0
    %2897 = vmatprep.subr.mxu0 0.0
    %2898 = vmatpush1.msra.mxu0 0.0
    %2899 = vmatprep.subr.mxu0 0.0
    %2900 = vmatpush1.msra.mxu0 0.0
    %2901 = vmatprep.subr.mxu0 0.0
    %2902 = vmatpush1.msra.mxu0 0.0
    %2903 = vmatprep.subr.mxu0 0.0
    %2904 = vmatpush1.msra.mxu0 0.0
    %2905 = vmatprep.subr.mxu0 0.0
    %2906 = vmatpush1.msra.mxu0 0.0
    %2907 = vmatprep.subr.mxu0 0.0
    %2908 = vmatpush1.msra.mxu0 0.0
    %2909 = vmatprep.subr.mxu0 0.0
    %2910 = vmatpush1.msra.mxu0 0.0
    %2911 = vmatprep.subr.mxu0 0.0
    %2912 = vmatpush1.msra.mxu0 0.0
    %2913 = vmatprep.subr.mxu0 0.0
    %2914 = vmatpush1.msra.mxu0 0.0
    %2915 = vmatprep.subr.mxu0 0.0
    %2916 = vmatpush1.msra.mxu0 0.0
    %2917 = vmatprep.subr.mxu0 0.0
    %2918 = vmatpush1.msra.mxu0 0.0
    %2919 = vmatprep.subr.mxu0 0.0
    %2920 = vmatpush1.msra.mxu0 0.0
    %2921 = vmatprep.subr.mxu0 0.0
    %2922 = vmatpush1.msra.mxu0 0.0
    %2923 = vmatprep.subr.mxu0 0.0
    %2924 = vmatpush1.msra.mxu0 0.0
    %2925 = vmatprep.subr.mxu0 0.0
    %2926 = vmatpush1.msra.mxu0 0.0
    %2927 = vmatprep.subr.mxu0 0.0
    %2928 = vmatpush1.msra.mxu0 0.0
    %2929 = vmatprep.subr.mxu0 0.0
    %2930 = vmatpush1.msra.mxu0 0.0
    %2931 = vmatprep.subr.mxu0 0.0
    %2932 = vmatpush1.msra.mxu0 0.0
    %2933 = vmatprep.subr.mxu0 0.0
    %2934 = vmatpush1.msra.mxu0 0.0
    %2935 = vmatprep.subr.mxu0 0.0
    %2936 = vmatpush1.msra.mxu0 0.0
    %2937 = vmatprep.subr.mxu0 0.0
    %2938 = vmatpush1.msra.mxu0 0.0
    %2939 = vmatprep.subr.mxu0 0.0
    %2940 = vmatpush1.msra.mxu0 0.0
    %2941 = vmatprep.subr.mxu0 0.0
    %2942 = vmatpush1.msra.mxu0 0.0
    %2943 = vmatprep.subr.mxu0 0.0
    %2944 = vmatpush1.msra.mxu0 0.0
    %2945 = vmatprep.subr.mxu0 0.0
    %2946 = vmatpush1.msra.mxu0 0.0
    %2947 = vmatprep.mubr.f32.mxu0 0.0
    %2948 = vmatmul.mubr.f32.gmra.mrb[0].mxu0 %v2881
    %v2949 = vpop.f32.mrb[0].mxu0
    %v2950 = vadd.f32 0.0, %v2949
    %v2951 = vpop.f32.mrb[0].mxu0
    %2952 = vdwg.mxu0
    %v2954 = vrot.slane %v2950, 4
    %v2956 = vadd.f32 %v2642, %v2954
    %v2957 = vxor.u32 %v2956, 2147483648
    %v2958 = vmul.f32 %v2957, 1.442695
    %v2959 = vpow.pop %v2958
    %v2960 = vadd.f32 %v2959, 1.0
    %v2961 = vrcp.pop %v2960
    %v2962 = vmul.f32 1.0, %v2961
    %v2963 = vtanh.pop %v2956
    %v2965 = vrot.slane %v2856, 6
    %v2967 = vmul.f32 %v2962, %v2965
    %2969 = vrot.lane.b32.xlu0 %v2963, 64
    %v2970 = vpop.permute.xlu0 %2969
    %v2972 = vmul.f32 %v2962, %v2970
    %2974 = vrot.lane.b32.xlu0 %v2972, 32
    %v2975 = vpop.permute.xlu0 %2974
    %v2977 = vadd.f32 %v2967, %v2975
    %v2978 = vtanh.pop %v2977
    %2980 = vrot.lane.b32.xlu0 %v2978, 64
    %v2981 = vpop.permute.xlu0 %2980
    %v2983 = vmul.f32 %v2962, %v2981
    %vm2984 = vcmp.gt.f32.partialorder %v262, 14.0
    %v2985 = vsel %vm2984, 1, 0
    %v2986 = vcvt.s32.f32 %v2985
    %2988 = vset.pattern.permute.xlu0 0
    %2989 = vperm.xlu0 %2988, %v2986
    %v2990 = vpop.permute.xlu0 %2989
    %v2991 = vrot.slane %v2990, 4
    %v2993 = vmul.f32 %v2983, %v2991
    %v2995 = vrot.slane %v2993, 4
    %v2997 = vadd.f32 %v2876, %v2995
    %v2999 = vrot.slane %v2983, 4
    %3000 = vrot.lane.b32.xlu0 %v2999, 32
    %v3001 = vpop.permute.xlu0 %3000
    %v3002 = vsel %vm60, %v3001, 0
    %3004 = vmatprep.subr.mxu0 0.0
    %3005 = vmatpush1.msra.mxu0 %v266
    %3006 = vmatprep.subr.mxu0 0.0
    %3007 = vmatpush1.msra.mxu0 %v267
    %3008 = vmatprep.subr.mxu0 0.0
    %3009 = vmatpush1.msra.mxu0 %v268
    %3010 = vmatprep.subr.mxu0 0.0
    %3011 = vmatpush1.msra.mxu0 %v269
    %3012 = vmatprep.subr.mxu0 0.0
    %3013 = vmatpush1.msra.mxu0 0.0
    %3014 = vmatprep.subr.mxu0 0.0
    %3015 = vmatpush1.msra.mxu0 0.0
    %3016 = vmatprep.subr.mxu0 0.0
    %3017 = vmatpush1.msra.mxu0 0.0
    %3018 = vmatprep.subr.mxu0 0.0
    %3019 = vmatpush1.msra.mxu0 0.0
    %3020 = vmatprep.subr.mxu0 0.0
    %3021 = vmatpush1.msra.mxu0 0.0
    %3022 = vmatprep.subr.mxu0 0.0
    %3023 = vmatpush1.msra.mxu0 0.0
    %3024 = vmatprep.subr.mxu0 0.0
    %3025 = vmatpush1.msra.mxu0 0.0
    %3026 = vmatprep.subr.mxu0 0.0
    %3027 = vmatpush1.msra.mxu0 0.0
    %3028 = vmatprep.subr.mxu0 0.0
    %3029 = vmatpush1.msra.mxu0 0.0
    %3030 = vmatprep.subr.mxu0 0.0
    %3031 = vmatpush1.msra.mxu0 0.0
    %3032 = vmatprep.subr.mxu0 0.0
    %3033 = vmatpush1.msra.mxu0 0.0
    %3034 = vmatprep.subr.mxu0 0.0
    %3035 = vmatpush1.msra.mxu0 0.0
    %3036 = vmatprep.subr.mxu0 0.0
    %3037 = vmatpush1.msra.mxu0 0.0
    %3038 = vmatprep.subr.mxu0 0.0
    %3039 = vmatpush1.msra.mxu0 0.0
    %3040 = vmatprep.subr.mxu0 0.0
    %3041 = vmatpush1.msra.mxu0 0.0
    %3042 = vmatprep.subr.mxu0 0.0
    %3043 = vmatpush1.msra.mxu0 0.0
    %3044 = vmatprep.subr.mxu0 0.0
    %3045 = vmatpush1.msra.mxu0 0.0
    %3046 = vmatprep.subr.mxu0 0.0
    %3047 = vmatpush1.msra.mxu0 0.0
    %3048 = vmatprep.subr.mxu0 0.0
    %3049 = vmatpush1.msra.mxu0 0.0
    %3050 = vmatprep.subr.mxu0 0.0
    %3051 = vmatpush1.msra.mxu0 0.0
    %3052 = vmatprep.subr.mxu0 0.0
    %3053 = vmatpush1.msra.mxu0 0.0
    %3054 = vmatprep.subr.mxu0 0.0
    %3055 = vmatpush1.msra.mxu0 0.0
    %3056 = vmatprep.subr.mxu0 0.0
    %3057 = vmatpush1.msra.mxu0 0.0
    %3058 = vmatprep.subr.mxu0 0.0
    %3059 = vmatpush1.msra.mxu0 0.0
    %3060 = vmatprep.subr.mxu0 0.0
    %3061 = vmatpush1.msra.mxu0 0.0
    %3062 = vmatprep.subr.mxu0 0.0
    %3063 = vmatpush1.msra.mxu0 0.0
    %3064 = vmatprep.subr.mxu0 0.0
    %3065 = vmatpush1.msra.mxu0 0.0
    %3066 = vmatprep.subr.mxu0 0.0
    %3067 = vmatpush1.msra.mxu0 0.0
    %3068 = vmatprep.mubr.f32.mxu0 0.0
    %3069 = vmatmul.mubr.f32.gmra.mrb[0].mxu0 %v3002
    %v3070 = vpop.f32.mrb[0].mxu0
    %v3071 = vadd.f32 0.0, %v3070
    %v3072 = vpop.f32.mrb[0].mxu0
    %3073 = vdwg.mxu0
    %v3075 = vrot.slane %v3071, 2
    %v3077 = vadd.f32 %v2642, %v3075
    %v3078 = vxor.u32 %v3077, 2147483648
    %v3079 = vmul.f32 %v3078, 1.442695
    %v3080 = vpow.pop %v3079
    %v3081 = vadd.f32 %v3080, 1.0
    %v3082 = vrcp.pop %v3081
    %v3083 = vmul.f32 1.0, %v3082
    %v3084 = vtanh.pop %v3077
    %v3086 = vrot.slane %v2977, 6
    %v3088 = vmul.f32 %v3083, %v3086
    %3090 = vrot.lane.b32.xlu0 %v3084, 64
    %v3091 = vpop.permute.xlu0 %3090
    %v3093 = vmul.f32 %v3083, %v3091
    %3095 = vrot.lane.b32.xlu0 %v3093, 32
    %v3096 = vpop.permute.xlu0 %3095
    %v3098 = vadd.f32 %v3088, %v3096
    %v3099 = vtanh.pop %v3098
    %3101 = vrot.lane.b32.xlu0 %v3099, 64
    %v3102 = vpop.permute.xlu0 %3101
    %v3104 = vmul.f32 %v3083, %v3102
    %vm3105 = vcmp.gt.f32.partialorder %v262, 15.0
    %v3106 = vsel %vm3105, 1, 0
    %v3107 = vcvt.s32.f32 %v3106
    %3109 = vset.pattern.permute.xlu0 0
    %3110 = vperm.xlu0 %3109, %v3107
    %v3111 = vpop.permute.xlu0 %3110
    %v3112 = vrot.slane %v3111, 2
    %v3114 = vmul.f32 %v3104, %v3112
    %v3116 = vrot.slane %v3114, 6
    %v3118 = vadd.f32 %v2997, %v3116
    %v3119 = vmax.f32 %v262, 1.0
    %3121 = vset.pattern.permute.xlu0 0
    %3122 = vperm.xlu0 %3121, %v3119
    %v3123 = vpop.permute.xlu0 %3122
    %v3125 = vrcp.pop %v3123
    %v3126 = vmul.f32 %v3118, %v3125
    %v3127 = vmax.f32 %v263, 1.0
    %3129 = vset.pattern.permute.xlu0 0
    %3130 = vperm.xlu0 %3129, %v3127
    %v3131 = vpop.permute.xlu0 %3130
    %v3133 = vrcp.pop %v3131
    %v3134 = vmul.f32 %v2164, %v3133
    %v3135 = vld [vmem:[%s10] sm:$0xff]
    %v3136 = vld [vmem:[%s10 + $0x8] sm:$0xff]
    %v3137 = vld [vmem:[%s10 + $0x10] sm:$0xff]
    %v3138 = vld [vmem:[%s10 + $0x18] sm:$0xff]
    %v3139 = vld [vmem:[%s11] sm:$0xff]
    %v3140 = vld [vmem:[%s11 + $0x8] sm:$0xff]
    %v3141 = vld [vmem:[%s11 + $0x10] sm:$0xff]
    %v3142 = vld [vmem:[%s11 + $0x18] sm:$0xff]
    %3144 = vrot.lane.b32.xlu0 %v3126, 32
    %v3145 = vpop.permute.xlu0 %3144
    %v3146 = vsel %vm60, %v3145, 0
    %3148 = vmatprep.subr.mxu0 0.0
    %3149 = vmatpush1.msra.mxu0 %v3139
    %3150 = vmatprep.subr.mxu0 0.0
    %3151 = vmatpush1.msra.mxu0 %v3140
    %3152 = vmatprep.subr.mxu0 0.0
    %3153 = vmatpush1.msra.mxu0 %v3141
    %3154 = vmatprep.subr.mxu0 0.0
    %3155 = vmatpush1.msra.mxu0 %v3142
    %3156 = vmatprep.subr.mxu0 0.0
    %3157 = vmatpush1.msra.mxu0 0.0
    %3158 = vmatprep.subr.mxu0 0.0
    %3159 = vmatpush1.msra.mxu0 0.0
    %3160 = vmatprep.subr.mxu0 0.0
    %3161 = vmatpush1.msra.mxu0 0.0
    %3162 = vmatprep.subr.mxu0 0.0
    %3163 = vmatpush1.msra.mxu0 0.0
    %3164 = vmatprep.subr.mxu0 0.0
    %3165 = vmatpush1.msra.mxu0 0.0
    %3166 = vmatprep.subr.mxu0 0.0
    %3167 = vmatpush1.msra.mxu0 0.0
    %3168 = vmatprep.subr.mxu0 0.0
    %3169 = vmatpush1.msra.mxu0 0.0
    %3170 = vmatprep.subr.mxu0 0.0
    %3171 = vmatpush1.msra.mxu0 0.0
    %3172 = vmatprep.subr.mxu0 0.0
    %3173 = vmatpush1.msra.mxu0 0.0
    %3174 = vmatprep.subr.mxu0 0.0
    %3175 = vmatpush1.msra.mxu0 0.0
    %3176 = vmatprep.subr.mxu0 0.0
    %3177 = vmatpush1.msra.mxu0 0.0
    %3178 = vmatprep.subr.mxu0 0.0
    %3179 = vmatpush1.msra.mxu0 0.0
    %3180 = vmatprep.subr.mxu0 0.0
    %3181 = vmatpush1.msra.mxu0 0.0
    %3182 = vmatprep.subr.mxu0 0.0
    %3183 = vmatpush1.msra.mxu0 0.0
    %3184 = vmatprep.subr.mxu0 0.0
    %3185 = vmatpush1.msra.mxu0 0.0
    %3186 = vmatprep.subr.mxu0 0.0
    %3187 = vmatpush1.msra.mxu0 0.0
    %3188 = vmatprep.subr.mxu0 0.0
    %3189 = vmatpush1.msra.mxu0 0.0
    %3190 = vmatprep.subr.mxu0 0.0
    %3191 = vmatpush1.msra.mxu0 0.0
    %3192 = vmatprep.subr.mxu0 0.0
    %3193 = vmatpush1.msra.mxu0 0.0
    %3194 = vmatprep.subr.mxu0 0.0
    %3195 = vmatpush1.msra.mxu0 0.0
    %3196 = vmatprep.subr.mxu0 0.0
    %3197 = vmatpush1.msra.mxu0 0.0
    %3198 = vmatprep.subr.mxu0 0.0
    %3199 = vmatpush1.msra.mxu0 0.0
    %3200 = vmatprep.subr.mxu0 0.0
    %3201 = vmatpush1.msra.mxu0 0.0
    %3202 = vmatprep.subr.mxu0 0.0
    %3203 = vmatpush1.msra.mxu0 0.0
    %3204 = vmatprep.subr.mxu0 0.0
    %3205 = vmatpush1.msra.mxu0 0.0
    %3206 = vmatprep.subr.mxu0 0.0
    %3207 = vmatpush1.msra.mxu0 0.0
    %3208 = vmatprep.subr.mxu0 0.0
    %3209 = vmatpush1.msra.mxu0 0.0
    %3210 = vmatprep.subr.mxu0 0.0
    %3211 = vmatpush1.msra.mxu0 0.0
    %3212 = vmatprep.mubr.f32.mxu0 0.0
    %3213 = vmatmul.mubr.f32.gmra.mrb[0].mxu0 %v3146
    %v3214 = vpop.f32.mrb[0].mxu0
    %v3215 = vadd.f32 0.0, %v3214
    %v3216 = vpop.f32.mrb[0].mxu0
    %3217 = vdwg.mxu0
    %3219 = vrot.lane.b32.xlu0 %v3134, 32
    %v3220 = vpop.permute.xlu0 %3219
    %v3221 = vsel %vm60, %v3220, 0
    %3223 = vmatprep.subr.mxu0 0.0
    %3224 = vmatpush1.msra.mxu0 %v3135
    %3225 = vmatprep.subr.mxu0 0.0
    %3226 = vmatpush1.msra.mxu0 %v3136
    %3227 = vmatprep.subr.mxu0 0.0
    %3228 = vmatpush1.msra.mxu0 %v3137
    %3229 = vmatprep.subr.mxu0 0.0
    %3230 = vmatpush1.msra.mxu0 %v3138
    %3231 = vmatprep.subr.mxu0 0.0
    %3232 = vmatpush1.msra.mxu0 0.0
    %3233 = vmatprep.subr.mxu0 0.0
    %3234 = vmatpush1.msra.mxu0 0.0
    %3235 = vmatprep.subr.mxu0 0.0
    %3236 = vmatpush1.msra.mxu0 0.0
    %3237 = vmatprep.subr.mxu0 0.0
    %3238 = vmatpush1.msra.mxu0 0.0
    %3239 = vmatprep.subr.mxu0 0.0
    %3240 = vmatpush1.msra.mxu0 0.0
    %3241 = vmatprep.subr.mxu0 0.0
    %3242 = vmatpush1.msra.mxu0 0.0
    %3243 = vmatprep.subr.mxu0 0.0
    %3244 = vmatpush1.msra.mxu0 0.0
    %3245 = vmatprep.subr.mxu0 0.0
    %3246 = vmatpush1.msra.mxu0 0.0
    %3247 = vmatprep.subr.mxu0 0.0
    %3248 = vmatpush1.msra.mxu0 0.0
    %3249 = vmatprep.subr.mxu0 0.0
    %3250 = vmatpush1.msra.mxu0 0.0
    %3251 = vmatprep.subr.mxu0 0.0
    %3252 = vmatpush1.msra.mxu0 0.0
    %3253 = vmatprep.subr.mxu0 0.0
    %3254 = vmatpush1.msra.mxu0 0.0
    %3255 = vmatprep.subr.mxu0 0.0
    %3256 = vmatpush1.msra.mxu0 0.0
    %3257 = vmatprep.subr.mxu0 0.0
    %3258 = vmatpush1.msra.mxu0 0.0
    %3259 = vmatprep.subr.mxu0 0.0
    %3260 = vmatpush1.msra.mxu0 0.0
    %3261 = vmatprep.subr.mxu0 0.0
    %3262 = vmatpush1.msra.mxu0 0.0
    %3263 = vmatprep.subr.mxu0 0.0
    %3264 = vmatpush1.msra.mxu0 0.0
    %3265 = vmatprep.subr.mxu0 0.0
    %3266 = vmatpush1.msra.mxu0 0.0
    %3267 = vmatprep.subr.mxu0 0.0
    %3268 = vmatpush1.msra.mxu0 0.0
    %3269 = vmatprep.subr.mxu0 0.0
    %3270 = vmatpush1.msra.mxu0 0.0
    %3271 = vmatprep.subr.mxu0 0.0
    %3272 = vmatpush1.msra.mxu0 0.0
    %3273 = vmatprep.subr.mxu0 0.0
    %3274 = vmatpush1.msra.mxu0 0.0
    %3275 = vmatprep.subr.mxu0 0.0
    %3276 = vmatpush1.msra.mxu0 0.0
    %3277 = vmatprep.subr.mxu0 0.0
    %3278 = vmatpush1.msra.mxu0 0.0
    %3279 = vmatprep.subr.mxu0 0.0
    %3280 = vmatpush1.msra.mxu0 0.0
    %3281 = vmatprep.subr.mxu0 0.0
    %3282 = vmatpush1.msra.mxu0 0.0
    %3283 = vmatprep.subr.mxu0 0.0
    %3284 = vmatpush1.msra.mxu0 0.0
    %3285 = vmatprep.subr.mxu0 0.0
    %3286 = vmatpush1.msra.mxu0 0.0
    %3287 = vmatprep.mubr.f32.mxu0 0.0
    %3288 = vmatmul.mubr.f32.gmra.mrb[0].mxu0 %v3221
    %v3289 = vpop.f32.mrb[0].mxu0
    %v3290 = vadd.f32 %v3215, %v3289
    %v3291 = vpop.f32.mrb[0].mxu0
    %3292 = vdwg.mxu0
    %v3293 = vld [vmem:[%s12] sm:$0x1]
    %v3295 = vlaneseq
    %v3296 = vshrl.u32 %v3295, 7
    %v3297 = vsub.s32 0, %v3296
    %v3298 = vrot.slane %v3293, %v3297
    %v3300 = vadd.f32 %v3290, %v3298
    %vm3301 = vcmask 17408
    %v3302 = vsel %vm3301, %v3300, -inf
    %3303 = vmax.xlane.f32.xlu0 %v3302
    %v3304 = vpop.xlane.xlu0 %3303
    %v3305 = vsub.f32 %v3300, %v3304
    %v3306 = vmul.f32 %v3305, 1.442695
    %v3307 = vpow.pop %v3306
    %v3308 = vsel %vm3301, %v3307, 0.0
    %3309 = vadd.xlane.f32.xlu0 %v3308
    %v3310 = vpop.xlane.xlu0 %3309
    %v3311 = vrcp.pop %v3310
    %v3312 = vmul.f32 %v3307, %v3311
    %3313 = vst.msk [vmem:[#allocation4] sm:$0x3] %vm3301, %v3312
    // Predicated region
    $region54: #{ian_forward.1} parent=1 // pred_check
      _
    $region55: #{ian_forward.1} parent=1 // pred_check_branch
      %3315 = sbr.rel (0) target = $region57
    $region56: #{ian_forward.1} parent=1 // pred_region
      %s3317 = ssub.s32 32, 32
      %3318 = vsyncadd [#allocation5], %s3317
      %s3320 = sshll.u32 [#allocation4], 4
      %s3321 = int_to_ptr.vmem [resolvable:$true] %s3320
      %3323 = dma.vmem_to_hbm [thread:$0]  %s3321, 32, %s13, [#allocation5]
    $region57: #{ian_forward.1} parent=1 // pred_fallthru
      _
    // Predicated region
    $region58: #{ian_forward.1} parent=1 // pred_check
      _
    $region59: #{ian_forward.1} parent=1 // pred_check_branch
      %3325 = sbr.rel (0) target = $region61
    $region60: #{ian_forward.1} parent=1 // pred_region
      %3326 = dma.done [#allocation5], 32
    $region61: #{ian_forward.1} parent=1 // pred_fallthru
      _
    %3327 = vsyncpa [#allocation5], 1

</llo_original>
